<compile_context>
chip_gen: v5e
topology: v5e:2x2
jax: 0.10.0
libtpu: 0.0.40
codegen_flags: <defaults>
</compile_context>

<pallas_src>
from functools import partial
from itertools import combinations

import numpy as np
import jax
import jax.numpy as jnp
from jax.experimental import pallas as pl
from jax.experimental.pallas import tpu as pltpu

LN_EPS = 1e-5


def _ln_relu(y, g, be):
    """PyTorch-style LayerNorm (centered, biased variance, eps=1e-5) + ReLU."""
    mu = jnp.mean(y, axis=-1, keepdims=True)
    d = y - mu
    var = jnp.mean(d * d, axis=-1, keepdims=True)
    yn = d * jax.lax.rsqrt(var + LN_EPS)
    return jnp.maximum(yn * g + be, 0.0)


# ---------------------------------------------------------------------------
# Kernel 1: folded feat_layer ∘ emb-Linear-0 per-item projection
#   P = x @ (Wf @ [W0_top | W0_bot]) + bf @ [W0_top | W0_bot]     (rows, 1024)
# Each item is projected exactly once; output is bf16 to halve HBM writeback.
# ---------------------------------------------------------------------------
def _item_proj_kernel(x_ref, w_ref, b_ref, o_ref):
    x = x_ref[...].astype(jnp.bfloat16)
    acc = jnp.dot(x, w_ref[...], preferred_element_type=jnp.float32) + b_ref[...]
    o_ref[...] = acc.astype(o_ref.dtype)


def item_proj(x, w, b):
    m, f = x.shape
    tm = min(m, 512 if f <= 1024 else 256)
    return pl.pallas_call(
        _item_proj_kernel,
        out_shape=jax.ShapeDtypeStruct((m, 1024), jnp.bfloat16),
        grid_spec=pltpu.PrefetchScalarGridSpec(
            num_scalar_prefetch=0,
            grid=(pl.cdiv(m, tm),),
            in_specs=[
                pl.BlockSpec((tm, f), lambda i: (i, 0)),
                pl.BlockSpec(w.shape, lambda i: (0, 0)),
                pl.BlockSpec(b.shape, lambda i: (0, 0)),
            ],
            out_specs=pl.BlockSpec((tm, 1024), lambda i: (i, 0)),
        ),
        compiler_params=pltpu.CompilerParams(dimension_semantics=("parallel",)),
    )(x, w, b)


# ---------------------------------------------------------------------------
# Kernel 2: pair gather + 4-layer emb stack + mean over combinations +
#           eval chain + final Linear, fully fused (activations stay in VMEM).
# ---------------------------------------------------------------------------
def _pair_stack_eval_kernel(idx_i_ref, idx_j_ref,          # scalar prefetch (SMEM)
                            top_ref, bot_ref,              # (tb, 512) bf16 gathered halves
                            b0_ref, g0_ref, e0_ref,
                            w1_ref, b1_ref, g1_ref, e1_ref,
                            w2_ref, b2_ref, g2_ref, e2_ref,
                            w3_ref, b3_ref, g3_ref, e3_ref,
                            w4_ref, b4_ref, g4_ref, e4_ref,
                            w5_ref, b5_ref, g5_ref, e5_ref,
                            w6_ref, b6_ref, g6_ref, e6_ref,
                            w7_ref, b7_ref,
                            o_ref, acc_ref):
    c = pl.program_id(1)
    n_pairs = pl.num_programs(1)

    @pl.when(c == 0)
    def _():
        acc_ref[...] = jnp.zeros_like(acc_ref)

    # emb layer 0: pair pre-activation (gather fused via BlockSpec index maps)
    y0 = (top_ref[...].astype(jnp.float32) + bot_ref[...].astype(jnp.float32)
          + b0_ref[...])
    h = _ln_relu(y0, g0_ref[...], e0_ref[...])
    # emb layers 1..3: Linear + LayerNorm + ReLU (bf16 MXU operands, f32 acc)
    y1 = jnp.dot(h.astype(jnp.bfloat16), w1_ref[...],
                 preferred_element_type=jnp.float32) + b1_ref[...]
    h = _ln_relu(y1, g1_ref[...], e1_ref[...])
    y2 = jnp.dot(h.astype(jnp.bfloat16), w2_ref[...],
                 preferred_element_type=jnp.float32) + b2_ref[...]
    h = _ln_relu(y2, g2_ref[...], e2_ref[...])
    y3 = jnp.dot(h.astype(jnp.bfloat16), w3_ref[...],
                 preferred_element_type=jnp.float32) + b3_ref[...]
    h = _ln_relu(y3, g3_ref[...], e3_ref[...])      # (tb, 256) per-pair embedding

    acc_ref[...] += h                               # running sum over combinations

    @pl.when(c == n_pairs - 1)
    def _():
        e = acc_ref[...] * (1.0 / n_pairs)          # mean over combinations
        e = _ln_relu(jnp.dot(e, w4_ref[...], preferred_element_type=jnp.float32)
                     + b4_ref[...], g4_ref[...], e4_ref[...])      # (tb, 128)
        e = _ln_relu(jnp.dot(e, w5_ref[...], preferred_element_type=jnp.float32)
                     + b5_ref[...], g5_ref[...], e5_ref[...])      # (tb, 128)
        e = _ln_relu(jnp.dot(e, w6_ref[...], preferred_element_type=jnp.float32)
                     + b6_ref[...], g6_ref[...], e6_ref[...])      # (tb, 32)
        # final Linear(32,1) as a VPU reduction (avoid a K=32,N=1 MXU pass)
        pred = jnp.sum(e * w7_ref[...], axis=-1, keepdims=True) + b7_ref[...]
        # lane-dense output slab; the wrapper slices column 0
        o_ref[...] = jnp.broadcast_to(pred, o_ref.shape)
    # TODO(synk): training-mode Dropout(0.35) not implemented (eval identity).


def pair_stack_eval(p_items, idx_i, idx_j, params):
    n_items, b, _ = p_items.shape
    n_pairs = idx_i.shape[0]
    tb = b if b <= 512 else 512

    b0, g0, e0 = params["emb0"]
    w1, b1, g1, e1 = params["emb1"]
    w2, b2, g2, e2 = params["emb2"]
    w3, b3, g3, e3 = params["emb3"]
    w4, b4, g4, e4 = params["eval0"]
    w5, b5, g5, e5 = params["eval1"]
    w6, b6, g6, e6 = params["eval2"]
    w7, b7 = params["eval_final"]
    consts = [b0, g0, e0, w1, b1, g1, e1, w2, b2, g2, e2, w3, b3, g3, e3,
              w4, b4, g4, e4, w5, b5, g5, e5, w6, b6, g6, e6, w7, b7]

    def const_spec(a):
        return pl.BlockSpec(a.shape, lambda bt, c, ii, jj: (0, 0))

    # Data-dependent gather of the two pair halves via scalar-prefetched indices:
    #   top half of item idx_i[c], bottom half of item idx_j[c] for a tile of outfits.
    top_spec = pl.BlockSpec((None, tb, 512), lambda bt, c, ii, jj: (ii[c], bt, 0))
    bot_spec = pl.BlockSpec((None, tb, 512), lambda bt, c, ii, jj: (jj[c], bt, 1))

    out = pl.pallas_call(
        _pair_stack_eval_kernel,
        out_shape=jax.ShapeDtypeStruct((b, 128), jnp.float32),
        grid_spec=pltpu.PrefetchScalarGridSpec(
            num_scalar_prefetch=2,
            grid=(pl.cdiv(b, tb), n_pairs),
            in_specs=[top_spec, bot_spec] + [const_spec(a) for a in consts],
            out_specs=pl.BlockSpec((tb, 128), lambda bt, c, ii, jj: (bt, 0)),
            scratch_shapes=[pltpu.VMEM((tb, 256), jnp.float32)],
        ),
        compiler_params=pltpu.CompilerParams(
            dimension_semantics=("parallel", "arbitrary")),
    )(idx_i, idx_j, p_items, p_items, *consts)
    return out[:, 0]


# ---------------------------------------------------------------------------
# Deterministic parameter init (xavier_normal_ weights, zero bias,
# LayerNorm gamma=1 / beta=0) — matching xavier_normal_initialization.
# Weights stored (in_features, out_features) for x @ W.
# ---------------------------------------------------------------------------
def _xavier_normal(key, fan_in, fan_out):
    std = float(np.sqrt(2.0 / (fan_in + fan_out)))
    return jax.random.normal(key, (fan_in, fan_out), jnp.float32) * std


def init_params(cnn_feat_dim, key):
    keys = jax.random.split(key, 9)
    p = {}

    def ln_aux(fo):
        return (jnp.ones((1, fo), jnp.float32), jnp.zeros((1, fo), jnp.float32))

    # feat_layer Linear(F,1024) folded into emb Linear(2048,512):
    #   w0cat packs the two per-item 1024x512 halves side by side -> (1024,1024)
    wf = _xavier_normal(keys[0], cnn_feat_dim, 1024)
    bf = jnp.zeros((1, 1024), jnp.float32)
    w0 = _xavier_normal(keys[1], 2048, 512)
    b0 = jnp.zeros((1, 512), jnp.float32)
    w0cat = jnp.concatenate([w0[:1024], w0[1024:]], axis=1)      # [W0_top | W0_bot]
    p["w_proj"] = (wf @ w0cat).astype(jnp.bfloat16)              # (F, 1024) folded
    p["b_proj"] = bf @ w0cat                                     # (1, 1024) folded bias
    p["emb0"] = (b0,) + ln_aux(512)

    # emb layers 1..3: Linear (bf16 MXU operand) + LayerNorm (+ ReLU, Dropout=id)
    for li, (fi, fo) in enumerate([(512, 512), (512, 256), (256, 256)], start=1):
        w = _xavier_normal(keys[1 + li], fi, fo).astype(jnp.bfloat16)
        p[f"emb{li}"] = (w, jnp.zeros((1, fo), jnp.float32)) + ln_aux(fo)

    # eval layers: 3 x [Linear, LayerNorm, ReLU, Dropout] + final Linear(32,1)
    for li, (fi, fo) in enumerate([(256, 128), (128, 128), (128, 32)]):
        w = _xavier_normal(keys[5 + li], fi, fo)
        p[f"eval{li}"] = (w, jnp.zeros((1, fo), jnp.float32)) + ln_aux(fo)
    p["eval_final"] = (_xavier_normal(keys[8], 32, 1).reshape(1, 32),
                       jnp.zeros((1, 1), jnp.float32))
    return p


# ---------------------------------------------------------------------------
# Forward pass
# ---------------------------------------------------------------------------
def fashion_evaluator_forward(params, cnn_feats):
    B, N, F = cnn_feats.shape
    combs = list(combinations(range(N), 2))
    idx_i = jnp.array([a for a, _ in combs], dtype=jnp.int32)
    idx_j = jnp.array([b for _, b in combs], dtype=jnp.int32)

    # Item-major layout so kernel 2 can gather whole outfit-tiles per pair.
    x_items = jnp.transpose(cnn_feats, (1, 0, 2)).reshape(N * B, F)

    # Kernel 1: folded per-item projection (each item projected exactly once).
    p_items = item_proj(x_items, params["w_proj"], params["b_proj"])
    p_items = p_items.reshape(N, B, 1024)

    # Kernel 2: gather + emb stack + combination mean + eval chain, fused.
    return pair_stack_eval(p_items, idx_i, idx_j, params)      # (B,)


if __name__ == "__main__":
    key = jax.random.PRNGKey(0)
    pkey, dkey = jax.random.split(key)

    cnn_feat_dim = 64
    B, N = 2, 4            # 2 outfits, 4 items each -> 6 pairwise combinations

    params = init_params(cnn_feat_dim, pkey)
    cnn_feats = jax.random.normal(dkey, (B, N, cnn_feat_dim), dtype=jnp.float32)

    fwd = jax.jit(partial(fashion_evaluator_forward, params))
    out = jax.block_until_ready(fwd(cnn_feats))
    assert out.shape == (B,)
    assert bool(jnp.all(jnp.isfinite(out)))
    print("KERNEL_OK")
</pallas_src>

<mosaic_0001>
module attributes {stable_mosaic.version = 11 : i64} {
  func.func @_item_proj_kernel(%arg0: i32, %arg1: memref<8x64xf32, #tpu.memory_space<vmem>>, %arg2: memref<64x1024xbf16, #tpu.memory_space<vmem>>, %arg3: memref<1x1024xf32, #tpu.memory_space<vmem>>, %arg4: memref<8x1024xbf16, #tpu.memory_space<vmem>>) attributes {dimension_semantics = [#tpu.dimension_semantics<parallel>], iteration_bounds = array<i64: 1>, scalar_prefetch = 0 : i64, scratch_operands = 0 : i64, tpu.core_type = #tpu.core_type<tc>, window_params = [{transform_indices = @transform_0, window_bounds = array<i64: 8, 64>}, {pipeline_mode = #tpu.pipeline_mode<synchronous>, transform_indices = @transform_1, window_bounds = array<i64: 64, 1024>}, {pipeline_mode = #tpu.pipeline_mode<synchronous>, transform_indices = @transform_2, window_bounds = array<i64: 1, 1024>}, {transform_indices = @transform_3, window_bounds = array<i64: 8, 1024>}]} {
    %c0 = arith.constant 0 : index
    %c0_0 = arith.constant 0 : index
    %0 = vector.load %arg1[%c0, %c0_0] : memref<8x64xf32, #tpu.memory_space<vmem>>, vector<8x64xf32>
    %1 = arith.truncf %0 : vector<8x64xf32> to vector<8x64xbf16>
    %c0_1 = arith.constant 0 : index
    %c0_2 = arith.constant 0 : index
    %2 = vector.load %arg2[%c0_1, %c0_2] : memref<64x1024xbf16, #tpu.memory_space<vmem>>, vector<64x1024xbf16>
    %cst = arith.constant dense<0.000000e+00> : vector<8x1024xf32>
    %3 = tpu.matmul %1, %2, %cst {dimension_numbers = #tpu.dot_dimension_numbers<[1], [0], [0], [1], [0, 0, 1, 1], [], []>} : vector<8x64xbf16>, vector<64x1024xbf16>, vector<8x1024xf32> -> vector<8x1024xf32>
    %c0_3 = arith.constant 0 : index
    %c0_4 = arith.constant 0 : index
    %4 = vector.load %arg3[%c0_3, %c0_4] : memref<1x1024xf32, #tpu.memory_space<vmem>>, vector<1x1024xf32>
    %5 = vector.broadcast %4 : vector<1x1024xf32> to vector<8x1024xf32>
    %6 = arith.addf %3, %5 : vector<8x1024xf32>
    %7 = arith.truncf %6 : vector<8x1024xf32> to vector<8x1024xbf16>
    %c0_5 = arith.constant 0 : index
    %c0_6 = arith.constant 0 : index
    %8 = vector.load %arg4[%c0_5, %c0_6] : memref<8x1024xbf16, #tpu.memory_space<vmem>>, vector<8x1024xbf16>
    tpu.vector_store %arg4[%c0_5, %c0_6], %7 {strides = array<i32>} : memref<8x1024xbf16, #tpu.memory_space<vmem>>, vector<8x1024xbf16>,
    return
  }
  func.func @transform_0(%arg0: i32) -> (i32, i32) {
    %c0_i32 = arith.constant 0 : i32
    %c0_i32_0 = arith.constant 0 : i32
    return %arg0, %c0_i32 : i32, i32
  }
  func.func @transform_1(%arg0: i32) -> (i32, i32) {
    %c0_i32 = arith.constant 0 : i32
    %c0_i32_0 = arith.constant 0 : i32
    %c0_i32_1 = arith.constant 0 : i32
    return %c0_i32, %c0_i32_0 : i32, i32
  }
  func.func @transform_2(%arg0: i32) -> (i32, i32) {
    %c0_i32 = arith.constant 0 : i32
    %c0_i32_0 = arith.constant 0 : i32
    %c0_i32_1 = arith.constant 0 : i32
    return %c0_i32, %c0_i32_0 : i32, i32
  }
  func.func @transform_3(%arg0: i32) -> (i32, i32) {
    %c0_i32 = arith.constant 0 : i32
    %c0_i32_0 = arith.constant 0 : i32
    return %arg0, %c0_i32 : i32, i32
  }
}

module attributes {stable_mosaic.version = 11 : i64} {
  func.func @_pair_stack_eval_kernel(%arg0: i32, %arg1: i32, %arg2: memref<6xi32, #tpu.memory_space<smem>>, %arg3: memref<6xi32, #tpu.memory_space<smem>>, %arg4: memref<1x2x512xbf16, #tpu.memory_space<vmem>>, %arg5: memref<1x2x512xbf16, #tpu.memory_space<vmem>>, %arg6: memref<1x512xf32, #tpu.memory_space<vmem>>, %arg7: memref<1x512xf32, #tpu.memory_space<vmem>>, %arg8: memref<1x512xf32, #tpu.memory_space<vmem>>, %arg9: memref<512x512xbf16, #tpu.memory_space<vmem>>, %arg10: memref<1x512xf32, #tpu.memory_space<vmem>>, %arg11: memref<1x512xf32, #tpu.memory_space<vmem>>, %arg12: memref<1x512xf32, #tpu.memory_space<vmem>>, %arg13: memref<512x256xbf16, #tpu.memory_space<vmem>>, %arg14: memref<1x256xf32, #tpu.memory_space<vmem>>, %arg15: memref<1x256xf32, #tpu.memory_space<vmem>>, %arg16: memref<1x256xf32, #tpu.memory_space<vmem>>, %arg17: memref<256x256xbf16, #tpu.memory_space<vmem>>, %arg18: memref<1x256xf32, #tpu.memory_space<vmem>>, %arg19: memref<1x256xf32, #tpu.memory_space<vmem>>, %arg20: memref<1x256xf32, #tpu.memory_space<vmem>>, %arg21: memref<256x128xf32, #tpu.memory_space<vmem>>, %arg22: memref<1x128xf32, #tpu.memory_space<vmem>>, %arg23: memref<1x128xf32, #tpu.memory_space<vmem>>, %arg24: memref<1x128xf32, #tpu.memory_space<vmem>>, %arg25: memref<128x128xf32, #tpu.memory_space<vmem>>, %arg26: memref<1x128xf32, #tpu.memory_space<vmem>>, %arg27: memref<1x128xf32, #tpu.memory_space<vmem>>, %arg28: memref<1x128xf32, #tpu.memory_space<vmem>>, %arg29: memref<128x32xf32, #tpu.memory_space<vmem>>, %arg30: memref<1x32xf32, #tpu.memory_space<vmem>>, %arg31: memref<1x32xf32, #tpu.memory_space<vmem>>, %arg32: memref<1x32xf32, #tpu.memory_space<vmem>>, %arg33: memref<1x32xf32, #tpu.memory_space<vmem>>, %arg34: memref<1x1xf32, #tpu.memory_space<vmem>>, %arg35: memref<2x128xf32, #tpu.memory_space<vmem>>, %arg36: memref<2x256xf32, #tpu.memory_space<vmem>>) attributes {dimension_semantics = [#tpu.dimension_semantics<parallel>, #tpu.dimension_semantics<arbitrary>], iteration_bounds = array<i64: 1, 6>, scalar_prefetch = 2 : i64, scratch_operands = 1 : i64, tpu.core_type = #tpu.core_type<tc>, window_params = [{transform_indices = @transform_0, window_bounds = array<i64: 1, 2, 512>}, {transform_indices = @transform_1, window_bounds = array<i64: 1, 2, 512>}, {pipeline_mode = #tpu.pipeline_mode<synchronous>, transform_indices = @transform_2, window_bounds = array<i64: 1, 512>}, {pipeline_mode = #tpu.pipeline_mode<synchronous>, transform_indices = @transform_3, window_bounds = array<i64: 1, 512>}, {pipeline_mode = #tpu.pipeline_mode<synchronous>, transform_indices = @transform_4, window_bounds = array<i64: 1, 512>}, {pipeline_mode = #tpu.pipeline_mode<synchronous>, transform_indices = @transform_5, window_bounds = array<i64: 512, 512>}, {pipeline_mode = #tpu.pipeline_mode<synchronous>, transform_indices = @transform_6, window_bounds = array<i64: 1, 512>}, {pipeline_mode = #tpu.pipeline_mode<synchronous>, transform_indices = @transform_7, window_bounds = array<i64: 1, 512>}, {pipeline_mode = #tpu.pipeline_mode<synchronous>, transform_indices = @transform_8, window_bounds = array<i64: 1, 512>}, {pipeline_mode = #tpu.pipeline_mode<synchronous>, transform_indices = @transform_9, window_bounds = array<i64: 512, 256>}, {pipeline_mode = #tpu.pipeline_mode<synchronous>, transform_indices = @transform_10, window_bounds = array<i64: 1, 256>}, {pipeline_mode = #tpu.pipeline_mode<synchronous>, transform_indices = @transform_11, window_bounds = array<i64: 1, 256>}, {pipeline_mode = #tpu.pipeline_mode<synchronous>, transform_indices = @transform_12, window_bounds = array<i64: 1, 256>}, {pipeline_mode = #tpu.pipeline_mode<synchronous>, transform_indices = @transform_13, window_bounds = array<i64: 256, 256>}, {pipeline_mode = #tpu.pipeline_mode<synchronous>, transform_indices = @transform_14, window_bounds = array<i64: 1, 256>}, {pipeline_mode = #tpu.pipeline_mode<synchronous>, transform_indices = @transform_15, window_bounds = array<i64: 1, 256>}, {pipeline_mode = #tpu.pipeline_mode<synchronous>, transform_indices = @transform_16, window_bounds = array<i64: 1, 256>}, {pipeline_mode = #tpu.pipeline_mode<synchronous>, transform_indices = @transform_17, window_bounds = array<i64: 256, 128>}, {pipeline_mode = #tpu.pipeline_mode<synchronous>, transform_indices = @transform_18, window_bounds = array<i64: 1, 128>}, {pipeline_mode = #tpu.pipeline_mode<synchronous>, transform_indices = @transform_19, window_bounds = array<i64: 1, 128>}, {pipeline_mode = #tpu.pipeline_mode<synchronous>, transform_indices = @transform_20, window_bounds = array<i64: 1, 128>}, {pipeline_mode = #tpu.pipeline_mode<synchronous>, transform_indices = @transform_21, window_bounds = array<i64: 128, 128>}, {pipeline_mode = #tpu.pipeline_mode<synchronous>, transform_indices = @transform_22, window_bounds = array<i64: 1, 128>}, {pipeline_mode = #tpu.pipeline_mode<synchronous>, transform_indices = @transform_23, window_bounds = array<i64: 1, 128>}, {pipeline_mode = #tpu.pipeline_mode<synchronous>, transform_indices = @transform_24, window_bounds = array<i64: 1, 128>}, {pipeline_mode = #tpu.pipeline_mode<synchronous>, transform_indices = @transform_25, window_bounds = array<i64: 128, 32>}, {pipeline_mode = #tpu.pipeline_mode<synchronous>, transform_indices = @transform_26, window_bounds = array<i64: 1, 32>}, {pipeline_mode = #tpu.pipeline_mode<synchronous>, transform_indices = @transform_27, window_bounds = array<i64: 1, 32>}, {pipeline_mode = #tpu.pipeline_mode<synchronous>, transform_indices = @transform_28, window_bounds = array<i64: 1, 32>}, {pipeline_mode = #tpu.pipeline_mode<synchronous>, transform_indices = @transform_29, window_bounds = array<i64: 1, 32>}, {pipeline_mode = #tpu.pipeline_mode<synchronous>, transform_indices = @transform_30, window_bounds = array<i64: 1, 1>}, {transform_indices = @transform_31, window_bounds = array<i64: 2, 128>}]} {
    %c0_i32 = arith.constant 0 : i32
    %0 = arith.cmpi eq, %arg1, %c0_i32 : i32
    %1 = arith.extui %0 : i1 to i32
    %c0_i32_0 = arith.constant 0 : i32
    %2 = arith.cmpi ne, %1, %c0_i32_0 : i32
    scf.if %2 {
      %cst_67 = arith.constant 0.000000e+00 : f32
      %133 = vector.broadcast %cst_67 : f32 to vector<2x256xf32>
      %c0_68 = arith.constant 0 : index
      %c0_69 = arith.constant 0 : index
      %134 = vector.load %arg36[%c0_68, %c0_69] : memref<2x256xf32, #tpu.memory_space<vmem>>, vector<2x256xf32>
      tpu.vector_store %arg36[%c0_68, %c0_69], %133 {strides = array<i32>} : memref<2x256xf32, #tpu.memory_space<vmem>>, vector<2x256xf32>,
    } else {
    }
    %c0 = arith.constant 0 : index
    %c0_1 = arith.constant 0 : index
    %c0_2 = arith.constant 0 : index
    %3 = vector.load %arg4[%c0, %c0_1, %c0_2] : memref<1x2x512xbf16, #tpu.memory_space<vmem>>, vector<1x2x512xbf16>
    %4 = vector.shape_cast %3 : vector<1x2x512xbf16> to vector<2x512xbf16>
    %5 = arith.extf %4 : vector<2x512xbf16> to vector<2x512xf32>
    %c0_3 = arith.constant 0 : index
    %c0_4 = arith.constant 0 : index
    %c0_5 = arith.constant 0 : index
    %6 = vector.load %arg5[%c0_3, %c0_4, %c0_5] : memref<1x2x512xbf16, #tpu.memory_space<vmem>>, vector<1x2x512xbf16>
    %7 = vector.shape_cast %6 : vector<1x2x512xbf16> to vector<2x512xbf16>
    %8 = arith.extf %7 : vector<2x512xbf16> to vector<2x512xf32>
    %9 = arith.addf %5, %8 : vector<2x512xf32>
    %c0_6 = arith.constant 0 : index
    %c0_7 = arith.constant 0 : index
    %10 = vector.load %arg6[%c0_6, %c0_7] : memref<1x512xf32, #tpu.memory_space<vmem>>, vector<1x512xf32>
    %11 = vector.broadcast %10 : vector<1x512xf32> to vector<2x512xf32>
    %12 = arith.addf %9, %11 : vector<2x512xf32>
    %c0_8 = arith.constant 0 : index
    %c0_9 = arith.constant 0 : index
    %13 = vector.load %arg7[%c0_8, %c0_9] : memref<1x512xf32, #tpu.memory_space<vmem>>, vector<1x512xf32>
    %c0_10 = arith.constant 0 : index
    %c0_11 = arith.constant 0 : index
    %14 = vector.load %arg8[%c0_10, %c0_11] : memref<1x512xf32, #tpu.memory_space<vmem>>, vector<1x512xf32>
    %cst = arith.constant dense<0.000000e+00> : vector<2xf32>
    %15 = vector.multi_reduction <add>, %12, %cst [1] : vector<2x512xf32> to vector<2xf32>
    %16 = vector.shape_cast %15 : vector<2xf32> to vector<2x1xf32>
    %cst_12 = arith.constant 5.120000e+02 : f32
    %17 = vector.broadcast %cst_12 : f32 to vector<2x1xf32>
    %18 = arith.divf %16, %17 : vector<2x1xf32>
    %19 = vector.broadcast %18 : vector<2x1xf32> to vector<2x512xf32>
    %20 = arith.subf %12, %19 : vector<2x512xf32>
    %21 = arith.mulf %20, %20 : vector<2x512xf32>
    %cst_13 = arith.constant dense<0.000000e+00> : vector<2xf32>
    %22 = vector.multi_reduction <add>, %21, %cst_13 [1] : vector<2x512xf32> to vector<2xf32>
    %23 = vector.shape_cast %22 : vector<2xf32> to vector<2x1xf32>
    %cst_14 = arith.constant 5.120000e+02 : f32
    %24 = vector.broadcast %cst_14 : f32 to vector<2x1xf32>
    %25 = arith.divf %23, %24 : vector<2x1xf32>
    %cst_15 = arith.constant 9.99999974E-6 : f32
    %26 = vector.broadcast %cst_15 : f32 to vector<2x1xf32>
    %27 = arith.addf %25, %26 : vector<2x1xf32>
    %28 = math.rsqrt %27 : vector<2x1xf32>
    %29 = vector.broadcast %28 : vector<2x1xf32> to vector<2x512xf32>
    %30 = arith.mulf %20, %29 : vector<2x512xf32>
    %31 = vector.broadcast %13 : vector<1x512xf32> to vector<2x512xf32>
    %32 = arith.mulf %30, %31 : vector<2x512xf32>
    %33 = vector.broadcast %14 : vector<1x512xf32> to vector<2x512xf32>
    %34 = arith.addf %32, %33 : vector<2x512xf32>
    %cst_16 = arith.constant 0.000000e+00 : f32
    %35 = vector.broadcast %cst_16 : f32 to vector<2x512xf32>
    %36 = arith.maximumf %34, %35 : vector<2x512xf32>
    %37 = arith.truncf %36 : vector<2x512xf32> to vector<2x512xbf16>
    %c0_17 = arith.constant 0 : index
    %c0_18 = arith.constant 0 : index
    %38 = vector.load %arg9[%c0_17, %c0_18] : memref<512x512xbf16, #tpu.memory_space<vmem>>, vector<512x512xbf16>
    %cst_19 = arith.constant dense<0.000000e+00> : vector<2x512xf32>
    %39 = tpu.matmul %37, %38, %cst_19 {dimension_numbers = #tpu.dot_dimension_numbers<[1], [0], [0], [1], [0, 0, 1, 1], [], []>} : vector<2x512xbf16>, vector<512x512xbf16>, vector<2x512xf32> -> vector<2x512xf32>
    %c0_20 = arith.constant 0 : index
    %c0_21 = arith.constant 0 : index
    %40 = vector.load %arg10[%c0_20, %c0_21] : memref<1x512xf32, #tpu.memory_space<vmem>>, vector<1x512xf32>
    %41 = vector.broadcast %40 : vector<1x512xf32> to vector<2x512xf32>
    %42 = arith.addf %39, %41 : vector<2x512xf32>
    %c0_22 = arith.constant 0 : index
    %c0_23 = arith.constant 0 : index
    %43 = vector.load %arg11[%c0_22, %c0_23] : memref<1x512xf32, #tpu.memory_space<vmem>>, vector<1x512xf32>
    %c0_24 = arith.constant 0 : index
    %c0_25 = arith.constant 0 : index
    %44 = vector.load %arg12[%c0_24, %c0_25] : memref<1x512xf32, #tpu.memory_space<vmem>>, vector<1x512xf32>
    %cst_26 = arith.constant dense<0.000000e+00> : vector<2xf32>
    %45 = vector.multi_reduction <add>, %42, %cst_26 [1] : vector<2x512xf32> to vector<2xf32>
    %46 = vector.shape_cast %45 : vector<2xf32> to vector<2x1xf32>
    %cst_27 = arith.constant 5.120000e+02 : f32
    %47 = vector.broadcast %cst_27 : f32 to vector<2x1xf32>
    %48 = arith.divf %46, %47 : vector<2x1xf32>
    %49 = vector.broadcast %48 : vector<2x1xf32> to vector<2x512xf32>
    %50 = arith.subf %42, %49 : vector<2x512xf32>
    %51 = arith.mulf %50, %50 : vector<2x512xf32>
    %cst_28 = arith.constant dense<0.000000e+00> : vector<2xf32>
    %52 = vector.multi_reduction <add>, %51, %cst_28 [1] : vector<2x512xf32> to vector<2xf32>
    %53 = vector.shape_cast %52 : vector<2xf32> to vector<2x1xf32>
    %cst_29 = arith.constant 5.120000e+02 : f32
    %54 = vector.broadcast %cst_29 : f32 to vector<2x1xf32>
    %55 = arith.divf %53, %54 : vector<2x1xf32>
    %cst_30 = arith.constant 9.99999974E-6 : f32
    %56 = vector.broadcast %cst_30 : f32 to vector<2x1xf32>
    %57 = arith.addf %55, %56 : vector<2x1xf32>
    %58 = math.rsqrt %57 : vector<2x1xf32>
    %59 = vector.broadcast %58 : vector<2x1xf32> to vector<2x512xf32>
    %60 = arith.mulf %50, %59 : vector<2x512xf32>
    %61 = vector.broadcast %43 : vector<1x512xf32> to vector<2x512xf32>
    %62 = arith.mulf %60, %61 : vector<2x512xf32>
    %63 = vector.broadcast %44 : vector<1x512xf32> to vector<2x512xf32>
    %64 = arith.addf %62, %63 : vector<2x512xf32>
    %cst_31 = arith.constant 0.000000e+00 : f32
    %65 = vector.broadcast %cst_31 : f32 to vector<2x512xf32>
    %66 = arith.maximumf %64, %65 : vector<2x512xf32>
    %67 = arith.truncf %66 : vector<2x512xf32> to vector<2x512xbf16>
    %c0_32 = arith.constant 0 : index
    %c0_33 = arith.constant 0 : index
    %68 = vector.load %arg13[%c0_32, %c0_33] : memref<512x256xbf16, #tpu.memory_space<vmem>>, vector<512x256xbf16>
    %cst_34 = arith.constant dense<0.000000e+00> : vector<2x256xf32>
    %69 = tpu.matmul %67, %68, %cst_34 {dimension_numbers = #tpu.dot_dimension_numbers<[1], [0], [0], [1], [0, 0, 1, 1], [], []>} : vector<2x512xbf16>, vector<512x256xbf16>, vector<2x256xf32> -> vector<2x256xf32>
    %c0_35 = arith.constant 0 : index
    %c0_36 = arith.constant 0 : index
    %70 = vector.load %arg14[%c0_35, %c0_36] : memref<1x256xf32, #tpu.memory_space<vmem>>, vector<1x256xf32>
    %71 = vector.broadcast %70 : vector<1x256xf32> to vector<2x256xf32>
    %72 = arith.addf %69, %71 : vector<2x256xf32>
    %c0_37 = arith.constant 0 : index
    %c0_38 = arith.constant 0 : index
    %73 = vector.load %arg15[%c0_37, %c0_38] : memref<1x256xf32, #tpu.memory_space<vmem>>, vector<1x256xf32>
    %c0_39 = arith.constant 0 : index
    %c0_40 = arith.constant 0 : index
    %74 = vector.load %arg16[%c0_39, %c0_40] : memref<1x256xf32, #tpu.memory_space<vmem>>, vector<1x256xf32>
    %cst_41 = arith.constant dense<0.000000e+00> : vector<2xf32>
    %75 = vector.multi_reduction <add>, %72, %cst_41 [1] : vector<2x256xf32> to vector<2xf32>
    %76 = vector.shape_cast %75 : vector<2xf32> to vector<2x1xf32>
    %cst_42 = arith.constant 2.560000e+02 : f32
    %77 = vector.broadcast %cst_42 : f32 to vector<2x1xf32>
    %78 = arith.divf %76, %77 : vector<2x1xf32>
    %79 = vector.broadcast %78 : vector<2x1xf32> to vector<2x256xf32>
    %80 = arith.subf %72, %79 : vector<2x256xf32>
    %81 = arith.mulf %80, %80 : vector<2x256xf32>
    %cst_43 = arith.constant dense<0.000000e+00> : vector<2xf32>
    %82 = vector.multi_reduction <add>, %81, %cst_43 [1] : vector<2x256xf32> to vector<2xf32>
    %83 = vector.shape_cast %82 : vector<2xf32> to vector<2x1xf32>
    %cst_44 = arith.constant 2.560000e+02 : f32
    %84 = vector.broadcast %cst_44 : f32 to vector<2x1xf32>
    %85 = arith.divf %83, %84 : vector<2x1xf32>
    %cst_45 = arith.constant 9.99999974E-6 : f32
    %86 = vector.broadcast %cst_45 : f32 to vector<2x1xf32>
    %87 = arith.addf %85, %86 : vector<2x1xf32>
    %88 = math.rsqrt %87 : vector<2x1xf32>
    %89 = vector.broadcast %88 : vector<2x1xf32> to vector<2x256xf32>
    %90 = arith.mulf %80, %89 : vector<2x256xf32>
    %91 = vector.broadcast %73 : vector<1x256xf32> to vector<2x256xf32>
    %92 = arith.mulf %90, %91 : vector<2x256xf32>
    %93 = vector.broadcast %74 : vector<1x256xf32> to vector<2x256xf32>
    %94 = arith.addf %92, %93 : vector<2x256xf32>
    %cst_46 = arith.constant 0.000000e+00 : f32
    %95 = vector.broadcast %cst_46 : f32 to vector<2x256xf32>
    %96 = arith.maximumf %94, %95 : vector<2x256xf32>
    %97 = arith.truncf %96 : vector<2x256xf32> to vector<2x256xbf16>
    %c0_47 = arith.constant 0 : index
    %c0_48 = arith.constant 0 : index
    %98 = vector.load %arg17[%c0_47, %c0_48] : memref<256x256xbf16, #tpu.memory_space<vmem>>, vector<256x256xbf16>
    %cst_49 = arith.constant dense<0.000000e+00> : vector<2x256xf32>
    %99 = tpu.matmul %97, %98, %cst_49 {dimension_numbers = #tpu.dot_dimension_numbers<[1], [0], [0], [1], [0, 0, 1, 1], [], []>} : vector<2x256xbf16>, vector<256x256xbf16>, vector<2x256xf32> -> vector<2x256xf32>
    %c0_50 = arith.constant 0 : index
    %c0_51 = arith.constant 0 : index
    %100 = vector.load %arg18[%c0_50, %c0_51] : memref<1x256xf32, #tpu.memory_space<vmem>>, vector<1x256xf32>
    %101 = vector.broadcast %100 : vector<1x256xf32> to vector<2x256xf32>
    %102 = arith.addf %99, %101 : vector<2x256xf32>
    %c0_52 = arith.constant 0 : index
    %c0_53 = arith.constant 0 : index
    %103 = vector.load %arg19[%c0_52, %c0_53] : memref<1x256xf32, #tpu.memory_space<vmem>>, vector<1x256xf32>
    %c0_54 = arith.constant 0 : index
    %c0_55 = arith.constant 0 : index
    %104 = vector.load %arg20[%c0_54, %c0_55] : memref<1x256xf32, #tpu.memory_space<vmem>>, vector<1x256xf32>
    %cst_56 = arith.constant dense<0.000000e+00> : vector<2xf32>
    %105 = vector.multi_reduction <add>, %102, %cst_56 [1] : vector<2x256xf32> to vector<2xf32>
    %106 = vector.shape_cast %105 : vector<2xf32> to vector<2x1xf32>
    %cst_57 = arith.constant 2.560000e+02 : f32
    %107 = vector.broadcast %cst_57 : f32 to vector<2x1xf32>
    %108 = arith.divf %106, %107 : vector<2x1xf32>
    %109 = vector.broadcast %108 : vector<2x1xf32> to vector<2x256xf32>
    %110 = arith.subf %102, %109 : vector<2x256xf32>
    %111 = arith.mulf %110, %110 : vector<2x256xf32>
    %cst_58 = arith.constant dense<0.000000e+00> : vector<2xf32>
    %112 = vector.multi_reduction <add>, %111, %cst_58 [1] : vector<2x256xf32> to vector<2xf32>
    %113 = vector.shape_cast %112 : vector<2xf32> to vector<2x1xf32>
    %cst_59 = arith.constant 2.560000e+02 : f32
    %114 = vector.broadcast %cst_59 : f32 to vector<2x1xf32>
    %115 = arith.divf %113, %114 : vector<2x1xf32>
    %cst_60 = arith.constant 9.99999974E-6 : f32
    %116 = vector.broadcast %cst_60 : f32 to vector<2x1xf32>
    %117 = arith.addf %115, %116 : vector<2x1xf32>
    %118 = math.rsqrt %117 : vector<2x1xf32>
    %119 = vector.broadcast %118 : vector<2x1xf32> to vector<2x256xf32>
    %120 = arith.mulf %110, %119 : vector<2x256xf32>
    %121 = vector.broadcast %103 : vector<1x256xf32> to vector<2x256xf32>
    %122 = arith.mulf %120, %121 : vector<2x256xf32>
    %123 = vector.broadcast %104 : vector<1x256xf32> to vector<2x256xf32>
    %124 = arith.addf %122, %123 : vector<2x256xf32>
    %cst_61 = arith.constant 0.000000e+00 : f32
    %125 = vector.broadcast %cst_61 : f32 to vector<2x256xf32>
    %126 = arith.maximumf %124, %125 : vector<2x256xf32>
    %c0_62 = arith.constant 0 : index
    %c0_63 = arith.constant 0 : index
    %127 = vector.load %arg36[%c0_62, %c0_63] : memref<2x256xf32, #tpu.memory_space<vmem>>, vector<2x256xf32>
    %128 = arith.addf %127, %126 : vector<2x256xf32>
    %c0_64 = arith.constant 0 : index
    %c0_65 = arith.constant 0 : index
    %129 = vector.load %arg36[%c0_64, %c0_65] : memref<2x256xf32, #tpu.memory_space<vmem>>, vector<2x256xf32>
    tpu.vector_store %arg36[%c0_64, %c0_65], %128 {strides = array<i32>} : memref<2x256xf32, #tpu.memory_space<vmem>>, vector<2x256xf32>,
    %c5_i32 = arith.constant 5 : i32
    %130 = arith.cmpi eq, %arg1, %c5_i32 : i32
    %131 = arith.extui %130 : i1 to i32
    %c0_i32_66 = arith.constant 0 : i32
    %132 = arith.cmpi ne, %131, %c0_i32_66 : i32
    scf.if %132 {
      %c0_67 = arith.constant 0 : index
      %c0_68 = arith.constant 0 : index
      %133 = vector.load %arg36[%c0_67, %c0_68] : memref<2x256xf32, #tpu.memory_space<vmem>>, vector<2x256xf32>
      %cst_69 = arith.constant 0.166666672 : f32
      %134 = vector.broadcast %cst_69 : f32 to vector<2x256xf32>
      %135 = arith.mulf %133, %134 : vector<2x256xf32>
      %c0_70 = arith.constant 0 : index
      %c0_71 = arith.constant 0 : index
      %136 = vector.load %arg21[%c0_70, %c0_71] : memref<256x128xf32, #tpu.memory_space<vmem>>, vector<256x128xf32>
      %cst_72 = arith.constant dense<0.000000e+00> : vector<2x128xf32>
      %137 = tpu.matmul %135, %136, %cst_72 {dimension_numbers = #tpu.dot_dimension_numbers<[1], [0], [0], [1], [0, 0, 1, 1], [], []>} : vector<2x256xf32>, vector<256x128xf32>, vector<2x128xf32> -> vector<2x128xf32>
      %c0_73 = arith.constant 0 : index
      %c0_74 = arith.constant 0 : index
      %138 = vector.load %arg22[%c0_73, %c0_74] : memref<1x128xf32, #tpu.memory_space<vmem>>, vector<1x128xf32>
      %139 = vector.broadcast %138 : vector<1x128xf32> to vector<2x128xf32>
      %140 = arith.addf %137, %139 : vector<2x128xf32>
      %c0_75 = arith.constant 0 : index
      %c0_76 = arith.constant 0 : index
      %141 = vector.load %arg23[%c0_75, %c0_76] : memref<1x128xf32, #tpu.memory_space<vmem>>, vector<1x128xf32>
      %c0_77 = arith.constant 0 : index
      %c0_78 = arith.constant 0 : index
      %142 = vector.load %arg24[%c0_77, %c0_78] : memref<1x128xf32, #tpu.memory_space<vmem>>, vector<1x128xf32>
      %cst_79 = arith.constant dense<0.000000e+00> : vector<2xf32>
      %143 = vector.multi_reduction <add>, %140, %cst_79 [1] : vector<2x128xf32> to vector<2xf32>
      %144 = vector.shape_cast %143 : vector<2xf32> to vector<2x1xf32>
      %cst_80 = arith.constant 1.280000e+02 : f32
      %145 = vector.broadcast %cst_80 : f32 to vector<2x1xf32>
      %146 = arith.divf %144, %145 : vector<2x1xf32>
      %147 = vector.broadcast %146 : vector<2x1xf32> to vector<2x128xf32>
      %148 = arith.subf %140, %147 : vector<2x128xf32>
      %149 = arith.mulf %148, %148 : vector<2x128xf32>
      %cst_81 = arith.constant dense<0.000000e+00> : vector<2xf32>
      %150 = vector.multi_reduction <add>, %149, %cst_81 [1] : vector<2x128xf32> to vector<2xf32>
      %151 = vector.shape_cast %150 : vector<2xf32> to vector<2x1xf32>
      %cst_82 = arith.constant 1.280000e+02 : f32
      %152 = vector.broadcast %cst_82 : f32 to vector<2x1xf32>
      %153 = arith.divf %151, %152 : vector<2x1xf32>
      %cst_83 = arith.constant 9.99999974E-6 : f32
      %154 = vector.broadcast %cst_83 : f32 to vector<2x1xf32>
      %155 = arith.addf %153, %154 : vector<2x1xf32>
      %156 = math.rsqrt %155 : vector<2x1xf32>
      %157 = vector.broadcast %156 : vector<2x1xf32> to vector<2x128xf32>
      %158 = arith.mulf %148, %157 : vector<2x128xf32>
      %159 = vector.broadcast %141 : vector<1x128xf32> to vector<2x128xf32>
      %160 = arith.mulf %158, %159 : vector<2x128xf32>
      %161 = vector.broadcast %142 : vector<1x128xf32> to vector<2x128xf32>
      %162 = arith.addf %160, %161 : vector<2x128xf32>
      %cst_84 = arith.constant 0.000000e+00 : f32
      %163 = vector.broadcast %cst_84 : f32 to vector<2x128xf32>
      %164 = arith.maximumf %162, %163 : vector<2x128xf32>
      %c0_85 = arith.constant 0 : index
      %c0_86 = arith.constant 0 : index
      %165 = vector.load %arg25[%c0_85, %c0_86] : memref<128x128xf32, #tpu.memory_space<vmem>>, vector<128x128xf32>
      %cst_87 = arith.constant dense<0.000000e+00> : vector<2x128xf32>
      %166 = tpu.matmul %164, %165, %cst_87 {dimension_numbers = #tpu.dot_dimension_numbers<[1], [0], [0], [1], [0, 0, 1, 1], [], []>} : vector<2x128xf32>, vector<128x128xf32>, vector<2x128xf32> -> vector<2x128xf32>
      %c0_88 = arith.constant 0 : index
      %c0_89 = arith.constant 0 : index
      %167 = vector.load %arg26[%c0_88, %c0_89] : memref<1x128xf32, #tpu.memory_space<vmem>>, vector<1x128xf32>
      %168 = vector.broadcast %167 : vector<1x128xf32> to vector<2x128xf32>
      %169 = arith.addf %166, %168 : vector<2x128xf32>
      %c0_90 = arith.constant 0 : index
      %c0_91 = arith.constant 0 : index
      %170 = vector.load %arg27[%c0_90, %c0_91] : memref<1x128xf32, #tpu.memory_space<vmem>>, vector<1x128xf32>
      %c0_92 = arith.constant 0 : index
      %c0_93 = arith.constant 0 : index
      %171 = vector.load %arg28[%c0_92, %c0_93] : memref<1x128xf32, #tpu.memory_space<vmem>>, vector<1x128xf32>
      %cst_94 = arith.constant dense<0.000000e+00> : vector<2xf32>
      %172 = vector.multi_reduction <add>, %169, %cst_94 [1] : vector<2x128xf32> to vector<2xf32>
      %173 = vector.shape_cast %172 : vector<2xf32> to vector<2x1xf32>
      %cst_95 = arith.constant 1.280000e+02 : f32
      %174 = vector.broadcast %cst_95 : f32 to vector<2x1xf32>
      %175 = arith.divf %173, %174 : vector<2x1xf32>
      %176 = vector.broadcast %175 : vector<2x1xf32> to vector<2x128xf32>
      %177 = arith.subf %169, %176 : vector<2x128xf32>
      %178 = arith.mulf %177, %177 : vector<2x128xf32>
      %cst_96 = arith.constant dense<0.000000e+00> : vector<2xf32>
      %179 = vector.multi_reduction <add>, %178, %cst_96 [1] : vector<2x128xf32> to vector<2xf32>
      %180 = vector.shape_cast %179 : vector<2xf32> to vector<2x1xf32>
      %cst_97 = arith.constant 1.280000e+02 : f32
      %181 = vector.broadcast %cst_97 : f32 to vector<2x1xf32>
      %182 = arith.divf %180, %181 : vector<2x1xf32>
      %cst_98 = arith.constant 9.99999974E-6 : f32
      %183 = vector.broadcast %cst_98 : f32 to vector<2x1xf32>
      %184 = arith.addf %182, %183 : vector<2x1xf32>
      %185 = math.rsqrt %184 : vector<2x1xf32>
      %186 = vector.broadcast %185 : vector<2x1xf32> to vector<2x128xf32>
      %187 = arith.mulf %177, %186 : vector<2x128xf32>
      %188 = vector.broadcast %170 : vector<1x128xf32> to vector<2x128xf32>
      %189 = arith.mulf %187, %188 : vector<2x128xf32>
      %190 = vector.broadcast %171 : vector<1x128xf32> to vector<2x128xf32>
      %191 = arith.addf %189, %190 : vector<2x128xf32>
      %cst_99 = arith.constant 0.000000e+00 : f32
      %192 = vector.broadcast %cst_99 : f32 to vector<2x128xf32>
      %193 = arith.maximumf %191, %192 : vector<2x128xf32>
      %c0_100 = arith.constant 0 : index
      %c0_101 = arith.constant 0 : index
      %194 = vector.load %arg29[%c0_100, %c0_101] : memref<128x32xf32, #tpu.memory_space<vmem>>, vector<128x32xf32>
      %cst_102 = arith.constant dense<0.000000e+00> : vector<2x32xf32>
      %195 = tpu.matmul %193, %194, %cst_102 {dimension_numbers = #tpu.dot_dimension_numbers<[1], [0], [0], [1], [0, 0, 1, 1], [], []>} : vector<2x128xf32>, vector<128x32xf32>, vector<2x32xf32> -> vector<2x32xf32>
      %c0_103 = arith.constant 0 : index
      %c0_104 = arith.constant 0 : index
      %196 = vector.load %arg30[%c0_103, %c0_104] : memref<1x32xf32, #tpu.memory_space<vmem>>, vector<1x32xf32>
      %197 = vector.broadcast %196 : vector<1x32xf32> to vector<2x32xf32>
      %198 = arith.addf %195, %197 : vector<2x32xf32>
      %c0_105 = arith.constant 0 : index
      %c0_106 = arith.constant 0 : index
      %199 = vector.load %arg31[%c0_105, %c0_106] : memref<1x32xf32, #tpu.memory_space<vmem>>, vector<1x32xf32>
      %c0_107 = arith.constant 0 : index
      %c0_108 = arith.constant 0 : index
      %200 = vector.load %arg32[%c0_107, %c0_108] : memref<1x32xf32, #tpu.memory_space<vmem>>, vector<1x32xf32>
      %cst_109 = arith.constant dense<0.000000e+00> : vector<2xf32>
      %201 = vector.multi_reduction <add>, %198, %cst_109 [1] : vector<2x32xf32> to vector<2xf32>
      %202 = vector.shape_cast %201 : vector<2xf32> to vector<2x1xf32>
      %cst_110 = arith.constant 3.200000e+01 : f32
      %203 = vector.broadcast %cst_110 : f32 to vector<2x1xf32>
      %204 = arith.divf %202, %203 : vector<2x1xf32>
      %205 = vector.broadcast %204 : vector<2x1xf32> to vector<2x32xf32>
      %206 = arith.subf %198, %205 : vector<2x32xf32>
      %207 = arith.mulf %206, %206 : vector<2x32xf32>
      %cst_111 = arith.constant dense<0.000000e+00> : vector<2xf32>
      %208 = vector.multi_reduction <add>, %207, %cst_111 [1] : vector<2x32xf32> to vector<2xf32>
      %209 = vector.shape_cast %208 : vector<2xf32> to vector<2x1xf32>
      %cst_112 = arith.constant 3.200000e+01 : f32
      %210 = vector.broadcast %cst_112 : f32 to vector<2x1xf32>
      %211 = arith.divf %209, %210 : vector<2x1xf32>
      %cst_113 = arith.constant 9.99999974E-6 : f32
      %212 = vector.broadcast %cst_113 : f32 to vector<2x1xf32>
      %213 = arith.addf %211, %212 : vector<2x1xf32>
      %214 = math.rsqrt %213 : vector<2x1xf32>
      %215 = vector.broadcast %214 : vector<2x1xf32> to vector<2x32xf32>
      %216 = arith.mulf %206, %215 : vector<2x32xf32>
      %217 = vector.broadcast %199 : vector<1x32xf32> to vector<2x32xf32>
      %218 = arith.mulf %216, %217 : vector<2x32xf32>
      %219 = vector.broadcast %200 : vector<1x32xf32> to vector<2x32xf32>
      %220 = arith.addf %218, %219 : vector<2x32xf32>
      %cst_114 = arith.constant 0.000000e+00 : f32
      %221 = vector.broadcast %cst_114 : f32 to vector<2x32xf32>
      %222 = arith.maximumf %220, %221 : vector<2x32xf32>
      %c0_115 = arith.constant 0 : index
      %c0_116 = arith.constant 0 : index
      %223 = vector.load %arg33[%c0_115, %c0_116] : memref<1x32xf32, #tpu.memory_space<vmem>>, vector<1x32xf32>
      %224 = vector.broadcast %223 : vector<1x32xf32> to vector<2x32xf32>
      %225 = arith.mulf %222, %224 : vector<2x32xf32>
      %cst_117 = arith.constant dense<0.000000e+00> : vector<2xf32>
      %226 = vector.multi_reduction <add>, %225, %cst_117 [1] : vector<2x32xf32> to vector<2xf32>
      %227 = vector.shape_cast %226 : vector<2xf32> to vector<2x1xf32>
      %c0_118 = arith.constant 0 : index
      %c0_119 = arith.constant 0 : index
      %228 = vector.load %arg34[%c0_118, %c0_119] : memref<1x1xf32, #tpu.memory_space<vmem>>, vector<1x1xf32>
      %229 = vector.broadcast %228 : vector<1x1xf32> to vector<2x1xf32>
      %230 = arith.addf %227, %229 : vector<2x1xf32>
      %231 = vector.shape_cast %230 : vector<2x1xf32> to vector<2x1xf32>
      %232 = vector.broadcast %231 : vector<2x1xf32> to vector<2x128xf32>
      %c0_120 = arith.constant 0 : index
      %c0_121 = arith.constant 0 : index
      %233 = vector.load %arg35[%c0_120, %c0_121] : memref<2x128xf32, #tpu.memory_space<vmem>>, vector<2x128xf32>
      tpu.vector_store %arg35[%c0_120, %c0_121], %232 {strides = array<i32>} : memref<2x128xf32, #tpu.memory_space<vmem>>, vector<2x128xf32>,
    } else {
    }
    return
  }
  func.func @transform_0(%arg0: i32, %arg1: i32, %arg2: memref<6xi32, #tpu.memory_space<smem>>, %arg3: memref<6xi32, #tpu.memory_space<smem>>) -> (i32, i32, i32) {
    %0 = arith.index_cast %arg1 : i32 to index
    %1 = memref.load %arg2[%0] : memref<6xi32, #tpu.memory_space<smem>>
    %c0_i32 = arith.constant 0 : i32
    %c0_i32_0 = arith.constant 0 : i32
    return %1, %arg0, %c0_i32 : i32, i32, i32
  }
  func.func @transform_1(%arg0: i32, %arg1: i32, %arg2: memref<6xi32, #tpu.memory_space<smem>>, %arg3: memref<6xi32, #tpu.memory_space<smem>>) -> (i32, i32, i32) {
    %0 = arith.index_cast %arg1 : i32 to index
    %1 = memref.load %arg3[%0] : memref<6xi32, #tpu.memory_space<smem>>
    %c1_i32 = arith.constant 1 : i32
    %c0_i32 = arith.constant 0 : i32
    return %1, %arg0, %c1_i32 : i32, i32, i32
  }
  func.func @transform_2(%arg0: i32, %arg1: i32, %arg2: memref<6xi32, #tpu.memory_space<smem>>, %arg3: memref<6xi32, #tpu.memory_space<smem>>) -> (i32, i32) {
    %c0_i32 = arith.constant 0 : i32
    %c0_i32_0 = arith.constant 0 : i32
    %c0_i32_1 = arith.constant 0 : i32
    return %c0_i32, %c0_i32_0 : i32, i32
  }
  func.func @transform_3(%arg0: i32, %arg1: i32, %arg2: memref<6xi32, #tpu.memory_space<smem>>, %arg3: memref<6xi32, #tpu.memory_space<smem>>) -> (i32, i32) {
    %c0_i32 = arith.constant 0 : i32
    %c0_i32_0 = arith.constant 0 : i32
    %c0_i32_1 = arith.constant 0 : i32
    return %c0_i32, %c0_i32_0 : i32, i32
  }
  func.func @transform_4(%arg0: i32, %arg1: i32, %arg2: memref<6xi32, #tpu.memory_space<smem>>, %arg3: memref<6xi32, #tpu.memory_space<smem>>) -> (i32, i32) {
    %c0_i32 = arith.constant 0 : i32
    %c0_i32_0 = arith.constant 0 : i32
    %c0_i32_1 = arith.constant 0 : i32
    return %c0_i32, %c0_i32_0 : i32, i32
  }
  func.func @transform_5(%arg0: i32, %arg1: i32, %arg2: memref<6xi32, #tpu.memory_space<smem>>, %arg3: memref<6xi32, #tpu.memory_space<smem>>) -> (i32, i32) {
    %c0_i32 = arith.constant 0 : i32
    %c0_i32_0 = arith.constant 0 : i32
    %c0_i32_1 = arith.constant 0 : i32
    return %c0_i32, %c0_i32_0 : i32, i32
  }
  func.func @transform_6(%arg0: i32, %arg1: i32, %arg2: memref<6xi32, #tpu.memory_space<smem>>, %arg3: memref<6xi32, #tpu.memory_space<smem>>) -> (i32, i32) {
    %c0_i32 = arith.constant 0 : i32
    %c0_i32_0 = arith.constant 0 : i32
    %c0_i32_1 = arith.constant 0 : i32
    return %c0_i32, %c0_i32_0 : i32, i32
  }
  func.func @transform_7(%arg0: i32, %arg1: i32, %arg2: memref<6xi32, #tpu.memory_space<smem>>, %arg3: memref<6xi32, #tpu.memory_space<smem>>) -> (i32, i32) {
    %c0_i32 = arith.constant 0 : i32
    %c0_i32_0 = arith.constant 0 : i32
    %c0_i32_1 = arith.constant 0 : i32
    return %c0_i32, %c0_i32_0 : i32, i32
  }
  func.func @transform_8(%arg0: i32, %arg1: i32, %arg2: memref<6xi32, #tpu.memory_space<smem>>, %arg3: memref<6xi32, #tpu.memory_space<smem>>) -> (i32, i32) {
    %c0_i32 = arith.constant 0 : i32
    %c0_i32_0 = arith.constant 0 : i32
    %c0_i32_1 = arith.constant 0 : i32
    return %c0_i32, %c0_i32_0 : i32, i32
  }
  func.func @transform_9(%arg0: i32, %arg1: i32, %arg2: memref<6xi32, #tpu.memory_space<smem>>, %arg3: memref<6xi32, #tpu.memory_space<smem>>) -> (i32, i32) {
    %c0_i32 = arith.constant 0 : i32
    %c0_i32_0 = arith.constant 0 : i32
    %c0_i32_1 = arith.constant 0 : i32
    return %c0_i32, %c0_i32_0 : i32, i32
  }
  func.func @transform_10(%arg0: i32, %arg1: i32, %arg2: memref<6xi32, #tpu.memory_space<smem>>, %arg3: memref<6xi32, #tpu.memory_space<smem>>) -> (i32, i32) {
    %c0_i32 = arith.constant 0 : i32
    %c0_i32_0 = arith.constant 0 : i32
    %c0_i32_1 = arith.constant 0 : i32
    return %c0_i32, %c0_i32_0 : i32, i32
  }
  func.func @transform_11(%arg0: i32, %arg1: i32, %arg2: memref<6xi32, #tpu.memory_space<smem>>, %arg3: memref<6xi32, #tpu.memory_space<smem>>) -> (i32, i32) {
    %c0_i32 = arith.constant 0 : i32
    %c0_i32_0 = arith.constant 0 : i32
    %c0_i32_1 = arith.constant 0 : i32
    return %c0_i32, %c0_i32_0 : i32, i32
  }
  func.func @transform_12(%arg0: i32, %arg1: i32, %arg2: memref<6xi32, #tpu.memory_space<smem>>, %arg3: memref<6xi32, #tpu.memory_space<smem>>) -> (i32, i32) {
    %c0_i32 = arith.constant 0 : i32
    %c0_i32_0 = arith.constant 0 : i32
    %c0_i32_1 = arith.constant 0 : i32
    return %c0_i32, %c0_i32_0 : i32, i32
  }
  func.func @transform_13(%arg0: i32, %arg1: i32, %arg2: memref<6xi32, #tpu.memory_space<smem>>, %arg3: memref<6xi32, #tpu.memory_space<smem>>) -> (i32, i32) {
    %c0_i32 = arith.constant 0 : i32
    %c0_i32_0 = arith.constant 0 : i32
    %c0_i32_1 = arith.constant 0 : i32
    return %c0_i32, %c0_i32_0 : i32, i32
  }
  func.func @transform_14(%arg0: i32, %arg1: i32, %arg2: memref<6xi32, #tpu.memory_space<smem>>, %arg3: memref<6xi32, #tpu.memory_space<smem>>) -> (i32, i32) {
    %c0_i32 = arith.constant 0 : i32
    %c0_i32_0 = arith.constant 0 : i32
    %c0_i32_1 = arith.constant 0 : i32
    return %c0_i32, %c0_i32_0 : i32, i32
  }
  func.func @transform_15(%arg0: i32, %arg1: i32, %arg2: memref<6xi32, #tpu.memory_space<smem>>, %arg3: memref<6xi32, #tpu.memory_space<smem>>) -> (i32, i32) {
    %c0_i32 = arith.constant 0 : i32
    %c0_i32_0 = arith.constant 0 : i32
    %c0_i32_1 = arith.constant 0 : i32
    return %c0_i32, %c0_i32_0 : i32, i32
  }
  func.func @transform_16(%arg0: i32, %arg1: i32, %arg2: memref<6xi32, #tpu.memory_space<smem>>, %arg3: memref<6xi32, #tpu.memory_space<smem>>) -> (i32, i32) {
    %c0_i32 = arith.constant 0 : i32
    %c0_i32_0 = arith.constant 0 : i32
    %c0_i32_1 = arith.constant 0 : i32
    return %c0_i32, %c0_i32_0 : i32, i32
  }
  func.func @transform_17(%arg0: i32, %arg1: i32, %arg2: memref<6xi32, #tpu.memory_space<smem>>, %arg3: memref<6xi32, #tpu.memory_space<smem>>) -> (i32, i32) {
    %c0_i32 = arith.constant 0 : i32
    %c0_i32_0 = arith.constant 0 : i32
    %c0_i32_1 = arith.constant 0 : i32
    return %c0_i32, %c0_i32_0 : i32, i32
  }
  func.func @transform_18(%arg0: i32, %arg1: i32, %arg2: memref<6xi32, #tpu.memory_space<smem>>, %arg3: memref<6xi32, #tpu.memory_space<smem>>) -> (i32, i32) {
    %c0_i32 = arith.constant 0 : i32
    %c0_i32_0 = arith.constant 0 : i32
    %c0_i32_1 = arith.constant 0 : i32
    return %c0_i32, %c0_i32_0 : i32, i32
  }
  func.func @transform_19(%arg0: i32, %arg1: i32, %arg2: memref<6xi32, #tpu.memory_space<smem>>, %arg3: memref<6xi32, #tpu.memory_space<smem>>) -> (i32, i32) {
    %c0_i32 = arith.constant 0 : i32
    %c0_i32_0 = arith.constant 0 : i32
    %c0_i32_1 = arith.constant 0 : i32
    return %c0_i32, %c0_i32_0 : i32, i32
  }
  func.func @transform_20(%arg0: i32, %arg1: i32, %arg2: memref<6xi32, #tpu.memory_space<smem>>, %arg3: memref<6xi32, #tpu.memory_space<smem>>) -> (i32, i32) {
    %c0_i32 = arith.constant 0 : i32
    %c0_i32_0 = arith.constant 0 : i32
    %c0_i32_1 = arith.constant 0 : i32
    return %c0_i32, %c0_i32_0 : i32, i32
  }
  func.func @transform_21(%arg0: i32, %arg1: i32, %arg2: memref<6xi32, #tpu.memory_space<smem>>, %arg3: memref<6xi32, #tpu.memory_space<smem>>) -> (i32, i32) {
    %c0_i32 = arith.constant 0 : i32
    %c0_i32_0 = arith.constant 0 : i32
    %c0_i32_1 = arith.constant 0 : i32
    return %c0_i32, %c0_i32_0 : i32, i32
  }
  func.func @transform_22(%arg0: i32, %arg1: i32, %arg2: memref<6xi32, #tpu.memory_space<smem>>, %arg3: memref<6xi32, #tpu.memory_space<smem>>) -> (i32, i32) {
    %c0_i32 = arith.constant 0 : i32
    %c0_i32_0 = arith.constant 0 : i32
    %c0_i32_1 = arith.constant 0 : i32
    return %c0_i32, %c0_i32_0 : i32, i32
  }
  func.func @transform_23(%arg0: i32, %arg1: i32, %arg2: memref<6xi32, #tpu.memory_space<smem>>, %arg3: memref<6xi32, #tpu.memory_space<smem>>) -> (i32, i32) {
    %c0_i32 = arith.constant 0 : i32
    %c0_i32_0 = arith.constant 0 : i32
    %c0_i32_1 = arith.constant 0 : i32
    return %c0_i32, %c0_i32_0 : i32, i32
  }
  func.func @transform_24(%arg0: i32, %arg1: i32, %arg2: memref<6xi32, #tpu.memory_space<smem>>, %arg3: memref<6xi32, #tpu.memory_space<smem>>) -> (i32, i32) {
    %c0_i32 = arith.constant 0 : i32
    %c0_i32_0 = arith.constant 0 : i32
    %c0_i32_1 = arith.constant 0 : i32
    return %c0_i32, %c0_i32_0 : i32, i32
  }
  func.func @transform_25(%arg0: i32, %arg1: i32, %arg2: memref<6xi32, #tpu.memory_space<smem>>, %arg3: memref<6xi32, #tpu.memory_space<smem>>) -> (i32, i32) {
    %c0_i32 = arith.constant 0 : i32
    %c0_i32_0 = arith.constant 0 : i32
    %c0_i32_1 = arith.constant 0 : i32
    return %c0_i32, %c0_i32_0 : i32, i32
  }
  func.func @transform_26(%arg0: i32, %arg1: i32, %arg2: memref<6xi32, #tpu.memory_space<smem>>, %arg3: memref<6xi32, #tpu.memory_space<smem>>) -> (i32, i32) {
    %c0_i32 = arith.constant 0 : i32
    %c0_i32_0 = arith.constant 0 : i32
    %c0_i32_1 = arith.constant 0 : i32
    return %c0_i32, %c0_i32_0 : i32, i32
  }
  func.func @transform_27(%arg0: i32, %arg1: i32, %arg2: memref<6xi32, #tpu.memory_space<smem>>, %arg3: memref<6xi32, #tpu.memory_space<smem>>) -> (i32, i32) {
    %c0_i32 = arith.constant 0 : i32
    %c0_i32_0 = arith.constant 0 : i32
    %c0_i32_1 = arith.constant 0 : i32
    return %c0_i32, %c0_i32_0 : i32, i32
  }
  func.func @transform_28(%arg0: i32, %arg1: i32, %arg2: memref<6xi32, #tpu.memory_space<smem>>, %arg3: memref<6xi32, #tpu.memory_space<smem>>) -> (i32, i32) {
    %c0_i32 = arith.constant 0 : i32
    %c0_i32_0 = arith.constant 0 : i32
    %c0_i32_1 = arith.constant 0 : i32
    return %c0_i32, %c0_i32_0 : i32, i32
  }
  func.func @transform_29(%arg0: i32, %arg1: i32, %arg2: memref<6xi32, #tpu.memory_space<smem>>, %arg3: memref<6xi32, #tpu.memory_space<smem>>) -> (i32, i32) {
    %c0_i32 = arith.constant 0 : i32
    %c0_i32_0 = arith.constant 0 : i32
    %c0_i32_1 = arith.constant 0 : i32
    return %c0_i32, %c0_i32_0 : i32, i32
  }
  func.func @transform_30(%arg0: i32, %arg1: i32, %arg2: memref<6xi32, #tpu.memory_space<smem>>, %arg3: memref<6xi32, #tpu.memory_space<smem>>) -> (i32, i32) {
    %c0_i32 = arith.constant 0 : i32
    %c0_i32_0 = arith.constant 0 : i32
    %c0_i32_1 = arith.constant 0 : i32
    return %c0_i32, %c0_i32_0 : i32, i32
  }
  func.func @transform_31(%arg0: i32, %arg1: i32, %arg2: memref<6xi32, #tpu.memory_space<smem>>, %arg3: memref<6xi32, #tpu.memory_space<smem>>) -> (i32, i32) {
    %c0_i32 = arith.constant 0 : i32
    %c0_i32_0 = arith.constant 0 : i32
    return %arg0, %c0_i32 : i32, i32
  }
}

</mosaic_0001>

<llo_original>
// kernel: fashion_evaluator_forward.2
$region0: #{fashion_evaluator_forward.2}
  #allocation0 [shape = 'u32[]', space=smem, size = 0x4, offset = 0x4, fixed_abs, tag = 'smem constant byte address 0x4 - core index']
  #allocation1 [shape = 'u32[72,128]{1,0:T(1,128)}', space=vmem, size = 0x9000, scoped, tag = 'internal scratch']
  %s0 = inlined_call_operand.vmem [shape: f32[8,64], index: 0, kind: input, shape index: {}]
  %s1 = inlined_call_operand.hbm [shape: bf16[64,1024], index: 1, kind: input, shape index: {}]
  %s2 = inlined_call_operand.vmem [shape: f32[1,1024], index: 2, kind: input, shape index: {}]
  %s3 = inlined_call_operand.vmem [shape: bf16[8,1024], index: 3, kind: output, shape index: {}]
  %s4 = sld [smem:[#allocation0]]
  $region26: #{fashion_evaluator_forward.2} parent=0
    _
  %s6 = ssub.s32 1, %s4
  %s7 = scalar_select 0, %s6, %s4
  $region1: #{fashion_evaluator_forward.2} parent=0
    #allocation2 [shape = 'u8[131072]{0}', space=vmem, size = 0x20000, scoped, tag = 'input window, operand 1, single buffered']
    #allocation3 [shape = 's32[1]{0}', space=sflag, size = 0x4, scoped, tag = 'scoped memory for fashion_evaluator_forward.2']
    %8 = vsyncpa [#allocation3], 0
    // Predicated region
    $region2: #{fashion_evaluator_forward.2} parent=1 // pred_check
      _
    $region3: #{fashion_evaluator_forward.2} parent=1 // pred_check_branch
      %10 = sbr.rel (0) target = $region5
    $region4: #{fashion_evaluator_forward.2} parent=1 // pred_region
      _
    $region5: #{fashion_evaluator_forward.2} parent=1 // pred_fallthru
      _
    // Predicated region
    $region6: #{fashion_evaluator_forward.2} parent=1 // pred_check
      _
    $region7: #{fashion_evaluator_forward.2} parent=1 // pred_check_branch
      %12 = sbr.rel (0) target = $region9
    $region8: #{fashion_evaluator_forward.2} parent=1 // pred_region
      %14 = vsyncadd [#allocation3], 0
      %s15 = sshll.u32 %s1, 4
      %s16 = int_to_ptr.hbm [resolvable:$true] %s15
      %s17 = sshll.u32 [#allocation2], 4
      %s18 = int_to_ptr.vmem [resolvable:$true] %s17
      %23 = dma.hbm_to_vmem [thread:$0]  %s16, 4096, %s18, [#allocation3], 512, 512, 32
    $region9: #{fashion_evaluator_forward.2} parent=1 // pred_fallthru
      _
    // Predicated region
    $region10: #{fashion_evaluator_forward.2} parent=1 // pred_check
      _
    $region11: #{fashion_evaluator_forward.2} parent=1 // pred_check_branch
      %25 = sbr.rel (0) target = $region13
    $region12: #{fashion_evaluator_forward.2} parent=1 // pred_region
      _
    $region13: #{fashion_evaluator_forward.2} parent=1 // pred_fallthru
      _
    // Predicated region
    $region14: #{fashion_evaluator_forward.2} parent=1 // pred_check
      _
    $region15: #{fashion_evaluator_forward.2} parent=1 // pred_check_branch
      %27 = sbr.rel (0) target = $region17
    $region16: #{fashion_evaluator_forward.2} parent=1 // pred_region
      %29 = dma.done [#allocation3], 4096
    $region17: #{fashion_evaluator_forward.2} parent=1 // pred_fallthru
      _
    %v31 = vld [vmem:[%s0] sm:$0xff]
    %v32 = vpack.c.bf16 %v31, %v31
    %v33 = vld [vmem:[#allocation2] sm:$0xff]
    %v34 = vld [vmem:[#allocation2 + $0x8] sm:$0xff]
    %v35 = vld [vmem:[#allocation2 + $0x10] sm:$0xff]
    %v36 = vld [vmem:[#allocation2 + $0x18] sm:$0xff]
    %v37 = vld [vmem:[#allocation2 + $0x20] sm:$0xff]
    %v38 = vld [vmem:[#allocation2 + $0x28] sm:$0xff]
    %v39 = vld [vmem:[#allocation2 + $0x30] sm:$0xff]
    %v40 = vld [vmem:[#allocation2 + $0x38] sm:$0xff]
    %v41 = vld [vmem:[#allocation2 + $0x40] sm:$0xff]
    %v42 = vld [vmem:[#allocation2 + $0x48] sm:$0xff]
    %v43 = vld [vmem:[#allocation2 + $0x50] sm:$0xff]
    %v44 = vld [vmem:[#allocation2 + $0x58] sm:$0xff]
    %v45 = vld [vmem:[#allocation2 + $0x60] sm:$0xff]
    %v46 = vld [vmem:[#allocation2 + $0x68] sm:$0xff]
    %v47 = vld [vmem:[#allocation2 + $0x70] sm:$0xff]
    %v48 = vld [vmem:[#allocation2 + $0x78] sm:$0xff]
    %v49 = vld [vmem:[#allocation2 + $0x80] sm:$0xff]
    %v50 = vld [vmem:[#allocation2 + $0x88] sm:$0xff]
    %v51 = vld [vmem:[#allocation2 + $0x90] sm:$0xff]
    %v52 = vld [vmem:[#allocation2 + $0x98] sm:$0xff]
    %v53 = vld [vmem:[#allocation2 + $0xa0] sm:$0xff]
    %v54 = vld [vmem:[#allocation2 + $0xa8] sm:$0xff]
    %v55 = vld [vmem:[#allocation2 + $0xb0] sm:$0xff]
    %v56 = vld [vmem:[#allocation2 + $0xb8] sm:$0xff]
    %v57 = vld [vmem:[#allocation2 + $0xc0] sm:$0xff]
    %v58 = vld [vmem:[#allocation2 + $0xc8] sm:$0xff]
    %v59 = vld [vmem:[#allocation2 + $0xd0] sm:$0xff]
    %v60 = vld [vmem:[#allocation2 + $0xd8] sm:$0xff]
    %v61 = vld [vmem:[#allocation2 + $0xe0] sm:$0xff]
    %v62 = vld [vmem:[#allocation2 + $0xe8] sm:$0xff]
    %v63 = vld [vmem:[#allocation2 + $0xf0] sm:$0xff]
    %v64 = vld [vmem:[#allocation2 + $0xf8] sm:$0xff]
    %v65 = vld [vmem:[%s2] sm:$0xff]
    %v67 = vperm.slane %v65, 0
    %v68 = vperm.slane %v65, 1
    %v69 = vperm.slane %v65, 2
    %v70 = vperm.slane %v65, 3
    %v71 = vperm.slane %v65, 4
    %v72 = vperm.slane %v65, 5
    %v73 = vperm.slane %v65, 6
    %v74 = vperm.slane %v65, 7
    %v115 = vunpack.c.l.b16 %v33
    %v116 = vunpack.c.h.b16 %v33
    %v117 = vunpack.c.l.b16 %v34
    %v118 = vunpack.c.h.b16 %v34
    %v119 = vunpack.c.l.b16 %v35
    %v120 = vunpack.c.h.b16 %v35
    %v121 = vunpack.c.l.b16 %v36
    %v122 = vunpack.c.h.b16 %v36
    %v123 = vunpack.c.l.b16 %v37
    %v124 = vunpack.c.h.b16 %v37
    %v125 = vunpack.c.l.b16 %v38
    %v126 = vunpack.c.h.b16 %v38
    %v127 = vunpack.c.l.b16 %v39
    %v128 = vunpack.c.h.b16 %v39
    %v129 = vunpack.c.l.b16 %v40
    %v130 = vunpack.c.h.b16 %v40
    %v131 = vunpack.c.l.b16 %v41
    %v132 = vunpack.c.h.b16 %v41
    %v133 = vunpack.c.l.b16 %v42
    %v134 = vunpack.c.h.b16 %v42
    %v135 = vunpack.c.l.b16 %v43
    %v136 = vunpack.c.h.b16 %v43
    %v137 = vunpack.c.l.b16 %v44
    %v138 = vunpack.c.h.b16 %v44
    %v139 = vunpack.c.l.b16 %v45
    %v140 = vunpack.c.h.b16 %v45
    %v141 = vunpack.c.l.b16 %v46
    %v142 = vunpack.c.h.b16 %v46
    %v143 = vunpack.c.l.b16 %v47
    %v144 = vunpack.c.h.b16 %v47
    %v145 = vunpack.c.l.b16 %v48
    %v146 = vunpack.c.h.b16 %v48
    %v147 = vunpack.c.l.b16 %v49
    %v148 = vunpack.c.h.b16 %v49
    %v149 = vunpack.c.l.b16 %v50
    %v150 = vunpack.c.h.b16 %v50
    %v151 = vunpack.c.l.b16 %v51
    %v152 = vunpack.c.h.b16 %v51
    %v153 = vunpack.c.l.b16 %v52
    %v154 = vunpack.c.h.b16 %v52
    %v155 = vunpack.c.l.b16 %v53
    %v156 = vunpack.c.h.b16 %v53
    %v157 = vunpack.c.l.b16 %v54
    %v158 = vunpack.c.h.b16 %v54
    %v159 = vunpack.c.l.b16 %v55
    %v160 = vunpack.c.h.b16 %v55
    %v161 = vunpack.c.l.b16 %v56
    %v162 = vunpack.c.h.b16 %v56
    %v163 = vunpack.c.l.b16 %v57
    %v164 = vunpack.c.h.b16 %v57
    %v165 = vunpack.c.l.b16 %v58
    %v166 = vunpack.c.h.b16 %v58
    %v167 = vunpack.c.l.b16 %v59
    %v168 = vunpack.c.h.b16 %v59
    %v169 = vunpack.c.l.b16 %v60
    %v170 = vunpack.c.h.b16 %v60
    %v171 = vunpack.c.l.b16 %v61
    %v172 = vunpack.c.h.b16 %v61
    %v173 = vunpack.c.l.b16 %v62
    %v174 = vunpack.c.h.b16 %v62
    %v175 = vunpack.c.l.b16 %v63
    %v176 = vunpack.c.h.b16 %v63
    %v177 = vunpack.c.l.b16 %v64
    %v178 = vunpack.c.h.b16 %v64
    %v179 = vpack.c.b16 %v123, %v115
    %v180 = vpack.c.b16 %v124, %v116
    %v181 = vpack.c.b16 %v125, %v117
    %v182 = vpack.c.b16 %v126, %v118
    %v183 = vpack.c.b16 %v127, %v119
    %v184 = vpack.c.b16 %v128, %v120
    %v185 = vpack.c.b16 %v129, %v121
    %v186 = vpack.c.b16 %v130, %v122
    %v187 = vpack.c.b16 %v139, %v131
    %v188 = vpack.c.b16 %v140, %v132
    %v189 = vpack.c.b16 %v141, %v133
    %v190 = vpack.c.b16 %v142, %v134
    %v191 = vpack.c.b16 %v143, %v135
    %v192 = vpack.c.b16 %v144, %v136
    %v193 = vpack.c.b16 %v145, %v137
    %v194 = vpack.c.b16 %v146, %v138
    %v195 = vpack.c.b16 %v155, %v147
    %v196 = vpack.c.b16 %v156, %v148
    %v197 = vpack.c.b16 %v157, %v149
    %v198 = vpack.c.b16 %v158, %v150
    %v199 = vpack.c.b16 %v159, %v151
    %v200 = vpack.c.b16 %v160, %v152
    %v201 = vpack.c.b16 %v161, %v153
    %v202 = vpack.c.b16 %v162, %v154
    %v203 = vpack.c.b16 %v171, %v163
    %v204 = vpack.c.b16 %v172, %v164
    %v205 = vpack.c.b16 %v173, %v165
    %v206 = vpack.c.b16 %v174, %v166
    %v207 = vpack.c.b16 %v175, %v167
    %v208 = vpack.c.b16 %v176, %v168
    %v209 = vpack.c.b16 %v177, %v169
    %v210 = vpack.c.b16 %v178, %v170
    %vm243 = vcmask 523264
    %v245 = vsel %vm243, %v32, 0
    %247 = vmatpush.bf16.msra.mxu0 0
    %248 = vmatpush.bf16.msra.mxu0 0
    %249 = vmatpush.bf16.msra.mxu0 0
    %250 = vmatpush.bf16.msra.mxu0 0
    %251 = vmatpush.bf16.msra.mxu0 %v203
    %252 = vmatpush.bf16.msra.mxu0 %v195
    %253 = vmatpush.bf16.msra.mxu0 %v187
    %254 = vmatpush.bf16.msra.mxu0 %v179
    %255 = vmatmul.bf16.gmra.mxu0 %v245
    %v256 = vpop.f32.mrf.mxu0
    %v257 = vadd.f32 %v67, %v256
    %v258 = vpop.f32.mrf.mxu0
    %259 = vdwg.mxu0
    %260 = vmatpush.bf16.msra.mxu0 0
    %261 = vmatpush.bf16.msra.mxu0 0
    %262 = vmatpush.bf16.msra.mxu0 0
    %263 = vmatpush.bf16.msra.mxu0 0
    %264 = vmatpush.bf16.msra.mxu0 %v204
    %265 = vmatpush.bf16.msra.mxu0 %v196
    %266 = vmatpush.bf16.msra.mxu0 %v188
    %267 = vmatpush.bf16.msra.mxu0 %v180
    %268 = vmatmul.bf16.gmra.mxu0 %v245
    %v269 = vpop.f32.mrf.mxu0
    %v270 = vadd.f32 %v68, %v269
    %v271 = vpop.f32.mrf.mxu0
    %272 = vdwg.mxu0
    %273 = vmatpush.bf16.msra.mxu0 0
    %274 = vmatpush.bf16.msra.mxu0 0
    %275 = vmatpush.bf16.msra.mxu0 0
    %276 = vmatpush.bf16.msra.mxu0 0
    %277 = vmatpush.bf16.msra.mxu0 %v205
    %278 = vmatpush.bf16.msra.mxu0 %v197
    %279 = vmatpush.bf16.msra.mxu0 %v189
    %280 = vmatpush.bf16.msra.mxu0 %v181
    %281 = vmatmul.bf16.gmra.mxu0 %v245
    %v282 = vpop.f32.mrf.mxu0
    %v283 = vadd.f32 %v69, %v282
    %v284 = vpop.f32.mrf.mxu0
    %285 = vdwg.mxu0
    %286 = vmatpush.bf16.msra.mxu0 0
    %287 = vmatpush.bf16.msra.mxu0 0
    %288 = vmatpush.bf16.msra.mxu0 0
    %289 = vmatpush.bf16.msra.mxu0 0
    %290 = vmatpush.bf16.msra.mxu0 %v206
    %291 = vmatpush.bf16.msra.mxu0 %v198
    %292 = vmatpush.bf16.msra.mxu0 %v190
    %293 = vmatpush.bf16.msra.mxu0 %v182
    %294 = vmatmul.bf16.gmra.mxu0 %v245
    %v295 = vpop.f32.mrf.mxu0
    %v296 = vadd.f32 %v70, %v295
    %v297 = vpop.f32.mrf.mxu0
    %298 = vdwg.mxu0
    %299 = vmatpush.bf16.msra.mxu0 0
    %300 = vmatpush.bf16.msra.mxu0 0
    %301 = vmatpush.bf16.msra.mxu0 0
    %302 = vmatpush.bf16.msra.mxu0 0
    %303 = vmatpush.bf16.msra.mxu0 %v207
    %304 = vmatpush.bf16.msra.mxu0 %v199
    %305 = vmatpush.bf16.msra.mxu0 %v191
    %306 = vmatpush.bf16.msra.mxu0 %v183
    %307 = vmatmul.bf16.gmra.mxu0 %v245
    %v308 = vpop.f32.mrf.mxu0
    %v309 = vadd.f32 %v71, %v308
    %v310 = vpop.f32.mrf.mxu0
    %311 = vdwg.mxu0
    %312 = vmatpush.bf16.msra.mxu0 0
    %313 = vmatpush.bf16.msra.mxu0 0
    %314 = vmatpush.bf16.msra.mxu0 0
    %315 = vmatpush.bf16.msra.mxu0 0
    %316 = vmatpush.bf16.msra.mxu0 %v208
    %317 = vmatpush.bf16.msra.mxu0 %v200
    %318 = vmatpush.bf16.msra.mxu0 %v192
    %319 = vmatpush.bf16.msra.mxu0 %v184
    %320 = vmatmul.bf16.gmra.mxu0 %v245
    %v321 = vpop.f32.mrf.mxu0
    %v322 = vadd.f32 %v72, %v321
    %v323 = vpop.f32.mrf.mxu0
    %324 = vdwg.mxu0
    %325 = vmatpush.bf16.msra.mxu0 0
    %326 = vmatpush.bf16.msra.mxu0 0
    %327 = vmatpush.bf16.msra.mxu0 0
    %328 = vmatpush.bf16.msra.mxu0 0
    %329 = vmatpush.bf16.msra.mxu0 %v209
    %330 = vmatpush.bf16.msra.mxu0 %v201
    %331 = vmatpush.bf16.msra.mxu0 %v193
    %332 = vmatpush.bf16.msra.mxu0 %v185
    %333 = vmatmul.bf16.gmra.mxu0 %v245
    %v334 = vpop.f32.mrf.mxu0
    %v335 = vadd.f32 %v73, %v334
    %v336 = vpop.f32.mrf.mxu0
    %337 = vdwg.mxu0
    %338 = vmatpush.bf16.msra.mxu0 0
    %339 = vmatpush.bf16.msra.mxu0 0
    %340 = vmatpush.bf16.msra.mxu0 0
    %341 = vmatpush.bf16.msra.mxu0 0
    %342 = vmatpush.bf16.msra.mxu0 %v210
    %343 = vmatpush.bf16.msra.mxu0 %v202
    %344 = vmatpush.bf16.msra.mxu0 %v194
    %345 = vmatpush.bf16.msra.mxu0 %v186
    %346 = vmatmul.bf16.gmra.mxu0 %v245
    %v347 = vpop.f32.mrf.mxu0
    %v348 = vadd.f32 %v74, %v347
    %v349 = vpop.f32.mrf.mxu0
    %350 = vdwg.mxu0
    %v351 = vpack.c.bf16 %v270, %v257
    %v352 = vpack.c.bf16 %v296, %v283
    %v353 = vpack.c.bf16 %v322, %v309
    %v354 = vpack.c.bf16 %v348, %v335
    %355 = vst [vmem:[%s3] sm:$0xff] %v351
    %356 = vst [vmem:[%s3 + $0x8] sm:$0xff] %v352
    %357 = vst [vmem:[%s3 + $0x10] sm:$0xff] %v353
    %358 = vst [vmem:[%s3 + $0x18] sm:$0xff] %v354
    // Predicated region
    $region18: #{fashion_evaluator_forward.2} parent=1 // pred_check
      _
    $region19: #{fashion_evaluator_forward.2} parent=1 // pred_check_branch
      %360 = sbr.rel (0) target = $region21
    $region20: #{fashion_evaluator_forward.2} parent=1 // pred_region
      _
    $region21: #{fashion_evaluator_forward.2} parent=1 // pred_fallthru
      _
    // Predicated region
    $region22: #{fashion_evaluator_forward.2} parent=1 // pred_check
      _
    $region23: #{fashion_evaluator_forward.2} parent=1 // pred_check_branch
      %362 = sbr.rel (0) target = $region25
    $region24: #{fashion_evaluator_forward.2} parent=1 // pred_region
      _
    $region25: #{fashion_evaluator_forward.2} parent=1 // pred_fallthru
      _
    %363 = vsyncpa [#allocation3], 1

// kernel: fashion_evaluator_forward.3
$region0: #{fashion_evaluator_forward.3}
  #allocation0 [shape = 'u32[]', space=smem, size = 0x4, offset = 0x4, fixed_abs, tag = 'smem constant byte address 0x4 - core index']
  #allocation1 [shape = 'u32[72,128]{1,0:T(1,128)}', space=vmem, size = 0x9000, scoped, tag = 'internal scratch']
  #allocation2 [shape = 'f32[2,256]{1,0:T(2,128)}', space=vmem, size = 0x800, scoped, tag = 'scratch operand']
  #allocation3 [shape = 's32[1]{0}', space=sflag, size = 0x4, scoped, tag = 'scoped memory for fashion_evaluator_forward.3']
  #allocation4 [shape = 'u8[512]{0}', space=smem, size = 0x200, scoped, tag = 'prefetched SMEM operand 0']
  #allocation5 [shape = 'u8[512]{0}', space=smem, size = 0x200, scoped, tag = 'prefetched SMEM operand 1']
  #allocation6 [shape = 'f32[1,1]{1,0:T(1,128)S(1)}', space=vmem, size = 0x200, scoped, tag = 'scoped memory for fashion_evaluator_forward.3']
  %s0 = inlined_call_operand.smem [shape: u32[34], index: -1, kind: input, shape index: {}]
  %s1 = sld [smem:[%s0]]
  %s2 = scalar_lea.smem %s0, 1
  %s3 = sld [smem:[%s2]]
  %s4 = scalar_lea.smem %s0, 2
  %s5 = sld [smem:[%s4]]
  %s6 = scalar_lea.smem %s0, 3
  %s7 = sld [smem:[%s6]]
  %s8 = scalar_lea.smem %s0, 4
  %s9 = sld [smem:[%s8]]
  %s10 = scalar_lea.smem %s0, 5
  %s11 = sld [smem:[%s10]]
  %s12 = scalar_lea.smem %s0, 6
  %s13 = sld [smem:[%s12]]
  %s14 = scalar_lea.smem %s0, 7
  %s15 = sld [smem:[%s14]]
  %s16 = scalar_lea.smem %s0, 8
  %s17 = sld [smem:[%s16]]
  %s18 = scalar_lea.smem %s0, 9
  %s19 = sld [smem:[%s18]]
  %s20 = scalar_lea.smem %s0, 10
  %s21 = sld [smem:[%s20]]
  %s22 = scalar_lea.smem %s0, 11
  %s23 = sld [smem:[%s22]]
  %s24 = scalar_lea.smem %s0, 12
  %s25 = sld [smem:[%s24]]
  %s26 = scalar_lea.smem %s0, 13
  %s27 = sld [smem:[%s26]]
  %s28 = scalar_lea.smem %s0, 14
  %s29 = sld [smem:[%s28]]
  %s30 = scalar_lea.smem %s0, 15
  %s31 = sld [smem:[%s30]]
  %s32 = scalar_lea.smem %s0, 16
  %s33 = sld [smem:[%s32]]
  %s34 = scalar_lea.smem %s0, 17
  %s35 = sld [smem:[%s34]]
  %s36 = scalar_lea.smem %s0, 18
  %s37 = sld [smem:[%s36]]
  %s38 = scalar_lea.smem %s0, 19
  %s39 = sld [smem:[%s38]]
  %s40 = scalar_lea.smem %s0, 20
  %s41 = sld [smem:[%s40]]
  %s42 = scalar_lea.smem %s0, 21
  %s43 = sld [smem:[%s42]]
  %s44 = scalar_lea.smem %s0, 22
  %s45 = sld [smem:[%s44]]
  %s46 = scalar_lea.smem %s0, 23
  %s47 = sld [smem:[%s46]]
  %s48 = scalar_lea.smem %s0, 24
  %s49 = sld [smem:[%s48]]
  %s50 = scalar_lea.smem %s0, 25
  %s51 = sld [smem:[%s50]]
  %s52 = scalar_lea.smem %s0, 26
  %s53 = sld [smem:[%s52]]
  %s54 = scalar_lea.smem %s0, 27
  %s55 = sld [smem:[%s54]]
  %s56 = scalar_lea.smem %s0, 28
  %s57 = sld [smem:[%s56]]
  %s58 = scalar_lea.smem %s0, 29
  %s59 = sld [smem:[%s58]]
  %s60 = scalar_lea.smem %s0, 30
  %s61 = sld [smem:[%s60]]
  %s62 = scalar_lea.smem %s0, 31
  %s63 = sld [smem:[%s62]]
  %s64 = scalar_lea.smem %s0, 32
  %s65 = sld [smem:[%s64]]
  %s66 = scalar_lea.smem %s0, 33
  %s67 = sld [smem:[%s66]]
  %s68 = sld [smem:[#allocation0]]
  $region189: #{fashion_evaluator_forward.3} parent=0
    _
  %s70 = ssub.s32 1, %s68
  %s71 = scalar_select 0, %s70, %s68
  %s73 = sshll.u32 %s1, 4
  %s74 = int_to_ptr.vmem [resolvable:$true] %s73
  %76 = dma.vmem_to_smem %s74, 16, [#allocation4], [#allocation3]
  %s78 = sshll.u32 %s3, 4
  %s79 = int_to_ptr.vmem [resolvable:$true] %s78
  %81 = dma.vmem_to_smem %s79, 16, [#allocation5], [#allocation3]
  %v82 = vstv %s65
  %83 = vst [vmem:[#allocation6] sm:$0x1] %v82
  %85 = dma.done [#allocation3], 32
  %86 = sfence
  $region1: #{fashion_evaluator_forward.3} parent=0
    #allocation7 [shape = 'u8[524288]{0}', space=vmem, size = 0x80000, scoped, tag = 'input window, operand 7, single buffered']
    #allocation8 [shape = 's32[2]{0}', space=sflag, size = 0x8, scoped, tag = 'scoped memory for fashion_evaluator_forward.3']
    #allocation9 [shape = 'u8[262144]{0}', space=vmem, size = 0x40000, scoped, tag = 'input window, operand 11, single buffered']
    #allocation10 [shape = 's32[1]{0}', space=sflag, size = 0x4, scoped, tag = 'scoped memory for fashion_evaluator_forward.3']
    #allocation11 [shape = 'u8[131072]{0}', space=vmem, size = 0x20000, scoped, tag = 'input window, operand 15, single buffered']
    #allocation12 [shape = 'u8[131072]{0}', space=vmem, size = 0x20000, scoped, tag = 'input window, operand 19, single buffered']
    #allocation13 [shape = 's32[1]{0}', space=sflag, size = 0x4, scoped, tag = 'scoped memory for fashion_evaluator_forward.3']
    #allocation14 [shape = 'u8[65536]{0}', space=vmem, size = 0x10000, scoped, tag = 'input window, operand 23, single buffered']
    #allocation15 [shape = 'u8[65536]{0}', space=vmem, size = 0x10000, scoped, tag = 'input window, operand 27, single buffered']
    #allocation16 [shape = 's32[1]{0}', space=sflag, size = 0x4, scoped, tag = 'scoped memory for fashion_evaluator_forward.3']
    %87 = vsyncpa [#allocation8], 0
    %88 = vsyncpa [#allocation10], 0
    %89 = vsyncpa [#allocation13], 0
    %90 = vsyncpa [#allocation16], 0
    loop: start=0, step=1, limit=8
    $region2: #{fashion_evaluator_forward.3} parent=1 // loop_pre_header
      _
    $region3: #{fashion_evaluator_forward.3} parent=1 // loop_header
      %s92 = sphi 0, %s96
      %p93 = scmp.ge.s32.totalorder %s92, 8
      %s99 = sphi 0, %s111
      %s100 = sphi 0, %s107
      %s101 = sphi 0, %s99
      %s102 = sphi 0, %s100
      %s103 = sphi 0, %s101
      %s104 = sphi 0, %s102
      %s118 = sphi 0, %s120
      %s121 = sphi 0, %s118
      %s122 = sphi 0, %s121
      %s138 = sphi 0, %s122
      %s148 = sphi 0, %s150
      %s151 = sphi 0, %s148
      %s152 = sphi 0, %s151
      %s168 = sphi 0, %s152
      %s172 = sphi 0, %s172
      %s174 = sphi 0, %s172
      %s175 = sphi 0, %s174
      %s189 = sphi 0, %s175
      %s193 = sphi 0, %s193
      %s195 = sphi 0, %s193
      %s196 = sphi 0, %s195
      %s210 = sphi 0, %s196
      %s214 = sphi 0, %s214
      %s216 = sphi 0, %s214
      %s217 = sphi 0, %s216
      %s231 = sphi 0, %s217
      %s235 = sphi 0, %s235
      %s237 = sphi 0, %s235
      %s238 = sphi 0, %s237
      %s252 = sphi 0, %s238
      %s256 = sphi 0, %s256
      %s258 = sphi 0, %s256
      %s259 = sphi 0, %s258
      %s273 = sphi 0, %s259
      %s277 = sphi 0, %s277
      %s279 = sphi 0, %s277
      %s280 = sphi 0, %s279
      %s294 = sphi 0, %s280
      %s298 = sphi 0, %s298
      %s300 = sphi 0, %s298
      %s301 = sphi 0, %s300
      %s315 = sphi 0, %s301
      %s319 = sphi 0, %s319
      %s321 = sphi 0, %s319
      %s322 = sphi 0, %s321
      %s336 = sphi 0, %s322
      %s340 = sphi 0, %s340
      %s342 = sphi 0, %s340
      %s343 = sphi 0, %s342
      %s357 = sphi 0, %s343
      %s361 = sphi 0, %s361
      %s363 = sphi 0, %s361
      %s364 = sphi 0, %s363
      %s378 = sphi 0, %s364
      %s382 = sphi 0, %s382
      %s384 = sphi 0, %s382
      %s385 = sphi 0, %s384
      %s399 = sphi 0, %s385
      %s403 = sphi 0, %s403
      %s405 = sphi 0, %s403
      %s406 = sphi 0, %s405
      %s420 = sphi 0, %s406
      %s424 = sphi 0, %s424
      %s426 = sphi 0, %s424
      %s427 = sphi 0, %s426
      %s441 = sphi 0, %s427
      %s445 = sphi 0, %s445
      %s447 = sphi 0, %s445
      %s448 = sphi 0, %s447
      %s462 = sphi 0, %s448
      %s466 = sphi 0, %s466
      %s468 = sphi 0, %s466
      %s469 = sphi 0, %s468
      %s483 = sphi 0, %s469
      %s487 = sphi 0, %s487
      %s489 = sphi 0, %s487
      %s490 = sphi 0, %s489
      %s504 = sphi 0, %s490
      %s508 = sphi 0, %s508
      %s510 = sphi 0, %s508
      %s511 = sphi 0, %s510
      %s525 = sphi 0, %s511
      %s529 = sphi 0, %s529
      %s531 = sphi 0, %s529
      %s532 = sphi 0, %s531
      %s546 = sphi 0, %s532
      %s550 = sphi 0, %s550
      %s552 = sphi 0, %s550
      %s553 = sphi 0, %s552
      %s567 = sphi 0, %s553
      %s571 = sphi 0, %s571
      %s573 = sphi 0, %s571
      %s574 = sphi 0, %s573
      %s588 = sphi 0, %s574
      %s592 = sphi 0, %s592
      %s594 = sphi 0, %s592
      %s595 = sphi 0, %s594
      %s609 = sphi 0, %s595
      %s613 = sphi 0, %s613
      %s615 = sphi 0, %s613
      %s616 = sphi 0, %s615
      %s630 = sphi 0, %s616
      %s634 = sphi 0, %s634
      %s636 = sphi 0, %s634
      %s637 = sphi 0, %s636
      %s651 = sphi 0, %s637
      %s655 = sphi 0, %s655
      %s657 = sphi 0, %s655
      %s658 = sphi 0, %s657
      %s672 = sphi 0, %s658
      %s676 = sphi 0, %s676
      %s678 = sphi 0, %s676
      %s679 = sphi 0, %s678
      %s693 = sphi 0, %s679
      %s697 = sphi 0, %s697
      %s699 = sphi 0, %s697
      %s700 = sphi 0, %s699
      %s714 = sphi 0, %s700
      %s718 = sphi 0, %s718
      %s720 = sphi 0, %s718
      %s721 = sphi 0, %s720
      %s735 = sphi 0, %s721
      %s739 = sphi 0, %s739
      %s741 = sphi 0, %s739
      %s742 = sphi 0, %s741
      %s756 = sphi 0, %s742
      %s760 = sphi 0, %s760
      %s762 = sphi 0, %s760
      %s763 = sphi 0, %s762
      %s777 = sphi 0, %s763
      %s783 = sphi 0, %s785
      %s786 = sphi 0, %s783
      %s787 = sphi 0, %s786
      %s803 = sphi 0, %s787
    $region4: #{fashion_evaluator_forward.3} parent=1 // loop_header_branch
      %95 = sbr.rel (%p93) target = $region8
    $region5: #{fashion_evaluator_forward.3} parent=1 // loop_body
      %s97 = ssub.s32 %s92, 1
      %s98 = ssub.s32 %s92, 2
      %s105 = sadd.s32 1, %s100
      %p106 = scmp.ge.s32.totalorder %s105, 6
      %s107 = scalar_select %p106, 0, %s105
      %s108 = sadd.s32 1, %s99
      %s109 = scalar_select %p106, %s108, %s99
      %p110 = scmp.ge.s32.totalorder %s109, 1
      %s111 = scalar_select %p110, 0, %s109
      %s112 = sld [smem:[#allocation4 + %s100]]
      %s113 = sld [smem:[#allocation4 + %s107]]
      %s114 = ssub.s32 %s112, %s113
      %s115 = ssub.s32 %s99, %s111
      %s116 = sor.u32 %s114, %s115
      %p117 = scmp.eq.s32.totalorder %s116, 0
      %s119 = sadd.s32 %s118, 1
      %s120 = scalar_select %p117, %s118, %s119
      %p123 = pneg %p117
      %p124 = scmp.eq.s32.totalorder %s92, 5
      %p125 = por %p123, %p124
      %p126 = scmp.ne.s32.totalorder %s118, %s121
      %p127 = scmp.eq.s32.totalorder %s92, 0
      %p128 = por %p126, %p127
      %p129 = scmp.ne.s32.totalorder %s118, %s121
      %p130 = scmp.eq.s32.totalorder %s97, 5
      %p131 = por %p129, %p130
      %p132 = scmp.ne.s32.totalorder %s121, %s122
      %p133 = scmp.eq.s32.totalorder %s97, 0
      %p134 = por %p132, %p133
      %p135 = scmp.ne.s32.totalorder %s121, %s122
      %p136 = scmp.eq.s32.totalorder %s98, 5
      %p137 = por %p135, %p136
      %p139 = scmp.ne.s32.totalorder %s122, %s138
      %p140 = scmp.eq.s32.totalorder %s98, 0
      %p141 = por %p139, %p140
      %s142 = sld [smem:[#allocation5 + %s100]]
      %s143 = sld [smem:[#allocation5 + %s107]]
      %s144 = ssub.s32 %s142, %s143
      %s145 = ssub.s32 %s99, %s111
      %s146 = sor.u32 %s144, %s145
      %p147 = scmp.eq.s32.totalorder %s146, 0
      %s149 = sadd.s32 %s148, 1
      %s150 = scalar_select %p147, %s148, %s149
      %p153 = pneg %p147
      %p154 = scmp.eq.s32.totalorder %s92, 5
      %p155 = por %p153, %p154
      %p156 = scmp.ne.s32.totalorder %s148, %s151
      %p157 = scmp.eq.s32.totalorder %s92, 0
      %p158 = por %p156, %p157
      %p159 = scmp.ne.s32.totalorder %s148, %s151
      %p160 = scmp.eq.s32.totalorder %s97, 5
      %p161 = por %p159, %p160
      %p162 = scmp.ne.s32.totalorder %s151, %s152
      %p163 = scmp.eq.s32.totalorder %s97, 0
      %p164 = por %p162, %p163
      %p165 = scmp.ne.s32.totalorder %s151, %s152
      %p166 = scmp.eq.s32.totalorder %s98, 5
      %p167 = por %p165, %p166
      %p169 = scmp.ne.s32.totalorder %s152, %s168
      %p170 = scmp.eq.s32.totalorder %s98, 0
      %p171 = por %p169, %p170
      %s173 = sadd.s32 %s172, 1
      %p176 = scmp.eq.s32.totalorder %s92, 5
      %p177 = scmp.ne.s32.totalorder %s172, %s174
      %p178 = scmp.eq.s32.totalorder %s92, 0
      %p179 = por %p177, %p178
      %p180 = scmp.ne.s32.totalorder %s172, %s174
      %p181 = scmp.eq.s32.totalorder %s97, 5
      %p182 = por %p180, %p181
      %p183 = scmp.ne.s32.totalorder %s174, %s175
      %p184 = scmp.eq.s32.totalorder %s97, 0
      %p185 = por %p183, %p184
      %p186 = scmp.ne.s32.totalorder %s174, %s175
      %p187 = scmp.eq.s32.totalorder %s98, 5
      %p188 = por %p186, %p187
      %p190 = scmp.ne.s32.totalorder %s175, %s189
      %p191 = scmp.eq.s32.totalorder %s98, 0
      %p192 = por %p190, %p191
      %s194 = sadd.s32 %s193, 1
      %p197 = scmp.eq.s32.totalorder %s92, 5
      %p198 = scmp.ne.s32.totalorder %s193, %s195
      %p199 = scmp.eq.s32.totalorder %s92, 0
      %p200 = por %p198, %p199
      %p201 = scmp.ne.s32.totalorder %s193, %s195
      %p202 = scmp.eq.s32.totalorder %s97, 5
      %p203 = por %p201, %p202
      %p204 = scmp.ne.s32.totalorder %s195, %s196
      %p205 = scmp.eq.s32.totalorder %s97, 0
      %p206 = por %p204, %p205
      %p207 = scmp.ne.s32.totalorder %s195, %s196
      %p208 = scmp.eq.s32.totalorder %s98, 5
      %p209 = por %p207, %p208
      %p211 = scmp.ne.s32.totalorder %s196, %s210
      %p212 = scmp.eq.s32.totalorder %s98, 0
      %p213 = por %p211, %p212
      %s215 = sadd.s32 %s214, 1
      %p218 = scmp.eq.s32.totalorder %s92, 5
      %p219 = scmp.ne.s32.totalorder %s214, %s216
      %p220 = scmp.eq.s32.totalorder %s92, 0
      %p221 = por %p219, %p220
      %p222 = scmp.ne.s32.totalorder %s214, %s216
      %p223 = scmp.eq.s32.totalorder %s97, 5
      %p224 = por %p222, %p223
      %p225 = scmp.ne.s32.totalorder %s216, %s217
      %p226 = scmp.eq.s32.totalorder %s97, 0
      %p227 = por %p225, %p226
      %p228 = scmp.ne.s32.totalorder %s216, %s217
      %p229 = scmp.eq.s32.totalorder %s98, 5
      %p230 = por %p228, %p229
      %p232 = scmp.ne.s32.totalorder %s217, %s231
      %p233 = scmp.eq.s32.totalorder %s98, 0
      %p234 = por %p232, %p233
      %s236 = sadd.s32 %s235, 1
      %p239 = scmp.eq.s32.totalorder %s92, 5
      %p240 = scmp.ne.s32.totalorder %s235, %s237
      %p241 = scmp.eq.s32.totalorder %s92, 0
      %p242 = por %p240, %p241
      %p243 = scmp.ne.s32.totalorder %s235, %s237
      %p244 = scmp.eq.s32.totalorder %s97, 5
      %p245 = por %p243, %p244
      %p246 = scmp.ne.s32.totalorder %s237, %s238
      %p247 = scmp.eq.s32.totalorder %s97, 0
      %p248 = por %p246, %p247
      %p249 = scmp.ne.s32.totalorder %s237, %s238
      %p250 = scmp.eq.s32.totalorder %s98, 5
      %p251 = por %p249, %p250
      %p253 = scmp.ne.s32.totalorder %s238, %s252
      %p254 = scmp.eq.s32.totalorder %s98, 0
      %p255 = por %p253, %p254
      %s257 = sadd.s32 %s256, 1
      %p260 = scmp.eq.s32.totalorder %s92, 5
      %p261 = scmp.ne.s32.totalorder %s256, %s258
      %p262 = scmp.eq.s32.totalorder %s92, 0
      %p263 = por %p261, %p262
      %p264 = scmp.ne.s32.totalorder %s256, %s258
      %p265 = scmp.eq.s32.totalorder %s97, 5
      %p266 = por %p264, %p265
      %p267 = scmp.ne.s32.totalorder %s258, %s259
      %p268 = scmp.eq.s32.totalorder %s97, 0
      %p269 = por %p267, %p268
      %p270 = scmp.ne.s32.totalorder %s258, %s259
      %p271 = scmp.eq.s32.totalorder %s98, 5
      %p272 = por %p270, %p271
      %p274 = scmp.ne.s32.totalorder %s259, %s273
      %p275 = scmp.eq.s32.totalorder %s98, 0
      %p276 = por %p274, %p275
      %s278 = sadd.s32 %s277, 1
      %p281 = scmp.eq.s32.totalorder %s92, 5
      %p282 = scmp.ne.s32.totalorder %s277, %s279
      %p283 = scmp.eq.s32.totalorder %s92, 0
      %p284 = por %p282, %p283
      %p285 = scmp.ne.s32.totalorder %s277, %s279
      %p286 = scmp.eq.s32.totalorder %s97, 5
      %p287 = por %p285, %p286
      %p288 = scmp.ne.s32.totalorder %s279, %s280
      %p289 = scmp.eq.s32.totalorder %s97, 0
      %p290 = por %p288, %p289
      %p291 = scmp.ne.s32.totalorder %s279, %s280
      %p292 = scmp.eq.s32.totalorder %s98, 5
      %p293 = por %p291, %p292
      %p295 = scmp.ne.s32.totalorder %s280, %s294
      %p296 = scmp.eq.s32.totalorder %s98, 0
      %p297 = por %p295, %p296
      %s299 = sadd.s32 %s298, 1
      %p302 = scmp.eq.s32.totalorder %s92, 5
      %p303 = scmp.ne.s32.totalorder %s298, %s300
      %p304 = scmp.eq.s32.totalorder %s92, 0
      %p305 = por %p303, %p304
      %p306 = scmp.ne.s32.totalorder %s298, %s300
      %p307 = scmp.eq.s32.totalorder %s97, 5
      %p308 = por %p306, %p307
      %p309 = scmp.ne.s32.totalorder %s300, %s301
      %p310 = scmp.eq.s32.totalorder %s97, 0
      %p311 = por %p309, %p310
      %p312 = scmp.ne.s32.totalorder %s300, %s301
      %p313 = scmp.eq.s32.totalorder %s98, 5
      %p314 = por %p312, %p313
      %p316 = scmp.ne.s32.totalorder %s301, %s315
      %p317 = scmp.eq.s32.totalorder %s98, 0
      %p318 = por %p316, %p317
      %s320 = sadd.s32 %s319, 1
      %p323 = scmp.eq.s32.totalorder %s92, 5
      %p324 = scmp.ne.s32.totalorder %s319, %s321
      %p325 = scmp.eq.s32.totalorder %s92, 0
      %p326 = por %p324, %p325
      %p327 = scmp.ne.s32.totalorder %s319, %s321
      %p328 = scmp.eq.s32.totalorder %s97, 5
      %p329 = por %p327, %p328
      %p330 = scmp.ne.s32.totalorder %s321, %s322
      %p331 = scmp.eq.s32.totalorder %s97, 0
      %p332 = por %p330, %p331
      %p333 = scmp.ne.s32.totalorder %s321, %s322
      %p334 = scmp.eq.s32.totalorder %s98, 5
      %p335 = por %p333, %p334
      %p337 = scmp.ne.s32.totalorder %s322, %s336
      %p338 = scmp.eq.s32.totalorder %s98, 0
      %p339 = por %p337, %p338
      %s341 = sadd.s32 %s340, 1
      %p344 = scmp.eq.s32.totalorder %s92, 5
      %p345 = scmp.ne.s32.totalorder %s340, %s342
      %p346 = scmp.eq.s32.totalorder %s92, 0
      %p347 = por %p345, %p346
      %p348 = scmp.ne.s32.totalorder %s340, %s342
      %p349 = scmp.eq.s32.totalorder %s97, 5
      %p350 = por %p348, %p349
      %p351 = scmp.ne.s32.totalorder %s342, %s343
      %p352 = scmp.eq.s32.totalorder %s97, 0
      %p353 = por %p351, %p352
      %p354 = scmp.ne.s32.totalorder %s342, %s343
      %p355 = scmp.eq.s32.totalorder %s98, 5
      %p356 = por %p354, %p355
      %p358 = scmp.ne.s32.totalorder %s343, %s357
      %p359 = scmp.eq.s32.totalorder %s98, 0
      %p360 = por %p358, %p359
      %s362 = sadd.s32 %s361, 1
      %p365 = scmp.eq.s32.totalorder %s92, 5
      %p366 = scmp.ne.s32.totalorder %s361, %s363
      %p367 = scmp.eq.s32.totalorder %s92, 0
      %p368 = por %p366, %p367
      %p369 = scmp.ne.s32.totalorder %s361, %s363
      %p370 = scmp.eq.s32.totalorder %s97, 5
      %p371 = por %p369, %p370
      %p372 = scmp.ne.s32.totalorder %s363, %s364
      %p373 = scmp.eq.s32.totalorder %s97, 0
      %p374 = por %p372, %p373
      %p375 = scmp.ne.s32.totalorder %s363, %s364
      %p376 = scmp.eq.s32.totalorder %s98, 5
      %p377 = por %p375, %p376
      %p379 = scmp.ne.s32.totalorder %s364, %s378
      %p380 = scmp.eq.s32.totalorder %s98, 0
      %p381 = por %p379, %p380
      %s383 = sadd.s32 %s382, 1
      %p386 = scmp.eq.s32.totalorder %s92, 5
      %p387 = scmp.ne.s32.totalorder %s382, %s384
      %p388 = scmp.eq.s32.totalorder %s92, 0
      %p389 = por %p387, %p388
      %p390 = scmp.ne.s32.totalorder %s382, %s384
      %p391 = scmp.eq.s32.totalorder %s97, 5
      %p392 = por %p390, %p391
      %p393 = scmp.ne.s32.totalorder %s384, %s385
      %p394 = scmp.eq.s32.totalorder %s97, 0
      %p395 = por %p393, %p394
      %p396 = scmp.ne.s32.totalorder %s384, %s385
      %p397 = scmp.eq.s32.totalorder %s98, 5
      %p398 = por %p396, %p397
      %p400 = scmp.ne.s32.totalorder %s385, %s399
      %p401 = scmp.eq.s32.totalorder %s98, 0
      %p402 = por %p400, %p401
      %s404 = sadd.s32 %s403, 1
      %p407 = scmp.eq.s32.totalorder %s92, 5
      %p408 = scmp.ne.s32.totalorder %s403, %s405
      %p409 = scmp.eq.s32.totalorder %s92, 0
      %p410 = por %p408, %p409
      %p411 = scmp.ne.s32.totalorder %s403, %s405
      %p412 = scmp.eq.s32.totalorder %s97, 5
      %p413 = por %p411, %p412
      %p414 = scmp.ne.s32.totalorder %s405, %s406
      %p415 = scmp.eq.s32.totalorder %s97, 0
      %p416 = por %p414, %p415
      %p417 = scmp.ne.s32.totalorder %s405, %s406
      %p418 = scmp.eq.s32.totalorder %s98, 5
      %p419 = por %p417, %p418
      %p421 = scmp.ne.s32.totalorder %s406, %s420
      %p422 = scmp.eq.s32.totalorder %s98, 0
      %p423 = por %p421, %p422
      %s425 = sadd.s32 %s424, 1
      %p428 = scmp.eq.s32.totalorder %s92, 5
      %p429 = scmp.ne.s32.totalorder %s424, %s426
      %p430 = scmp.eq.s32.totalorder %s92, 0
      %p431 = por %p429, %p430
      %p432 = scmp.ne.s32.totalorder %s424, %s426
      %p433 = scmp.eq.s32.totalorder %s97, 5
      %p434 = por %p432, %p433
      %p435 = scmp.ne.s32.totalorder %s426, %s427
      %p436 = scmp.eq.s32.totalorder %s97, 0
      %p437 = por %p435, %p436
      %p438 = scmp.ne.s32.totalorder %s426, %s427
      %p439 = scmp.eq.s32.totalorder %s98, 5
      %p440 = por %p438, %p439
      %p442 = scmp.ne.s32.totalorder %s427, %s441
      %p443 = scmp.eq.s32.totalorder %s98, 0
      %p444 = por %p442, %p443
      %s446 = sadd.s32 %s445, 1
      %p449 = scmp.eq.s32.totalorder %s92, 5
      %p450 = scmp.ne.s32.totalorder %s445, %s447
      %p451 = scmp.eq.s32.totalorder %s92, 0
      %p452 = por %p450, %p451
      %p453 = scmp.ne.s32.totalorder %s445, %s447
      %p454 = scmp.eq.s32.totalorder %s97, 5
      %p455 = por %p453, %p454
      %p456 = scmp.ne.s32.totalorder %s447, %s448
      %p457 = scmp.eq.s32.totalorder %s97, 0
      %p458 = por %p456, %p457
      %p459 = scmp.ne.s32.totalorder %s447, %s448
      %p460 = scmp.eq.s32.totalorder %s98, 5
      %p461 = por %p459, %p460
      %p463 = scmp.ne.s32.totalorder %s448, %s462
      %p464 = scmp.eq.s32.totalorder %s98, 0
      %p465 = por %p463, %p464
      %s467 = sadd.s32 %s466, 1
      %p470 = scmp.eq.s32.totalorder %s92, 5
      %p471 = scmp.ne.s32.totalorder %s466, %s468
      %p472 = scmp.eq.s32.totalorder %s92, 0
      %p473 = por %p471, %p472
      %p474 = scmp.ne.s32.totalorder %s466, %s468
      %p475 = scmp.eq.s32.totalorder %s97, 5
      %p476 = por %p474, %p475
      %p477 = scmp.ne.s32.totalorder %s468, %s469
      %p478 = scmp.eq.s32.totalorder %s97, 0
      %p479 = por %p477, %p478
      %p480 = scmp.ne.s32.totalorder %s468, %s469
      %p481 = scmp.eq.s32.totalorder %s98, 5
      %p482 = por %p480, %p481
      %p484 = scmp.ne.s32.totalorder %s469, %s483
      %p485 = scmp.eq.s32.totalorder %s98, 0
      %p486 = por %p484, %p485
      %s488 = sadd.s32 %s487, 1
      %p491 = scmp.eq.s32.totalorder %s92, 5
      %p492 = scmp.ne.s32.totalorder %s487, %s489
      %p493 = scmp.eq.s32.totalorder %s92, 0
      %p494 = por %p492, %p493
      %p495 = scmp.ne.s32.totalorder %s487, %s489
      %p496 = scmp.eq.s32.totalorder %s97, 5
      %p497 = por %p495, %p496
      %p498 = scmp.ne.s32.totalorder %s489, %s490
      %p499 = scmp.eq.s32.totalorder %s97, 0
      %p500 = por %p498, %p499
      %p501 = scmp.ne.s32.totalorder %s489, %s490
      %p502 = scmp.eq.s32.totalorder %s98, 5
      %p503 = por %p501, %p502
      %p505 = scmp.ne.s32.totalorder %s490, %s504
      %p506 = scmp.eq.s32.totalorder %s98, 0
      %p507 = por %p505, %p506
      %s509 = sadd.s32 %s508, 1
      %p512 = scmp.eq.s32.totalorder %s92, 5
      %p513 = scmp.ne.s32.totalorder %s508, %s510
      %p514 = scmp.eq.s32.totalorder %s92, 0
      %p515 = por %p513, %p514
      %p516 = scmp.ne.s32.totalorder %s508, %s510
      %p517 = scmp.eq.s32.totalorder %s97, 5
      %p518 = por %p516, %p517
      %p519 = scmp.ne.s32.totalorder %s510, %s511
      %p520 = scmp.eq.s32.totalorder %s97, 0
      %p521 = por %p519, %p520
      %p522 = scmp.ne.s32.totalorder %s510, %s511
      %p523 = scmp.eq.s32.totalorder %s98, 5
      %p524 = por %p522, %p523
      %p526 = scmp.ne.s32.totalorder %s511, %s525
      %p527 = scmp.eq.s32.totalorder %s98, 0
      %p528 = por %p526, %p527
      %s530 = sadd.s32 %s529, 1
      %p533 = scmp.eq.s32.totalorder %s92, 5
      %p534 = scmp.ne.s32.totalorder %s529, %s531
      %p535 = scmp.eq.s32.totalorder %s92, 0
      %p536 = por %p534, %p535
      %p537 = scmp.ne.s32.totalorder %s529, %s531
      %p538 = scmp.eq.s32.totalorder %s97, 5
      %p539 = por %p537, %p538
      %p540 = scmp.ne.s32.totalorder %s531, %s532
      %p541 = scmp.eq.s32.totalorder %s97, 0
      %p542 = por %p540, %p541
      %p543 = scmp.ne.s32.totalorder %s531, %s532
      %p544 = scmp.eq.s32.totalorder %s98, 5
      %p545 = por %p543, %p544
      %p547 = scmp.ne.s32.totalorder %s532, %s546
      %p548 = scmp.eq.s32.totalorder %s98, 0
      %p549 = por %p547, %p548
      %s551 = sadd.s32 %s550, 1
      %p554 = scmp.eq.s32.totalorder %s92, 5
      %p555 = scmp.ne.s32.totalorder %s550, %s552
      %p556 = scmp.eq.s32.totalorder %s92, 0
      %p557 = por %p555, %p556
      %p558 = scmp.ne.s32.totalorder %s550, %s552
      %p559 = scmp.eq.s32.totalorder %s97, 5
      %p560 = por %p558, %p559
      %p561 = scmp.ne.s32.totalorder %s552, %s553
      %p562 = scmp.eq.s32.totalorder %s97, 0
      %p563 = por %p561, %p562
      %p564 = scmp.ne.s32.totalorder %s552, %s553
      %p565 = scmp.eq.s32.totalorder %s98, 5
      %p566 = por %p564, %p565
      %p568 = scmp.ne.s32.totalorder %s553, %s567
      %p569 = scmp.eq.s32.totalorder %s98, 0
      %p570 = por %p568, %p569
      %s572 = sadd.s32 %s571, 1
      %p575 = scmp.eq.s32.totalorder %s92, 5
      %p576 = scmp.ne.s32.totalorder %s571, %s573
      %p577 = scmp.eq.s32.totalorder %s92, 0
      %p578 = por %p576, %p577
      %p579 = scmp.ne.s32.totalorder %s571, %s573
      %p580 = scmp.eq.s32.totalorder %s97, 5
      %p581 = por %p579, %p580
      %p582 = scmp.ne.s32.totalorder %s573, %s574
      %p583 = scmp.eq.s32.totalorder %s97, 0
      %p584 = por %p582, %p583
      %p585 = scmp.ne.s32.totalorder %s573, %s574
      %p586 = scmp.eq.s32.totalorder %s98, 5
      %p587 = por %p585, %p586
      %p589 = scmp.ne.s32.totalorder %s574, %s588
      %p590 = scmp.eq.s32.totalorder %s98, 0
      %p591 = por %p589, %p590
      %s593 = sadd.s32 %s592, 1
      %p596 = scmp.eq.s32.totalorder %s92, 5
      %p597 = scmp.ne.s32.totalorder %s592, %s594
      %p598 = scmp.eq.s32.totalorder %s92, 0
      %p599 = por %p597, %p598
      %p600 = scmp.ne.s32.totalorder %s592, %s594
      %p601 = scmp.eq.s32.totalorder %s97, 5
      %p602 = por %p600, %p601
      %p603 = scmp.ne.s32.totalorder %s594, %s595
      %p604 = scmp.eq.s32.totalorder %s97, 0
      %p605 = por %p603, %p604
      %p606 = scmp.ne.s32.totalorder %s594, %s595
      %p607 = scmp.eq.s32.totalorder %s98, 5
      %p608 = por %p606, %p607
      %p610 = scmp.ne.s32.totalorder %s595, %s609
      %p611 = scmp.eq.s32.totalorder %s98, 0
      %p612 = por %p610, %p611
      %s614 = sadd.s32 %s613, 1
      %p617 = scmp.eq.s32.totalorder %s92, 5
      %p618 = scmp.ne.s32.totalorder %s613, %s615
      %p619 = scmp.eq.s32.totalorder %s92, 0
      %p620 = por %p618, %p619
      %p621 = scmp.ne.s32.totalorder %s613, %s615
      %p622 = scmp.eq.s32.totalorder %s97, 5
      %p623 = por %p621, %p622
      %p624 = scmp.ne.s32.totalorder %s615, %s616
      %p625 = scmp.eq.s32.totalorder %s97, 0
      %p626 = por %p624, %p625
      %p627 = scmp.ne.s32.totalorder %s615, %s616
      %p628 = scmp.eq.s32.totalorder %s98, 5
      %p629 = por %p627, %p628
      %p631 = scmp.ne.s32.totalorder %s616, %s630
      %p632 = scmp.eq.s32.totalorder %s98, 0
      %p633 = por %p631, %p632
      %s635 = sadd.s32 %s634, 1
      %p638 = scmp.eq.s32.totalorder %s92, 5
      %p639 = scmp.ne.s32.totalorder %s634, %s636
      %p640 = scmp.eq.s32.totalorder %s92, 0
      %p641 = por %p639, %p640
      %p642 = scmp.ne.s32.totalorder %s634, %s636
      %p643 = scmp.eq.s32.totalorder %s97, 5
      %p644 = por %p642, %p643
      %p645 = scmp.ne.s32.totalorder %s636, %s637
      %p646 = scmp.eq.s32.totalorder %s97, 0
      %p647 = por %p645, %p646
      %p648 = scmp.ne.s32.totalorder %s636, %s637
      %p649 = scmp.eq.s32.totalorder %s98, 5
      %p650 = por %p648, %p649
      %p652 = scmp.ne.s32.totalorder %s637, %s651
      %p653 = scmp.eq.s32.totalorder %s98, 0
      %p654 = por %p652, %p653
      %s656 = sadd.s32 %s655, 1
      %p659 = scmp.eq.s32.totalorder %s92, 5
      %p660 = scmp.ne.s32.totalorder %s655, %s657
      %p661 = scmp.eq.s32.totalorder %s92, 0
      %p662 = por %p660, %p661
      %p663 = scmp.ne.s32.totalorder %s655, %s657
      %p664 = scmp.eq.s32.totalorder %s97, 5
      %p665 = por %p663, %p664
      %p666 = scmp.ne.s32.totalorder %s657, %s658
      %p667 = scmp.eq.s32.totalorder %s97, 0
      %p668 = por %p666, %p667
      %p669 = scmp.ne.s32.totalorder %s657, %s658
      %p670 = scmp.eq.s32.totalorder %s98, 5
      %p671 = por %p669, %p670
      %p673 = scmp.ne.s32.totalorder %s658, %s672
      %p674 = scmp.eq.s32.totalorder %s98, 0
      %p675 = por %p673, %p674
      %s677 = sadd.s32 %s676, 1
      %p680 = scmp.eq.s32.totalorder %s92, 5
      %p681 = scmp.ne.s32.totalorder %s676, %s678
      %p682 = scmp.eq.s32.totalorder %s92, 0
      %p683 = por %p681, %p682
      %p684 = scmp.ne.s32.totalorder %s676, %s678
      %p685 = scmp.eq.s32.totalorder %s97, 5
      %p686 = por %p684, %p685
      %p687 = scmp.ne.s32.totalorder %s678, %s679
      %p688 = scmp.eq.s32.totalorder %s97, 0
      %p689 = por %p687, %p688
      %p690 = scmp.ne.s32.totalorder %s678, %s679
      %p691 = scmp.eq.s32.totalorder %s98, 5
      %p692 = por %p690, %p691
      %p694 = scmp.ne.s32.totalorder %s679, %s693
      %p695 = scmp.eq.s32.totalorder %s98, 0
      %p696 = por %p694, %p695
      %s698 = sadd.s32 %s697, 1
      %p701 = scmp.eq.s32.totalorder %s92, 5
      %p702 = scmp.ne.s32.totalorder %s697, %s699
      %p703 = scmp.eq.s32.totalorder %s92, 0
      %p704 = por %p702, %p703
      %p705 = scmp.ne.s32.totalorder %s697, %s699
      %p706 = scmp.eq.s32.totalorder %s97, 5
      %p707 = por %p705, %p706
      %p708 = scmp.ne.s32.totalorder %s699, %s700
      %p709 = scmp.eq.s32.totalorder %s97, 0
      %p710 = por %p708, %p709
      %p711 = scmp.ne.s32.totalorder %s699, %s700
      %p712 = scmp.eq.s32.totalorder %s98, 5
      %p713 = por %p711, %p712
      %p715 = scmp.ne.s32.totalorder %s700, %s714
      %p716 = scmp.eq.s32.totalorder %s98, 0
      %p717 = por %p715, %p716
      %s719 = sadd.s32 %s718, 1
      %p722 = scmp.eq.s32.totalorder %s92, 5
      %p723 = scmp.ne.s32.totalorder %s718, %s720
      %p724 = scmp.eq.s32.totalorder %s92, 0
      %p725 = por %p723, %p724
      %p726 = scmp.ne.s32.totalorder %s718, %s720
      %p727 = scmp.eq.s32.totalorder %s97, 5
      %p728 = por %p726, %p727
      %p729 = scmp.ne.s32.totalorder %s720, %s721
      %p730 = scmp.eq.s32.totalorder %s97, 0
      %p731 = por %p729, %p730
      %p732 = scmp.ne.s32.totalorder %s720, %s721
      %p733 = scmp.eq.s32.totalorder %s98, 5
      %p734 = por %p732, %p733
      %p736 = scmp.ne.s32.totalorder %s721, %s735
      %p737 = scmp.eq.s32.totalorder %s98, 0
      %p738 = por %p736, %p737
      %s740 = sadd.s32 %s739, 1
      %p743 = scmp.eq.s32.totalorder %s92, 5
      %p744 = scmp.ne.s32.totalorder %s739, %s741
      %p745 = scmp.eq.s32.totalorder %s92, 0
      %p746 = por %p744, %p745
      %p747 = scmp.ne.s32.totalorder %s739, %s741
      %p748 = scmp.eq.s32.totalorder %s97, 5
      %p749 = por %p747, %p748
      %p750 = scmp.ne.s32.totalorder %s741, %s742
      %p751 = scmp.eq.s32.totalorder %s97, 0
      %p752 = por %p750, %p751
      %p753 = scmp.ne.s32.totalorder %s741, %s742
      %p754 = scmp.eq.s32.totalorder %s98, 5
      %p755 = por %p753, %p754
      %p757 = scmp.ne.s32.totalorder %s742, %s756
      %p758 = scmp.eq.s32.totalorder %s98, 0
      %p759 = por %p757, %p758
      %s761 = sadd.s32 %s760, 1
      %p764 = scmp.eq.s32.totalorder %s92, 5
      %p765 = scmp.ne.s32.totalorder %s760, %s762
      %p766 = scmp.eq.s32.totalorder %s92, 0
      %p767 = por %p765, %p766
      %p768 = scmp.ne.s32.totalorder %s760, %s762
      %p769 = scmp.eq.s32.totalorder %s97, 5
      %p770 = por %p768, %p769
      %p771 = scmp.ne.s32.totalorder %s762, %s763
      %p772 = scmp.eq.s32.totalorder %s97, 0
      %p773 = por %p771, %p772
      %p774 = scmp.ne.s32.totalorder %s762, %s763
      %p775 = scmp.eq.s32.totalorder %s98, 5
      %p776 = por %p774, %p775
      %p778 = scmp.ne.s32.totalorder %s763, %s777
      %p779 = scmp.eq.s32.totalorder %s98, 0
      %p780 = por %p778, %p779
      %s781 = ssub.s32 %s99, %s111
      %p782 = scmp.eq.s32.totalorder %s781, 0
      %s784 = sadd.s32 %s783, 1
      %s785 = scalar_select %p782, %s783, %s784
      %p788 = pneg %p782
      %p789 = scmp.eq.s32.totalorder %s92, 5
      %p790 = por %p788, %p789
      %p791 = scmp.ne.s32.totalorder %s783, %s786
      %p792 = scmp.eq.s32.totalorder %s92, 0
      %p793 = por %p791, %p792
      %p794 = scmp.ne.s32.totalorder %s783, %s786
      %p795 = scmp.eq.s32.totalorder %s97, 5
      %p796 = por %p794, %p795
      %p797 = scmp.ne.s32.totalorder %s786, %s787
      %p798 = scmp.eq.s32.totalorder %s97, 0
      %p799 = por %p797, %p798
      %p800 = scmp.ne.s32.totalorder %s786, %s787
      %p801 = scmp.eq.s32.totalorder %s98, 5
      %p802 = por %p800, %p801
      %p804 = scmp.ne.s32.totalorder %s787, %s803
      %p805 = scmp.eq.s32.totalorder %s98, 0
      %p806 = por %p804, %p805
      %p807 = scmp.le.s32.totalorder 1, %s92
      %p808 = scmp.lt.s32.totalorder %s92, 7
      %p809 = pnand %p807, %p808
      %p810 = pneg %p809
      // Predicated region
      $region9: #{fashion_evaluator_forward.3} parent=5 // pred_check
        _
      $region10: #{fashion_evaluator_forward.3} parent=5 // pred_check_branch
        %812 = sbr.rel (%p809) target = $region12
      $region11: #{fashion_evaluator_forward.3} parent=5 // pred_region
        %s813 = ssub.s32 %s92, 1
        // Predicated region
        $region13: #{fashion_evaluator_forward.3} parent=11 // pred_check
          %p814 = pneg %p185
        $region14: #{fashion_evaluator_forward.3} parent=11 // pred_check_branch
          %816 = sbr.rel (%p814) target = $region16
        $region15: #{fashion_evaluator_forward.3} parent=11 // pred_region
          _
        $region16: #{fashion_evaluator_forward.3} parent=11 // pred_fallthru
          _
        // Predicated region
        $region17: #{fashion_evaluator_forward.3} parent=11 // pred_check
          %p817 = pneg %p206
        $region18: #{fashion_evaluator_forward.3} parent=11 // pred_check_branch
          %819 = sbr.rel (%p817) target = $region20
        $region19: #{fashion_evaluator_forward.3} parent=11 // pred_region
          _
        $region20: #{fashion_evaluator_forward.3} parent=11 // pred_fallthru
          _
        // Predicated region
        $region21: #{fashion_evaluator_forward.3} parent=11 // pred_check
          %p820 = pneg %p227
        $region22: #{fashion_evaluator_forward.3} parent=11 // pred_check_branch
          %822 = sbr.rel (%p820) target = $region24
        $region23: #{fashion_evaluator_forward.3} parent=11 // pred_region
          _
        $region24: #{fashion_evaluator_forward.3} parent=11 // pred_fallthru
          _
        // Predicated region
        $region25: #{fashion_evaluator_forward.3} parent=11 // pred_check
          %p823 = pneg %p248
        $region26: #{fashion_evaluator_forward.3} parent=11 // pred_check_branch
          %825 = sbr.rel (%p823) target = $region28
        $region27: #{fashion_evaluator_forward.3} parent=11 // pred_region
          %827 = vsyncadd [#allocation8], 0
          %s828 = sshll.u32 %s15, 4
          %s829 = int_to_ptr.hbm [resolvable:$true] %s828
          %s830 = sshll.u32 [#allocation7], 4
          %s831 = int_to_ptr.vmem [resolvable:$true] %s830
          %836 = dma.hbm_to_vmem [thread:$0]  %s829, 16384, %s831, [#allocation8], 256, 256, 16
        $region28: #{fashion_evaluator_forward.3} parent=11 // pred_fallthru
          _
        // Predicated region
        $region29: #{fashion_evaluator_forward.3} parent=11 // pred_check
          %p837 = pneg %p269
        $region30: #{fashion_evaluator_forward.3} parent=11 // pred_check_branch
          %839 = sbr.rel (%p837) target = $region32
        $region31: #{fashion_evaluator_forward.3} parent=11 // pred_region
          _
        $region32: #{fashion_evaluator_forward.3} parent=11 // pred_fallthru
          _
        // Predicated region
        $region33: #{fashion_evaluator_forward.3} parent=11 // pred_check
          %p840 = pneg %p290
        $region34: #{fashion_evaluator_forward.3} parent=11 // pred_check_branch
          %842 = sbr.rel (%p840) target = $region36
        $region35: #{fashion_evaluator_forward.3} parent=11 // pred_region
          _
        $region36: #{fashion_evaluator_forward.3} parent=11 // pred_fallthru
          _
        // Predicated region
        $region37: #{fashion_evaluator_forward.3} parent=11 // pred_check
          %p843 = pneg %p311
        $region38: #{fashion_evaluator_forward.3} parent=11 // pred_check_branch
          %845 = sbr.rel (%p843) target = $region40
        $region39: #{fashion_evaluator_forward.3} parent=11 // pred_region
          _
        $region40: #{fashion_evaluator_forward.3} parent=11 // pred_fallthru
          _
        // Predicated region
        $region41: #{fashion_evaluator_forward.3} parent=11 // pred_check
          %p846 = pneg %p332
        $region42: #{fashion_evaluator_forward.3} parent=11 // pred_check_branch
          %848 = sbr.rel (%p846) target = $region44
        $region43: #{fashion_evaluator_forward.3} parent=11 // pred_region
          %850 = vsyncadd [#allocation10], 0
          %s851 = sshll.u32 %s23, 4
          %s852 = int_to_ptr.hbm [resolvable:$true] %s851
          %s853 = sshll.u32 [#allocation9], 4
          %s854 = int_to_ptr.vmem [resolvable:$true] %s853
          %859 = dma.hbm_to_vmem [thread:$0]  %s852, 8192, %s854, [#allocation10], 128, 128, 8
        $region44: #{fashion_evaluator_forward.3} parent=11 // pred_fallthru
          _
        // Predicated region
        $region45: #{fashion_evaluator_forward.3} parent=11 // pred_check
          %p860 = pneg %p353
        $region46: #{fashion_evaluator_forward.3} parent=11 // pred_check_branch
          %862 = sbr.rel (%p860) target = $region48
        $region47: #{fashion_evaluator_forward.3} parent=11 // pred_region
          _
        $region48: #{fashion_evaluator_forward.3} parent=11 // pred_fallthru
          _
        // Predicated region
        $region49: #{fashion_evaluator_forward.3} parent=11 // pred_check
          %p863 = pneg %p374
        $region50: #{fashion_evaluator_forward.3} parent=11 // pred_check_branch
          %865 = sbr.rel (%p863) target = $region52
        $region51: #{fashion_evaluator_forward.3} parent=11 // pred_region
          _
        $region52: #{fashion_evaluator_forward.3} parent=11 // pred_fallthru
          _
        // Predicated region
        $region53: #{fashion_evaluator_forward.3} parent=11 // pred_check
          %p866 = pneg %p395
        $region54: #{fashion_evaluator_forward.3} parent=11 // pred_check_branch
          %868 = sbr.rel (%p866) target = $region56
        $region55: #{fashion_evaluator_forward.3} parent=11 // pred_region
          _
        $region56: #{fashion_evaluator_forward.3} parent=11 // pred_fallthru
          _
        // Predicated region
        $region57: #{fashion_evaluator_forward.3} parent=11 // pred_check
          %p869 = pneg %p416
        $region58: #{fashion_evaluator_forward.3} parent=11 // pred_check_branch
          %871 = sbr.rel (%p869) target = $region60
        $region59: #{fashion_evaluator_forward.3} parent=11 // pred_region
          %873 = vsyncadd [#allocation10], 0
          %s874 = sshll.u32 %s31, 4
          %s875 = int_to_ptr.hbm [resolvable:$true] %s874
          %s876 = sshll.u32 [#allocation11], 4
          %s877 = int_to_ptr.vmem [resolvable:$true] %s876
          %882 = dma.hbm_to_vmem [thread:$0]  %s875, 4096, %s877, [#allocation10], 128, 128, 8
        $region60: #{fashion_evaluator_forward.3} parent=11 // pred_fallthru
          _
        // Predicated region
        $region61: #{fashion_evaluator_forward.3} parent=11 // pred_check
          %p883 = pneg %p437
        $region62: #{fashion_evaluator_forward.3} parent=11 // pred_check_branch
          %885 = sbr.rel (%p883) target = $region64
        $region63: #{fashion_evaluator_forward.3} parent=11 // pred_region
          _
        $region64: #{fashion_evaluator_forward.3} parent=11 // pred_fallthru
          _
        // Predicated region
        $region65: #{fashion_evaluator_forward.3} parent=11 // pred_check
          %p886 = pneg %p458
        $region66: #{fashion_evaluator_forward.3} parent=11 // pred_check_branch
          %888 = sbr.rel (%p886) target = $region68
        $region67: #{fashion_evaluator_forward.3} parent=11 // pred_region
          _
        $region68: #{fashion_evaluator_forward.3} parent=11 // pred_fallthru
          _
        // Predicated region
        $region69: #{fashion_evaluator_forward.3} parent=11 // pred_check
          %p889 = pneg %p479
        $region70: #{fashion_evaluator_forward.3} parent=11 // pred_check_branch
          %891 = sbr.rel (%p889) target = $region72
        $region71: #{fashion_evaluator_forward.3} parent=11 // pred_region
          _
        $region72: #{fashion_evaluator_forward.3} parent=11 // pred_fallthru
          _
        // Predicated region
        $region73: #{fashion_evaluator_forward.3} parent=11 // pred_check
          %p892 = pneg %p500
        $region74: #{fashion_evaluator_forward.3} parent=11 // pred_check_branch
          %894 = sbr.rel (%p892) target = $region76
        $region75: #{fashion_evaluator_forward.3} parent=11 // pred_region
          %896 = vsyncadd [#allocation13], 0
          %s897 = sshll.u32 %s39, 4
          %s898 = int_to_ptr.hbm [resolvable:$true] %s897
          %s899 = sshll.u32 [#allocation12], 4
          %s900 = int_to_ptr.vmem [resolvable:$true] %s899
          %905 = dma.hbm_to_vmem [thread:$0]  %s898, 4096, %s900, [#allocation13], 128, 128, 8
        $region76: #{fashion_evaluator_forward.3} parent=11 // pred_fallthru
          _
        // Predicated region
        $region77: #{fashion_evaluator_forward.3} parent=11 // pred_check
          %p906 = pneg %p521
        $region78: #{fashion_evaluator_forward.3} parent=11 // pred_check_branch
          %908 = sbr.rel (%p906) target = $region80
        $region79: #{fashion_evaluator_forward.3} parent=11 // pred_region
          _
        $region80: #{fashion_evaluator_forward.3} parent=11 // pred_fallthru
          _
        // Predicated region
        $region81: #{fashion_evaluator_forward.3} parent=11 // pred_check
          %p909 = pneg %p542
        $region82: #{fashion_evaluator_forward.3} parent=11 // pred_check_branch
          %911 = sbr.rel (%p909) target = $region84
        $region83: #{fashion_evaluator_forward.3} parent=11 // pred_region
          _
        $region84: #{fashion_evaluator_forward.3} parent=11 // pred_fallthru
          _
        // Predicated region
        $region85: #{fashion_evaluator_forward.3} parent=11 // pred_check
          %p912 = pneg %p563
        $region86: #{fashion_evaluator_forward.3} parent=11 // pred_check_branch
          %914 = sbr.rel (%p912) target = $region88
        $region87: #{fashion_evaluator_forward.3} parent=11 // pred_region
          _
        $region88: #{fashion_evaluator_forward.3} parent=11 // pred_fallthru
          _
        // Predicated region
        $region89: #{fashion_evaluator_forward.3} parent=11 // pred_check
          %p915 = pneg %p584
        $region90: #{fashion_evaluator_forward.3} parent=11 // pred_check_branch
          %917 = sbr.rel (%p915) target = $region92
        $region91: #{fashion_evaluator_forward.3} parent=11 // pred_region
          %919 = vsyncadd [#allocation13], 0
          %s920 = sshll.u32 %s47, 4
          %s921 = int_to_ptr.hbm [resolvable:$true] %s920
          %s922 = sshll.u32 [#allocation14], 4
          %s923 = int_to_ptr.vmem [resolvable:$true] %s922
          %928 = dma.hbm_to_vmem [thread:$0]  %s921, 2048, %s923, [#allocation13], 128, 128, 8
        $region92: #{fashion_evaluator_forward.3} parent=11 // pred_fallthru
          _
        // Predicated region
        $region93: #{fashion_evaluator_forward.3} parent=11 // pred_check
          %p929 = pneg %p605
        $region94: #{fashion_evaluator_forward.3} parent=11 // pred_check_branch
          %931 = sbr.rel (%p929) target = $region96
        $region95: #{fashion_evaluator_forward.3} parent=11 // pred_region
          _
        $region96: #{fashion_evaluator_forward.3} parent=11 // pred_fallthru
          _
        // Predicated region
        $region97: #{fashion_evaluator_forward.3} parent=11 // pred_check
          %p932 = pneg %p626
        $region98: #{fashion_evaluator_forward.3} parent=11 // pred_check_branch
          %934 = sbr.rel (%p932) target = $region100
        $region99: #{fashion_evaluator_forward.3} parent=11 // pred_region
          _
        $region100: #{fashion_evaluator_forward.3} parent=11 // pred_fallthru
          _
        // Predicated region
        $region101: #{fashion_evaluator_forward.3} parent=11 // pred_check
          %p935 = pneg %p647
        $region102: #{fashion_evaluator_forward.3} parent=11 // pred_check_branch
          %937 = sbr.rel (%p935) target = $region104
        $region103: #{fashion_evaluator_forward.3} parent=11 // pred_region
          _
        $region104: #{fashion_evaluator_forward.3} parent=11 // pred_fallthru
          _
        // Predicated region
        $region105: #{fashion_evaluator_forward.3} parent=11 // pred_check
          %p938 = pneg %p668
        $region106: #{fashion_evaluator_forward.3} parent=11 // pred_check_branch
          %940 = sbr.rel (%p938) target = $region108
        $region107: #{fashion_evaluator_forward.3} parent=11 // pred_region
          %942 = vsyncadd [#allocation16], 0
          %s943 = sshll.u32 %s55, 4
          %s944 = int_to_ptr.hbm [resolvable:$true] %s943
          %s945 = sshll.u32 [#allocation15], 4
          %s946 = int_to_ptr.vmem [resolvable:$true] %s945
          %951 = dma.hbm_to_vmem [thread:$0]  %s944, 2048, %s946, [#allocation16], 128, 128, 8
        $region108: #{fashion_evaluator_forward.3} parent=11 // pred_fallthru
          _
        // Predicated region
        $region109: #{fashion_evaluator_forward.3} parent=11 // pred_check
          %p952 = pneg %p689
        $region110: #{fashion_evaluator_forward.3} parent=11 // pred_check_branch
          %954 = sbr.rel (%p952) target = $region112
        $region111: #{fashion_evaluator_forward.3} parent=11 // pred_region
          _
        $region112: #{fashion_evaluator_forward.3} parent=11 // pred_fallthru
          _
        // Predicated region
        $region113: #{fashion_evaluator_forward.3} parent=11 // pred_check
          %p955 = pneg %p710
        $region114: #{fashion_evaluator_forward.3} parent=11 // pred_check_branch
          %957 = sbr.rel (%p955) target = $region116
        $region115: #{fashion_evaluator_forward.3} parent=11 // pred_region
          _
        $region116: #{fashion_evaluator_forward.3} parent=11 // pred_fallthru
          _
        // Predicated region
        $region117: #{fashion_evaluator_forward.3} parent=11 // pred_check
          %p958 = pneg %p731
        $region118: #{fashion_evaluator_forward.3} parent=11 // pred_check_branch
          %960 = sbr.rel (%p958) target = $region120
        $region119: #{fashion_evaluator_forward.3} parent=11 // pred_region
          _
        $region120: #{fashion_evaluator_forward.3} parent=11 // pred_fallthru
          _
        // Predicated region
        $region121: #{fashion_evaluator_forward.3} parent=11 // pred_check
          %p961 = pneg %p752
        $region122: #{fashion_evaluator_forward.3} parent=11 // pred_check_branch
          %963 = sbr.rel (%p961) target = $region124
        $region123: #{fashion_evaluator_forward.3} parent=11 // pred_region
          _
        $region124: #{fashion_evaluator_forward.3} parent=11 // pred_fallthru
          _
        // Predicated region
        $region125: #{fashion_evaluator_forward.3} parent=11 // pred_check
          %p964 = pneg %p773
        $region126: #{fashion_evaluator_forward.3} parent=11 // pred_check_branch
          %966 = sbr.rel (%p964) target = $region128
        $region127: #{fashion_evaluator_forward.3} parent=11 // pred_region
          _
        $region128: #{fashion_evaluator_forward.3} parent=11 // pred_fallthru
          _
      $region12: #{fashion_evaluator_forward.3} parent=5 // pred_fallthru
        _
      %p967 = scmp.lt.s32.totalorder %s92, 6
      // Predicated region
      $region129: #{fashion_evaluator_forward.3} parent=5 // pred_check
        %p968 = pneg %p967
      $region130: #{fashion_evaluator_forward.3} parent=5 // pred_check_branch
        %970 = sbr.rel (%p968) target = $region132
      $region131: #{fashion_evaluator_forward.3} parent=5 // pred_region
        // Predicated region
        $region133: #{fashion_evaluator_forward.3} parent=131 // pred_check
          %p971 = pneg %p128
        $region134: #{fashion_evaluator_forward.3} parent=131 // pred_check_branch
          %973 = sbr.rel (%p971) target = $region136
        $region135: #{fashion_evaluator_forward.3} parent=131 // pred_region
          %s974 = sld [smem:[#allocation4 + %s100]]
          %p975 = scmp.lt.s32.totalorder %s974, 3
          %s976 = scalar_select %p975, %s974, 3
          %p977 = scmp.lt.s32.totalorder %s99, 0
          %s978 = scalar_select %p977, %s99, 0
          %s979 = smul.addr %s978, 8
          %s980 = smul.addr %s976, 8
          %s981 = sadd.s32 %s979, %s980
          %s982 = scalar_lea.vmem %s5, %s981
          %s983 = sld [smem:[#allocation4 + %s100]]
        $region136: #{fashion_evaluator_forward.3} parent=131 // pred_fallthru
          _
        // Predicated region
        $region137: #{fashion_evaluator_forward.3} parent=131 // pred_check
          %p984 = pneg %p158
        $region138: #{fashion_evaluator_forward.3} parent=131 // pred_check_branch
          %986 = sbr.rel (%p984) target = $region140
        $region139: #{fashion_evaluator_forward.3} parent=131 // pred_region
          %s987 = sld [smem:[#allocation5 + %s100]]
          %p988 = scmp.lt.s32.totalorder %s987, 3
          %s989 = scalar_select %p988, %s987, 3
          %p990 = scmp.lt.s32.totalorder %s99, 0
          %s991 = scalar_select %p990, %s99, 0
          %s992 = smul.addr %s991, 8
          %s993 = sadd.s32 4, %s992
          %s994 = smul.addr %s989, 8
          %s995 = sadd.s32 %s993, %s994
          %s996 = scalar_lea.vmem %s7, %s995
          %s997 = sld [smem:[#allocation5 + %s100]]
        $region140: #{fashion_evaluator_forward.3} parent=131 // pred_fallthru
          _
      $region132: #{fashion_evaluator_forward.3} parent=5 // pred_fallthru
        _
      %p998 = scmp.le.s32.totalorder 1, %s92
      %p999 = scmp.lt.s32.totalorder %s92, 7
      %p1000 = pnand %p998, %p999
      %p1001 = pneg %p1000
      // Predicated region
      $region141: #{fashion_evaluator_forward.3} parent=5 // pred_check
        _
      $region142: #{fashion_evaluator_forward.3} parent=5 // pred_check_branch
        %1003 = sbr.rel (%p1000) target = $region144
      $region143: #{fashion_evaluator_forward.3} parent=5 // pred_region
        %s1004 = ssub.s32 %s92, 1
        // Predicated region
        $region145: #{fashion_evaluator_forward.3} parent=143 // pred_check
          %p1005 = pneg %p248
        $region146: #{fashion_evaluator_forward.3} parent=143 // pred_check_branch
          %1007 = sbr.rel (%p1005) target = $region148
        $region147: #{fashion_evaluator_forward.3} parent=143 // pred_region
          %1009 = dma.done [#allocation8], 16384
        $region148: #{fashion_evaluator_forward.3} parent=143 // pred_fallthru
          _
        // Predicated region
        $region149: #{fashion_evaluator_forward.3} parent=143 // pred_check
          %p1010 = pneg %p332
        $region150: #{fashion_evaluator_forward.3} parent=143 // pred_check_branch
          %1012 = sbr.rel (%p1010) target = $region152
        $region151: #{fashion_evaluator_forward.3} parent=143 // pred_region
          %1014 = dma.done [#allocation10], 8192
        $region152: #{fashion_evaluator_forward.3} parent=143 // pred_fallthru
          _
        // Predicated region
        $region153: #{fashion_evaluator_forward.3} parent=143 // pred_check
          %p1015 = pneg %p416
        $region154: #{fashion_evaluator_forward.3} parent=143 // pred_check_branch
          %1017 = sbr.rel (%p1015) target = $region156
        $region155: #{fashion_evaluator_forward.3} parent=143 // pred_region
          %1019 = dma.done [#allocation10], 4096
        $region156: #{fashion_evaluator_forward.3} parent=143 // pred_fallthru
          _
        // Predicated region
        $region157: #{fashion_evaluator_forward.3} parent=143 // pred_check
          %p1020 = pneg %p500
        $region158: #{fashion_evaluator_forward.3} parent=143 // pred_check_branch
          %1022 = sbr.rel (%p1020) target = $region160
        $region159: #{fashion_evaluator_forward.3} parent=143 // pred_region
          %1024 = dma.done [#allocation13], 4096
        $region160: #{fashion_evaluator_forward.3} parent=143 // pred_fallthru
          _
        // Predicated region
        $region161: #{fashion_evaluator_forward.3} parent=143 // pred_check
          %p1025 = pneg %p584
        $region162: #{fashion_evaluator_forward.3} parent=143 // pred_check_branch
          %1027 = sbr.rel (%p1025) target = $region164
        $region163: #{fashion_evaluator_forward.3} parent=143 // pred_region
          %1029 = dma.done [#allocation13], 2048
        $region164: #{fashion_evaluator_forward.3} parent=143 // pred_fallthru
          _
        // Predicated region
        $region165: #{fashion_evaluator_forward.3} parent=143 // pred_check
          %p1030 = pneg %p668
        $region166: #{fashion_evaluator_forward.3} parent=143 // pred_check_branch
          %1032 = sbr.rel (%p1030) target = $region168
        $region167: #{fashion_evaluator_forward.3} parent=143 // pred_region
          %1034 = dma.done [#allocation16], 2048
        $region168: #{fashion_evaluator_forward.3} parent=143 // pred_fallthru
          _
        %s1035 = sld [smem:[#allocation4 + %s102]]
        %p1036 = scmp.lt.s32.totalorder %s1035, 3
        %s1037 = scalar_select %p1036, %s1035, 3
        %p1038 = scmp.lt.s32.totalorder %s101, 0
        %s1039 = scalar_select %p1038, %s101, 0
        %s1040 = smul.addr %s1039, 8
        %s1041 = smul.addr %s1037, 8
        %s1042 = sadd.s32 %s1040, %s1041
        %s1043 = scalar_lea.vmem %s5, %s1042
        %p1044 = pneg %p134
        %p1045 = pneg %p131
        %s1046 = sld [smem:[#allocation5 + %s102]]
        %p1047 = scmp.lt.s32.totalorder %s1046, 3
        %s1048 = scalar_select %p1047, %s1046, 3
        %p1049 = scmp.lt.s32.totalorder %s101, 0
        %s1050 = scalar_select %p1049, %s101, 0
        %s1051 = smul.addr %s1050, 8
        %s1052 = sadd.s32 4, %s1051
        %s1053 = smul.addr %s1048, 8
        %s1054 = sadd.s32 %s1052, %s1053
        %s1055 = scalar_lea.vmem %s7, %s1054
        %p1056 = pneg %p164
        %p1057 = pneg %p161
        %p1058 = pneg %p185
        %p1059 = pneg %p182
        %p1060 = pneg %p206
        %p1061 = pneg %p203
        %p1062 = pneg %p227
        %p1063 = pneg %p224
        %p1064 = pneg %p248
        %p1065 = pneg %p245
        %p1066 = pneg %p269
        %p1067 = pneg %p266
        %p1068 = pneg %p290
        %p1069 = pneg %p287
        %p1070 = pneg %p311
        %p1071 = pneg %p308
        %p1072 = pneg %p332
        %p1073 = pneg %p329
        %p1074 = pneg %p353
        %p1075 = pneg %p350
        %p1076 = pneg %p374
        %p1077 = pneg %p371
        %p1078 = pneg %p395
        %p1079 = pneg %p392
        %p1080 = pneg %p416
        %p1081 = pneg %p413
        %p1082 = pneg %p437
        %p1083 = pneg %p434
        %p1084 = pneg %p458
        %p1085 = pneg %p455
        %p1086 = pneg %p479
        %p1087 = pneg %p476
        %p1088 = pneg %p500
        %p1089 = pneg %p497
        %p1090 = pneg %p521
        %p1091 = pneg %p518
        %p1092 = pneg %p542
        %p1093 = pneg %p539
        %p1094 = pneg %p563
        %p1095 = pneg %p560
        %p1096 = pneg %p584
        %p1097 = pneg %p581
        %p1098 = pneg %p605
        %p1099 = pneg %p602
        %p1100 = pneg %p626
        %p1101 = pneg %p623
        %p1102 = pneg %p647
        %p1103 = pneg %p644
        %p1104 = pneg %p668
        %p1105 = pneg %p665
        %p1106 = pneg %p689
        %p1107 = pneg %p686
        %p1108 = pneg %p710
        %p1109 = pneg %p707
        %p1110 = pneg %p731
        %p1111 = pneg %p728
        %p1112 = pneg %p752
        %p1113 = pneg %p749
        %p1114 = pneg %p773
        %p1115 = pneg %p770
        %p1116 = pneg %p799
        %p1117 = pneg %p796
        %p1118 = scmp.lt.s32.totalorder %s101, 0
        %s1119 = scalar_select %p1118, %s101, 0
        %s1120 = smul.addr %s1119, 2
        %s1121 = scalar_lea.vmem %s67, %s1120
        %s1122 = sld [smem:[#allocation4 + %s102]]
        %p1123 = scmp.lt.s32.totalorder %s1122, 3
        %s1124 = scalar_select %p1123, %s1122, 3
        %p1125 = scmp.lt.s32.totalorder %s101, 0
        %s1126 = scalar_select %p1125, %s101, 0
        %s1127 = smul.addr %s1126, 8
        %s1128 = smul.addr %s1124, 8
        %s1129 = sadd.s32 %s1127, %s1128
        %s1130 = scalar_lea.vmem %s5, %s1129
        %s1131 = sld [smem:[#allocation4 + %s102]]
        %s1132 = sld [smem:[#allocation5 + %s102]]
        %p1133 = scmp.lt.s32.totalorder %s1132, 3
        %s1134 = scalar_select %p1133, %s1132, 3
        %p1135 = scmp.lt.s32.totalorder %s101, 0
        %s1136 = scalar_select %p1135, %s101, 0
        %s1137 = smul.addr %s1136, 8
        %s1138 = sadd.s32 4, %s1137
        %s1139 = smul.addr %s1134, 8
        %s1140 = sadd.s32 %s1138, %s1139
        %s1141 = scalar_lea.vmem %s7, %s1140
        %s1142 = sld [smem:[#allocation5 + %s102]]
        %p1143 = scmp.lt.s32.totalorder %s101, 0
        %s1144 = scalar_select %p1143, %s101, 0
        %s1145 = smul.addr %s1144, 2
        %s1146 = scalar_lea.vmem %s67, %s1145
        %p1147 = scmp.eq.s32.totalorder %s102, 0
        // Predicated region
        $region169: #{fashion_evaluator_forward.3} parent=143 // pred_check
          %p1148 = pneg %p1147
        $region170: #{fashion_evaluator_forward.3} parent=143 // pred_check_branch
          %1150 = sbr.rel (%p1148) target = $region172
        $region171: #{fashion_evaluator_forward.3} parent=143 // pred_region
          %1151 = vst [vmem:[#allocation2] sm:$0xf] 0.0
        $region172: #{fashion_evaluator_forward.3} parent=143 // pred_fallthru
          _
        %v1152 = vld [vmem:[%s1130] sm:$0xf]
        %v1153 = vunpack.c.l.bf16 %v1152
        %v1154 = vld [vmem:[%s1141] sm:$0xf]
        %v1155 = vunpack.c.l.bf16 %v1154
        %v1156 = vadd.f32 %v1153, %v1155
        %v1157 = vld [vmem:[%s9] sm:$0xf]
        %v1159 = vperm.slane %v1157, 0
        %v1160 = vperm.slane %v1157, 1
        %v1161 = vperm.slane %v1157, 2
        %v1162 = vperm.slane %v1157, 3
        %v1163 = vrot.slane %v1160, 6
        %v1164 = vrot.slane %v1161, 4
        %v1165 = vrot.slane %v1162, 2
        %vm1166 = vcmask 1041408
        %v1167 = vsel %vm1166, %v1159, %v1163
        %vm1168 = vcmask 1045508
        %v1169 = vsel %vm1168, %v1164, %v1165
        %vm1170 = vcmask 1043456
        %v1171 = vsel %vm1170, %v1167, %v1169
        %v1173 = vadd.f32 %v1156, %v1171
        %v1174 = vld [vmem:[%s11] sm:$0xf]
        %v1175 = vld [vmem:[%s13] sm:$0xf]
        %1177 = vst [vmem:[#allocation1] ss:$4 sm:$0xff] %v1173
        %v1178 = vld.sshfl [vmem:[#allocation1] sm:$0xff pattern:$0x73625140]
        %v1179 = vld.sshfl [vmem:[#allocation1 + $0x8] sm:$0xff pattern:$0x73625140]
        %v1180 = vld.sshfl [vmem:[#allocation1 + $0x10] sm:$0xff pattern:$0x73625140]
        %v1181 = vld.sshfl [vmem:[#allocation1 + $0x18] sm:$0xff pattern:$0x73625140]
        %v1186 = vsel %vm1166, %v1178, 0.0
        %v1187 = vsel %vm1166, %v1179, 0.0
        %v1188 = vadd.f32 %v1186, %v1187
        %v1189 = vsel %vm1166, %v1180, 0.0
        %v1190 = vadd.f32 %v1188, %v1189
        %v1191 = vsel %vm1166, %v1181, 0.0
        %v1192 = vadd.f32 %v1190, %v1191
        %1193 = vadd.xlane.f32.xlu0 %v1192
        %v1194 = vpop.xlane.xlu0 %1193
        %v1195 = vrcp.pop 512.0
        %v1196 = vmul.f32 512.0, %v1195
        %v1197 = vsub.f32 1.0, %v1196
        %v1198 = vmul.f32 %v1195, %v1197
        %v1199 = vadd.f32 %v1195, %v1198
        %vm1200 = vweird.f32 %v1195
        %v1201 = vsel %vm1200, %v1195, %v1199
        %v1202 = vmul.f32 %v1194, %v1201
        %v1205 = vunpack.c.l.s4 269488144
        %v1206 = vunpack.c.0.s8 %v1205
        %v1207 = vperm.slane %v1202, %v1206
        %v1209 = vsub.f32 %v1173, %v1207
        %v1210 = vmul.f32 %v1209, %v1209
        %1212 = vst [vmem:[#allocation1] ss:$4 sm:$0xff] %v1210
        %v1213 = vld.sshfl [vmem:[#allocation1] sm:$0xff pattern:$0x73625140]
        %v1214 = vld.sshfl [vmem:[#allocation1 + $0x8] sm:$0xff pattern:$0x73625140]
        %v1215 = vld.sshfl [vmem:[#allocation1 + $0x10] sm:$0xff pattern:$0x73625140]
        %v1216 = vld.sshfl [vmem:[#allocation1 + $0x18] sm:$0xff pattern:$0x73625140]
        %v1221 = vsel %vm1166, %v1213, 0.0
        %v1222 = vsel %vm1166, %v1214, 0.0
        %v1223 = vadd.f32 %v1221, %v1222
        %v1224 = vsel %vm1166, %v1215, 0.0
        %v1225 = vadd.f32 %v1223, %v1224
        %v1226 = vsel %vm1166, %v1216, 0.0
        %v1227 = vadd.f32 %v1225, %v1226
        %1228 = vadd.xlane.f32.xlu0 %v1227
        %v1229 = vpop.xlane.xlu0 %1228
        %v1230 = vmul.f32 %v1229, %v1201
        %v1231 = vadd.f32 %v1230, 1e-05
        %v1232 = vrsqrt.pop %v1231
        %v1233 = vmul.f32 %v1232, %v1231
        %v1234 = vmul.f32 %v1233, %v1232
        %v1235 = vmul.f32 0.5, %v1234
        %v1236 = vsub.f32 1.5, %v1235
        %v1237 = vmul.f32 %v1232, %v1236
        %vm1238 = vweird.f32 %v1231
        %vm1239 = vweird.f32 %v1232
        %vm1240 = vmor %vm1238, %vm1239
        %v1241 = vsel %vm1240, %v1232, %v1237
        %v1244 = vunpack.c.l.s4 269488144
        %v1245 = vunpack.c.0.s8 %v1244
        %v1246 = vperm.slane %v1241, %v1245
        %v1248 = vmul.f32 %v1209, %v1246
        %v1250 = vperm.slane %v1174, 0
        %v1251 = vperm.slane %v1174, 1
        %v1252 = vperm.slane %v1174, 2
        %v1253 = vperm.slane %v1174, 3
        %v1254 = vrot.slane %v1251, 6
        %v1255 = vrot.slane %v1252, 4
        %v1256 = vrot.slane %v1253, 2
        %v1257 = vsel %vm1166, %v1250, %v1254
        %v1258 = vsel %vm1168, %v1255, %v1256
        %v1259 = vsel %vm1170, %v1257, %v1258
        %v1261 = vmul.f32 %v1248, %v1259
        %v1263 = vperm.slane %v1175, 0
        %v1264 = vperm.slane %v1175, 1
        %v1265 = vperm.slane %v1175, 2
        %v1266 = vperm.slane %v1175, 3
        %v1267 = vrot.slane %v1264, 6
        %v1268 = vrot.slane %v1265, 4
        %v1269 = vrot.slane %v1266, 2
        %v1270 = vsel %vm1166, %v1263, %v1267
        %v1271 = vsel %vm1168, %v1268, %v1269
        %v1272 = vsel %vm1170, %v1270, %v1271
        %v1274 = vadd.f32 %v1261, %v1272
        %v1275 = vmax.f32 %v1274, 0.0
        %1277 = vst [vmem:[#allocation1] ss:$4 sm:$0xff] %v1275
        %v1278 = vld.sshfl [vmem:[#allocation1] sm:$0xff pattern:$0x73625140]
        %v1279 = vld.sshfl [vmem:[#allocation1 + $0x8] sm:$0xff pattern:$0x73625140]
        %v1280 = vld.sshfl [vmem:[#allocation1 + $0x10] sm:$0xff pattern:$0x73625140]
        %v1281 = vld.sshfl [vmem:[#allocation1 + $0x18] sm:$0xff pattern:$0x73625140]
        %v1286 = vpack.c.bf16 %v1278, %v1278
        %v1287 = vpack.c.bf16 %v1279, %v1279
        %v1288 = vpack.c.bf16 %v1280, %v1280
        %v1289 = vpack.c.bf16 %v1281, %v1281
        %v1290 = vld [vmem:[#allocation7] sm:$0xff]
        %v1291 = vld [vmem:[#allocation7 + $0x8] sm:$0xff]
        %v1292 = vld [vmem:[#allocation7 + $0x10] sm:$0xff]
        %v1293 = vld [vmem:[#allocation7 + $0x18] sm:$0xff]
        %v1294 = vld [vmem:[#allocation7 + $0x20] sm:$0xff]
        %v1295 = vld [vmem:[#allocation7 + $0x28] sm:$0xff]
        %v1296 = vld [vmem:[#allocation7 + $0x30] sm:$0xff]
        %v1297 = vld [vmem:[#allocation7 + $0x38] sm:$0xff]
        %v1298 = vld [vmem:[#allocation7 + $0x40] sm:$0xff]
        %v1299 = vld [vmem:[#allocation7 + $0x48] sm:$0xff]
        %v1300 = vld [vmem:[#allocation7 + $0x50] sm:$0xff]
        %v1301 = vld [vmem:[#allocation7 + $0x58] sm:$0xff]
        %v1302 = vld [vmem:[#allocation7 + $0x60] sm:$0xff]
        %v1303 = vld [vmem:[#allocation7 + $0x68] sm:$0xff]
        %v1304 = vld [vmem:[#allocation7 + $0x70] sm:$0xff]
        %v1305 = vld [vmem:[#allocation7 + $0x78] sm:$0xff]
        %v1306 = vld [vmem:[#allocation7 + $0x80] sm:$0xff]
        %v1307 = vld [vmem:[#allocation7 + $0x88] sm:$0xff]
        %v1308 = vld [vmem:[#allocation7 + $0x90] sm:$0xff]
        %v1309 = vld [vmem:[#allocation7 + $0x98] sm:$0xff]
        %v1310 = vld [vmem:[#allocation7 + $0xa0] sm:$0xff]
        %v1311 = vld [vmem:[#allocation7 + $0xa8] sm:$0xff]
        %v1312 = vld [vmem:[#allocation7 + $0xb0] sm:$0xff]
        %v1313 = vld [vmem:[#allocation7 + $0xb8] sm:$0xff]
        %v1314 = vld [vmem:[#allocation7 + $0xc0] sm:$0xff]
        %v1315 = vld [vmem:[#allocation7 + $0xc8] sm:$0xff]
        %v1316 = vld [vmem:[#allocation7 + $0xd0] sm:$0xff]
        %v1317 = vld [vmem:[#allocation7 + $0xd8] sm:$0xff]
        %v1318 = vld [vmem:[#allocation7 + $0xe0] sm:$0xff]
        %v1319 = vld [vmem:[#allocation7 + $0xe8] sm:$0xff]
        %v1320 = vld [vmem:[#allocation7 + $0xf0] sm:$0xff]
        %v1321 = vld [vmem:[#allocation7 + $0xf8] sm:$0xff]
        %v1322 = vld [vmem:[#allocation7 + $0x100] sm:$0xff]
        %v1323 = vld [vmem:[#allocation7 + $0x108] sm:$0xff]
        %v1324 = vld [vmem:[#allocation7 + $0x110] sm:$0xff]
        %v1325 = vld [vmem:[#allocation7 + $0x118] sm:$0xff]
        %v1326 = vld [vmem:[#allocation7 + $0x120] sm:$0xff]
        %v1327 = vld [vmem:[#allocation7 + $0x128] sm:$0xff]
        %v1328 = vld [vmem:[#allocation7 + $0x130] sm:$0xff]
        %v1329 = vld [vmem:[#allocation7 + $0x138] sm:$0xff]
        %v1330 = vld [vmem:[#allocation7 + $0x140] sm:$0xff]
        %v1331 = vld [vmem:[#allocation7 + $0x148] sm:$0xff]
        %v1332 = vld [vmem:[#allocation7 + $0x150] sm:$0xff]
        %v1333 = vld [vmem:[#allocation7 + $0x158] sm:$0xff]
        %v1334 = vld [vmem:[#allocation7 + $0x160] sm:$0xff]
        %v1335 = vld [vmem:[#allocation7 + $0x168] sm:$0xff]
        %v1336 = vld [vmem:[#allocation7 + $0x170] sm:$0xff]
        %v1337 = vld [vmem:[#allocation7 + $0x178] sm:$0xff]
        %v1338 = vld [vmem:[#allocation7 + $0x180] sm:$0xff]
        %v1339 = vld [vmem:[#allocation7 + $0x188] sm:$0xff]
        %v1340 = vld [vmem:[#allocation7 + $0x190] sm:$0xff]
        %v1341 = vld [vmem:[#allocation7 + $0x198] sm:$0xff]
        %v1342 = vld [vmem:[#allocation7 + $0x1a0] sm:$0xff]
        %v1343 = vld [vmem:[#allocation7 + $0x1a8] sm:$0xff]
        %v1344 = vld [vmem:[#allocation7 + $0x1b0] sm:$0xff]
        %v1345 = vld [vmem:[#allocation7 + $0x1b8] sm:$0xff]
        %v1346 = vld [vmem:[#allocation7 + $0x1c0] sm:$0xff]
        %v1347 = vld [vmem:[#allocation7 + $0x1c8] sm:$0xff]
        %v1348 = vld [vmem:[#allocation7 + $0x1d0] sm:$0xff]
        %v1349 = vld [vmem:[#allocation7 + $0x1d8] sm:$0xff]
        %v1350 = vld [vmem:[#allocation7 + $0x1e0] sm:$0xff]
        %v1351 = vld [vmem:[#allocation7 + $0x1e8] sm:$0xff]
        %v1352 = vld [vmem:[#allocation7 + $0x1f0] sm:$0xff]
        %v1353 = vld [vmem:[#allocation7 + $0x1f8] sm:$0xff]
        %v1354 = vld [vmem:[#allocation7 + $0x200] sm:$0xff]
        %v1355 = vld [vmem:[#allocation7 + $0x208] sm:$0xff]
        %v1356 = vld [vmem:[#allocation7 + $0x210] sm:$0xff]
        %v1357 = vld [vmem:[#allocation7 + $0x218] sm:$0xff]
        %v1358 = vld [vmem:[#allocation7 + $0x220] sm:$0xff]
        %v1359 = vld [vmem:[#allocation7 + $0x228] sm:$0xff]
        %v1360 = vld [vmem:[#allocation7 + $0x230] sm:$0xff]
        %v1361 = vld [vmem:[#allocation7 + $0x238] sm:$0xff]
        %v1362 = vld [vmem:[#allocation7 + $0x240] sm:$0xff]
        %v1363 = vld [vmem:[#allocation7 + $0x248] sm:$0xff]
        %v1364 = vld [vmem:[#allocation7 + $0x250] sm:$0xff]
        %v1365 = vld [vmem:[#allocation7 + $0x258] sm:$0xff]
        %v1366 = vld [vmem:[#allocation7 + $0x260] sm:$0xff]
        %v1367 = vld [vmem:[#allocation7 + $0x268] sm:$0xff]
        %v1368 = vld [vmem:[#allocation7 + $0x270] sm:$0xff]
        %v1369 = vld [vmem:[#allocation7 + $0x278] sm:$0xff]
        %v1370 = vld [vmem:[#allocation7 + $0x280] sm:$0xff]
        %v1371 = vld [vmem:[#allocation7 + $0x288] sm:$0xff]
        %v1372 = vld [vmem:[#allocation7 + $0x290] sm:$0xff]
        %v1373 = vld [vmem:[#allocation7 + $0x298] sm:$0xff]
        %v1374 = vld [vmem:[#allocation7 + $0x2a0] sm:$0xff]
        %v1375 = vld [vmem:[#allocation7 + $0x2a8] sm:$0xff]
        %v1376 = vld [vmem:[#allocation7 + $0x2b0] sm:$0xff]
        %v1377 = vld [vmem:[#allocation7 + $0x2b8] sm:$0xff]
        %v1378 = vld [vmem:[#allocation7 + $0x2c0] sm:$0xff]
        %v1379 = vld [vmem:[#allocation7 + $0x2c8] sm:$0xff]
        %v1380 = vld [vmem:[#allocation7 + $0x2d0] sm:$0xff]
        %v1381 = vld [vmem:[#allocation7 + $0x2d8] sm:$0xff]
        %v1382 = vld [vmem:[#allocation7 + $0x2e0] sm:$0xff]
        %v1383 = vld [vmem:[#allocation7 + $0x2e8] sm:$0xff]
        %v1384 = vld [vmem:[#allocation7 + $0x2f0] sm:$0xff]
        %v1385 = vld [vmem:[#allocation7 + $0x2f8] sm:$0xff]
        %v1386 = vld [vmem:[#allocation7 + $0x300] sm:$0xff]
        %v1387 = vld [vmem:[#allocation7 + $0x308] sm:$0xff]
        %v1388 = vld [vmem:[#allocation7 + $0x310] sm:$0xff]
        %v1389 = vld [vmem:[#allocation7 + $0x318] sm:$0xff]
        %v1390 = vld [vmem:[#allocation7 + $0x320] sm:$0xff]
        %v1391 = vld [vmem:[#allocation7 + $0x328] sm:$0xff]
        %v1392 = vld [vmem:[#allocation7 + $0x330] sm:$0xff]
        %v1393 = vld [vmem:[#allocation7 + $0x338] sm:$0xff]
        %v1394 = vld [vmem:[#allocation7 + $0x340] sm:$0xff]
        %v1395 = vld [vmem:[#allocation7 + $0x348] sm:$0xff]
        %v1396 = vld [vmem:[#allocation7 + $0x350] sm:$0xff]
        %v1397 = vld [vmem:[#allocation7 + $0x358] sm:$0xff]
        %v1398 = vld [vmem:[#allocation7 + $0x360] sm:$0xff]
        %v1399 = vld [vmem:[#allocation7 + $0x368] sm:$0xff]
        %v1400 = vld [vmem:[#allocation7 + $0x370] sm:$0xff]
        %v1401 = vld [vmem:[#allocation7 + $0x378] sm:$0xff]
        %v1402 = vld [vmem:[#allocation7 + $0x380] sm:$0xff]
        %v1403 = vld [vmem:[#allocation7 + $0x388] sm:$0xff]
        %v1404 = vld [vmem:[#allocation7 + $0x390] sm:$0xff]
        %v1405 = vld [vmem:[#allocation7 + $0x398] sm:$0xff]
        %v1406 = vld [vmem:[#allocation7 + $0x3a0] sm:$0xff]
        %v1407 = vld [vmem:[#allocation7 + $0x3a8] sm:$0xff]
        %v1408 = vld [vmem:[#allocation7 + $0x3b0] sm:$0xff]
        %v1409 = vld [vmem:[#allocation7 + $0x3b8] sm:$0xff]
        %v1410 = vld [vmem:[#allocation7 + $0x3c0] sm:$0xff]
        %v1411 = vld [vmem:[#allocation7 + $0x3c8] sm:$0xff]
        %v1412 = vld [vmem:[#allocation7 + $0x3d0] sm:$0xff]
        %v1413 = vld [vmem:[#allocation7 + $0x3d8] sm:$0xff]
        %v1414 = vld [vmem:[#allocation7 + $0x3e0] sm:$0xff]
        %v1415 = vld [vmem:[#allocation7 + $0x3e8] sm:$0xff]
        %v1416 = vld [vmem:[#allocation7 + $0x3f0] sm:$0xff]
        %v1417 = vld [vmem:[#allocation7 + $0x3f8] sm:$0xff]
        %v1418 = vld [vmem:[%s17] sm:$0xf]
        %v1420 = vperm.slane %v1418, 0
        %v1421 = vperm.slane %v1418, 1
        %v1422 = vperm.slane %v1418, 2
        %v1423 = vperm.slane %v1418, 3
        %v1556 = vunpack.c.l.b16 %v1290
        %v1557 = vunpack.c.h.b16 %v1290
        %v1558 = vunpack.c.l.b16 %v1291
        %v1559 = vunpack.c.h.b16 %v1291
        %v1560 = vunpack.c.l.b16 %v1292
        %v1561 = vunpack.c.h.b16 %v1292
        %v1562 = vunpack.c.l.b16 %v1293
        %v1563 = vunpack.c.h.b16 %v1293
        %v1564 = vunpack.c.l.b16 %v1294
        %v1565 = vunpack.c.h.b16 %v1294
        %v1566 = vunpack.c.l.b16 %v1295
        %v1567 = vunpack.c.h.b16 %v1295
        %v1568 = vunpack.c.l.b16 %v1296
        %v1569 = vunpack.c.h.b16 %v1296
        %v1570 = vunpack.c.l.b16 %v1297
        %v1571 = vunpack.c.h.b16 %v1297
        %v1572 = vunpack.c.l.b16 %v1298
        %v1573 = vunpack.c.h.b16 %v1298
        %v1574 = vunpack.c.l.b16 %v1299
        %v1575 = vunpack.c.h.b16 %v1299
        %v1576 = vunpack.c.l.b16 %v1300
        %v1577 = vunpack.c.h.b16 %v1300
        %v1578 = vunpack.c.l.b16 %v1301
        %v1579 = vunpack.c.h.b16 %v1301
        %v1580 = vunpack.c.l.b16 %v1302
        %v1581 = vunpack.c.h.b16 %v1302
        %v1582 = vunpack.c.l.b16 %v1303
        %v1583 = vunpack.c.h.b16 %v1303
        %v1584 = vunpack.c.l.b16 %v1304
        %v1585 = vunpack.c.h.b16 %v1304
        %v1586 = vunpack.c.l.b16 %v1305
        %v1587 = vunpack.c.h.b16 %v1305
        %v1588 = vunpack.c.l.b16 %v1306
        %v1589 = vunpack.c.h.b16 %v1306
        %v1590 = vunpack.c.l.b16 %v1307
        %v1591 = vunpack.c.h.b16 %v1307
        %v1592 = vunpack.c.l.b16 %v1308
        %v1593 = vunpack.c.h.b16 %v1308
        %v1594 = vunpack.c.l.b16 %v1309
        %v1595 = vunpack.c.h.b16 %v1309
        %v1596 = vunpack.c.l.b16 %v1310
        %v1597 = vunpack.c.h.b16 %v1310
        %v1598 = vunpack.c.l.b16 %v1311
        %v1599 = vunpack.c.h.b16 %v1311
        %v1600 = vunpack.c.l.b16 %v1312
        %v1601 = vunpack.c.h.b16 %v1312
        %v1602 = vunpack.c.l.b16 %v1313
        %v1603 = vunpack.c.h.b16 %v1313
        %v1604 = vunpack.c.l.b16 %v1314
        %v1605 = vunpack.c.h.b16 %v1314
        %v1606 = vunpack.c.l.b16 %v1315
        %v1607 = vunpack.c.h.b16 %v1315
        %v1608 = vunpack.c.l.b16 %v1316
        %v1609 = vunpack.c.h.b16 %v1316
        %v1610 = vunpack.c.l.b16 %v1317
        %v1611 = vunpack.c.h.b16 %v1317
        %v1612 = vunpack.c.l.b16 %v1318
        %v1613 = vunpack.c.h.b16 %v1318
        %v1614 = vunpack.c.l.b16 %v1319
        %v1615 = vunpack.c.h.b16 %v1319
        %v1616 = vunpack.c.l.b16 %v1320
        %v1617 = vunpack.c.h.b16 %v1320
        %v1618 = vunpack.c.l.b16 %v1321
        %v1619 = vunpack.c.h.b16 %v1321
        %v1620 = vunpack.c.l.b16 %v1322
        %v1621 = vunpack.c.h.b16 %v1322
        %v1622 = vunpack.c.l.b16 %v1323
        %v1623 = vunpack.c.h.b16 %v1323
        %v1624 = vunpack.c.l.b16 %v1324
        %v1625 = vunpack.c.h.b16 %v1324
        %v1626 = vunpack.c.l.b16 %v1325
        %v1627 = vunpack.c.h.b16 %v1325
        %v1628 = vunpack.c.l.b16 %v1326
        %v1629 = vunpack.c.h.b16 %v1326
        %v1630 = vunpack.c.l.b16 %v1327
        %v1631 = vunpack.c.h.b16 %v1327
        %v1632 = vunpack.c.l.b16 %v1328
        %v1633 = vunpack.c.h.b16 %v1328
        %v1634 = vunpack.c.l.b16 %v1329
        %v1635 = vunpack.c.h.b16 %v1329
        %v1636 = vunpack.c.l.b16 %v1330
        %v1637 = vunpack.c.h.b16 %v1330
        %v1638 = vunpack.c.l.b16 %v1331
        %v1639 = vunpack.c.h.b16 %v1331
        %v1640 = vunpack.c.l.b16 %v1332
        %v1641 = vunpack.c.h.b16 %v1332
        %v1642 = vunpack.c.l.b16 %v1333
        %v1643 = vunpack.c.h.b16 %v1333
        %v1644 = vunpack.c.l.b16 %v1334
        %v1645 = vunpack.c.h.b16 %v1334
        %v1646 = vunpack.c.l.b16 %v1335
        %v1647 = vunpack.c.h.b16 %v1335
        %v1648 = vunpack.c.l.b16 %v1336
        %v1649 = vunpack.c.h.b16 %v1336
        %v1650 = vunpack.c.l.b16 %v1337
        %v1651 = vunpack.c.h.b16 %v1337
        %v1652 = vunpack.c.l.b16 %v1338
        %v1653 = vunpack.c.h.b16 %v1338
        %v1654 = vunpack.c.l.b16 %v1339
        %v1655 = vunpack.c.h.b16 %v1339
        %v1656 = vunpack.c.l.b16 %v1340
        %v1657 = vunpack.c.h.b16 %v1340
        %v1658 = vunpack.c.l.b16 %v1341
        %v1659 = vunpack.c.h.b16 %v1341
        %v1660 = vunpack.c.l.b16 %v1342
        %v1661 = vunpack.c.h.b16 %v1342
        %v1662 = vunpack.c.l.b16 %v1343
        %v1663 = vunpack.c.h.b16 %v1343
        %v1664 = vunpack.c.l.b16 %v1344
        %v1665 = vunpack.c.h.b16 %v1344
        %v1666 = vunpack.c.l.b16 %v1345
        %v1667 = vunpack.c.h.b16 %v1345
        %v1668 = vunpack.c.l.b16 %v1346
        %v1669 = vunpack.c.h.b16 %v1346
        %v1670 = vunpack.c.l.b16 %v1347
        %v1671 = vunpack.c.h.b16 %v1347
        %v1672 = vunpack.c.l.b16 %v1348
        %v1673 = vunpack.c.h.b16 %v1348
        %v1674 = vunpack.c.l.b16 %v1349
        %v1675 = vunpack.c.h.b16 %v1349
        %v1676 = vunpack.c.l.b16 %v1350
        %v1677 = vunpack.c.h.b16 %v1350
        %v1678 = vunpack.c.l.b16 %v1351
        %v1679 = vunpack.c.h.b16 %v1351
        %v1680 = vunpack.c.l.b16 %v1352
        %v1681 = vunpack.c.h.b16 %v1352
        %v1682 = vunpack.c.l.b16 %v1353
        %v1683 = vunpack.c.h.b16 %v1353
        %v1684 = vunpack.c.l.b16 %v1354
        %v1685 = vunpack.c.h.b16 %v1354
        %v1686 = vunpack.c.l.b16 %v1355
        %v1687 = vunpack.c.h.b16 %v1355
        %v1688 = vunpack.c.l.b16 %v1356
        %v1689 = vunpack.c.h.b16 %v1356
        %v1690 = vunpack.c.l.b16 %v1357
        %v1691 = vunpack.c.h.b16 %v1357
        %v1692 = vunpack.c.l.b16 %v1358
        %v1693 = vunpack.c.h.b16 %v1358
        %v1694 = vunpack.c.l.b16 %v1359
        %v1695 = vunpack.c.h.b16 %v1359
        %v1696 = vunpack.c.l.b16 %v1360
        %v1697 = vunpack.c.h.b16 %v1360
        %v1698 = vunpack.c.l.b16 %v1361
        %v1699 = vunpack.c.h.b16 %v1361
        %v1700 = vunpack.c.l.b16 %v1362
        %v1701 = vunpack.c.h.b16 %v1362
        %v1702 = vunpack.c.l.b16 %v1363
        %v1703 = vunpack.c.h.b16 %v1363
        %v1704 = vunpack.c.l.b16 %v1364
        %v1705 = vunpack.c.h.b16 %v1364
        %v1706 = vunpack.c.l.b16 %v1365
        %v1707 = vunpack.c.h.b16 %v1365
        %v1708 = vunpack.c.l.b16 %v1366
        %v1709 = vunpack.c.h.b16 %v1366
        %v1710 = vunpack.c.l.b16 %v1367
        %v1711 = vunpack.c.h.b16 %v1367
        %v1712 = vunpack.c.l.b16 %v1368
        %v1713 = vunpack.c.h.b16 %v1368
        %v1714 = vunpack.c.l.b16 %v1369
        %v1715 = vunpack.c.h.b16 %v1369
        %v1716 = vunpack.c.l.b16 %v1370
        %v1717 = vunpack.c.h.b16 %v1370
        %v1718 = vunpack.c.l.b16 %v1371
        %v1719 = vunpack.c.h.b16 %v1371
        %v1720 = vunpack.c.l.b16 %v1372
        %v1721 = vunpack.c.h.b16 %v1372
        %v1722 = vunpack.c.l.b16 %v1373
        %v1723 = vunpack.c.h.b16 %v1373
        %v1724 = vunpack.c.l.b16 %v1374
        %v1725 = vunpack.c.h.b16 %v1374
        %v1726 = vunpack.c.l.b16 %v1375
        %v1727 = vunpack.c.h.b16 %v1375
        %v1728 = vunpack.c.l.b16 %v1376
        %v1729 = vunpack.c.h.b16 %v1376
        %v1730 = vunpack.c.l.b16 %v1377
        %v1731 = vunpack.c.h.b16 %v1377
        %v1732 = vunpack.c.l.b16 %v1378
        %v1733 = vunpack.c.h.b16 %v1378
        %v1734 = vunpack.c.l.b16 %v1379
        %v1735 = vunpack.c.h.b16 %v1379
        %v1736 = vunpack.c.l.b16 %v1380
        %v1737 = vunpack.c.h.b16 %v1380
        %v1738 = vunpack.c.l.b16 %v1381
        %v1739 = vunpack.c.h.b16 %v1381
        %v1740 = vunpack.c.l.b16 %v1382
        %v1741 = vunpack.c.h.b16 %v1382
        %v1742 = vunpack.c.l.b16 %v1383
        %v1743 = vunpack.c.h.b16 %v1383
        %v1744 = vunpack.c.l.b16 %v1384
        %v1745 = vunpack.c.h.b16 %v1384
        %v1746 = vunpack.c.l.b16 %v1385
        %v1747 = vunpack.c.h.b16 %v1385
        %v1748 = vunpack.c.l.b16 %v1386
        %v1749 = vunpack.c.h.b16 %v1386
        %v1750 = vunpack.c.l.b16 %v1387
        %v1751 = vunpack.c.h.b16 %v1387
        %v1752 = vunpack.c.l.b16 %v1388
        %v1753 = vunpack.c.h.b16 %v1388
        %v1754 = vunpack.c.l.b16 %v1389
        %v1755 = vunpack.c.h.b16 %v1389
        %v1756 = vunpack.c.l.b16 %v1390
        %v1757 = vunpack.c.h.b16 %v1390
        %v1758 = vunpack.c.l.b16 %v1391
        %v1759 = vunpack.c.h.b16 %v1391
        %v1760 = vunpack.c.l.b16 %v1392
        %v1761 = vunpack.c.h.b16 %v1392
        %v1762 = vunpack.c.l.b16 %v1393
        %v1763 = vunpack.c.h.b16 %v1393
        %v1764 = vunpack.c.l.b16 %v1394
        %v1765 = vunpack.c.h.b16 %v1394
        %v1766 = vunpack.c.l.b16 %v1395
        %v1767 = vunpack.c.h.b16 %v1395
        %v1768 = vunpack.c.l.b16 %v1396
        %v1769 = vunpack.c.h.b16 %v1396
        %v1770 = vunpack.c.l.b16 %v1397
        %v1771 = vunpack.c.h.b16 %v1397
        %v1772 = vunpack.c.l.b16 %v1398
        %v1773 = vunpack.c.h.b16 %v1398
        %v1774 = vunpack.c.l.b16 %v1399
        %v1775 = vunpack.c.h.b16 %v1399
        %v1776 = vunpack.c.l.b16 %v1400
        %v1777 = vunpack.c.h.b16 %v1400
        %v1778 = vunpack.c.l.b16 %v1401
        %v1779 = vunpack.c.h.b16 %v1401
        %v1780 = vunpack.c.l.b16 %v1402
        %v1781 = vunpack.c.h.b16 %v1402
        %v1782 = vunpack.c.l.b16 %v1403
        %v1783 = vunpack.c.h.b16 %v1403
        %v1784 = vunpack.c.l.b16 %v1404
        %v1785 = vunpack.c.h.b16 %v1404
        %v1786 = vunpack.c.l.b16 %v1405
        %v1787 = vunpack.c.h.b16 %v1405
        %v1788 = vunpack.c.l.b16 %v1406
        %v1789 = vunpack.c.h.b16 %v1406
        %v1790 = vunpack.c.l.b16 %v1407
        %v1791 = vunpack.c.h.b16 %v1407
        %v1792 = vunpack.c.l.b16 %v1408
        %v1793 = vunpack.c.h.b16 %v1408
        %v1794 = vunpack.c.l.b16 %v1409
        %v1795 = vunpack.c.h.b16 %v1409
        %v1796 = vunpack.c.l.b16 %v1410
        %v1797 = vunpack.c.h.b16 %v1410
        %v1798 = vunpack.c.l.b16 %v1411
        %v1799 = vunpack.c.h.b16 %v1411
        %v1800 = vunpack.c.l.b16 %v1412
        %v1801 = vunpack.c.h.b16 %v1412
        %v1802 = vunpack.c.l.b16 %v1413
        %v1803 = vunpack.c.h.b16 %v1413
        %v1804 = vunpack.c.l.b16 %v1414
        %v1805 = vunpack.c.h.b16 %v1414
        %v1806 = vunpack.c.l.b16 %v1415
        %v1807 = vunpack.c.h.b16 %v1415
        %v1808 = vunpack.c.l.b16 %v1416
        %v1809 = vunpack.c.h.b16 %v1416
        %v1810 = vunpack.c.l.b16 %v1417
        %v1811 = vunpack.c.h.b16 %v1417
        %v1812 = vpack.c.b16 %v1560, %v1556
        %v1813 = vpack.c.b16 %v1561, %v1557
        %v1814 = vpack.c.b16 %v1562, %v1558
        %v1815 = vpack.c.b16 %v1563, %v1559
        %v1816 = vpack.c.b16 %v1568, %v1564
        %v1817 = vpack.c.b16 %v1569, %v1565
        %v1818 = vpack.c.b16 %v1570, %v1566
        %v1819 = vpack.c.b16 %v1571, %v1567
        %v1820 = vpack.c.b16 %v1576, %v1572
        %v1821 = vpack.c.b16 %v1577, %v1573
        %v1822 = vpack.c.b16 %v1578, %v1574
        %v1823 = vpack.c.b16 %v1579, %v1575
        %v1824 = vpack.c.b16 %v1584, %v1580
        %v1825 = vpack.c.b16 %v1585, %v1581
        %v1826 = vpack.c.b16 %v1586, %v1582
        %v1827 = vpack.c.b16 %v1587, %v1583
        %v1828 = vpack.c.b16 %v1592, %v1588
        %v1829 = vpack.c.b16 %v1593, %v1589
        %v1830 = vpack.c.b16 %v1594, %v1590
        %v1831 = vpack.c.b16 %v1595, %v1591
        %v1832 = vpack.c.b16 %v1600, %v1596
        %v1833 = vpack.c.b16 %v1601, %v1597
        %v1834 = vpack.c.b16 %v1602, %v1598
        %v1835 = vpack.c.b16 %v1603, %v1599
        %v1836 = vpack.c.b16 %v1608, %v1604
        %v1837 = vpack.c.b16 %v1609, %v1605
        %v1838 = vpack.c.b16 %v1610, %v1606
        %v1839 = vpack.c.b16 %v1611, %v1607
        %v1840 = vpack.c.b16 %v1616, %v1612
        %v1841 = vpack.c.b16 %v1617, %v1613
        %v1842 = vpack.c.b16 %v1618, %v1614
        %v1843 = vpack.c.b16 %v1619, %v1615
        %v1844 = vpack.c.b16 %v1624, %v1620
        %v1845 = vpack.c.b16 %v1625, %v1621
        %v1846 = vpack.c.b16 %v1626, %v1622
        %v1847 = vpack.c.b16 %v1627, %v1623
        %v1848 = vpack.c.b16 %v1632, %v1628
        %v1849 = vpack.c.b16 %v1633, %v1629
        %v1850 = vpack.c.b16 %v1634, %v1630
        %v1851 = vpack.c.b16 %v1635, %v1631
        %v1852 = vpack.c.b16 %v1640, %v1636
        %v1853 = vpack.c.b16 %v1641, %v1637
        %v1854 = vpack.c.b16 %v1642, %v1638
        %v1855 = vpack.c.b16 %v1643, %v1639
        %v1856 = vpack.c.b16 %v1648, %v1644
        %v1857 = vpack.c.b16 %v1649, %v1645
        %v1858 = vpack.c.b16 %v1650, %v1646
        %v1859 = vpack.c.b16 %v1651, %v1647
        %v1860 = vpack.c.b16 %v1656, %v1652
        %v1861 = vpack.c.b16 %v1657, %v1653
        %v1862 = vpack.c.b16 %v1658, %v1654
        %v1863 = vpack.c.b16 %v1659, %v1655
        %v1864 = vpack.c.b16 %v1664, %v1660
        %v1865 = vpack.c.b16 %v1665, %v1661
        %v1866 = vpack.c.b16 %v1666, %v1662
        %v1867 = vpack.c.b16 %v1667, %v1663
        %v1868 = vpack.c.b16 %v1672, %v1668
        %v1869 = vpack.c.b16 %v1673, %v1669
        %v1870 = vpack.c.b16 %v1674, %v1670
        %v1871 = vpack.c.b16 %v1675, %v1671
        %v1872 = vpack.c.b16 %v1680, %v1676
        %v1873 = vpack.c.b16 %v1681, %v1677
        %v1874 = vpack.c.b16 %v1682, %v1678
        %v1875 = vpack.c.b16 %v1683, %v1679
        %v1876 = vpack.c.b16 %v1688, %v1684
        %v1877 = vpack.c.b16 %v1689, %v1685
        %v1878 = vpack.c.b16 %v1690, %v1686
        %v1879 = vpack.c.b16 %v1691, %v1687
        %v1880 = vpack.c.b16 %v1696, %v1692
        %v1881 = vpack.c.b16 %v1697, %v1693
        %v1882 = vpack.c.b16 %v1698, %v1694
        %v1883 = vpack.c.b16 %v1699, %v1695
        %v1884 = vpack.c.b16 %v1704, %v1700
        %v1885 = vpack.c.b16 %v1705, %v1701
        %v1886 = vpack.c.b16 %v1706, %v1702
        %v1887 = vpack.c.b16 %v1707, %v1703
        %v1888 = vpack.c.b16 %v1712, %v1708
        %v1889 = vpack.c.b16 %v1713, %v1709
        %v1890 = vpack.c.b16 %v1714, %v1710
        %v1891 = vpack.c.b16 %v1715, %v1711
        %v1892 = vpack.c.b16 %v1720, %v1716
        %v1893 = vpack.c.b16 %v1721, %v1717
        %v1894 = vpack.c.b16 %v1722, %v1718
        %v1895 = vpack.c.b16 %v1723, %v1719
        %v1896 = vpack.c.b16 %v1728, %v1724
        %v1897 = vpack.c.b16 %v1729, %v1725
        %v1898 = vpack.c.b16 %v1730, %v1726
        %v1899 = vpack.c.b16 %v1731, %v1727
        %v1900 = vpack.c.b16 %v1736, %v1732
        %v1901 = vpack.c.b16 %v1737, %v1733
        %v1902 = vpack.c.b16 %v1738, %v1734
        %v1903 = vpack.c.b16 %v1739, %v1735
        %v1904 = vpack.c.b16 %v1744, %v1740
        %v1905 = vpack.c.b16 %v1745, %v1741
        %v1906 = vpack.c.b16 %v1746, %v1742
        %v1907 = vpack.c.b16 %v1747, %v1743
        %v1908 = vpack.c.b16 %v1752, %v1748
        %v1909 = vpack.c.b16 %v1753, %v1749
        %v1910 = vpack.c.b16 %v1754, %v1750
        %v1911 = vpack.c.b16 %v1755, %v1751
        %v1912 = vpack.c.b16 %v1760, %v1756
        %v1913 = vpack.c.b16 %v1761, %v1757
        %v1914 = vpack.c.b16 %v1762, %v1758
        %v1915 = vpack.c.b16 %v1763, %v1759
        %v1916 = vpack.c.b16 %v1768, %v1764
        %v1917 = vpack.c.b16 %v1769, %v1765
        %v1918 = vpack.c.b16 %v1770, %v1766
        %v1919 = vpack.c.b16 %v1771, %v1767
        %v1920 = vpack.c.b16 %v1776, %v1772
        %v1921 = vpack.c.b16 %v1777, %v1773
        %v1922 = vpack.c.b16 %v1778, %v1774
        %v1923 = vpack.c.b16 %v1779, %v1775
        %v1924 = vpack.c.b16 %v1784, %v1780
        %v1925 = vpack.c.b16 %v1785, %v1781
        %v1926 = vpack.c.b16 %v1786, %v1782
        %v1927 = vpack.c.b16 %v1787, %v1783
        %v1928 = vpack.c.b16 %v1792, %v1788
        %v1929 = vpack.c.b16 %v1793, %v1789
        %v1930 = vpack.c.b16 %v1794, %v1790
        %v1931 = vpack.c.b16 %v1795, %v1791
        %v1932 = vpack.c.b16 %v1800, %v1796
        %v1933 = vpack.c.b16 %v1801, %v1797
        %v1934 = vpack.c.b16 %v1802, %v1798
        %v1935 = vpack.c.b16 %v1803, %v1799
        %v1936 = vpack.c.b16 %v1808, %v1804
        %v1937 = vpack.c.b16 %v1809, %v1805
        %v1938 = vpack.c.b16 %v1810, %v1806
        %v1939 = vpack.c.b16 %v1811, %v1807
        %2068 = vmatpush.bf16.msra.mxu0 %v1840
        %2069 = vmatpush.bf16.msra.mxu0 %v1836
        %2070 = vmatpush.bf16.msra.mxu0 %v1832
        %2071 = vmatpush.bf16.msra.mxu0 %v1828
        %2072 = vmatpush.bf16.msra.mxu0 %v1824
        %2073 = vmatpush.bf16.msra.mxu0 %v1820
        %2074 = vmatpush.bf16.msra.mxu0 %v1816
        %2075 = vmatpush.bf16.msra.mxu0 %v1812
        %2076 = vmatmul.bf16.gmra.mxu0 %v1286
        %v2077 = vpop.f32.mrf.mxu0
        %v2078 = vadd.f32 %v1420, %v2077
        %v2079 = vpop.f32.mrf.mxu0
        %2080 = vdwg.mxu0
        %2081 = vmatpush.bf16.msra.mxu0 %v1872
        %2082 = vmatpush.bf16.msra.mxu0 %v1868
        %2083 = vmatpush.bf16.msra.mxu0 %v1864
        %2084 = vmatpush.bf16.msra.mxu0 %v1860
        %2085 = vmatpush.bf16.msra.mxu0 %v1856
        %2086 = vmatpush.bf16.msra.mxu0 %v1852
        %2087 = vmatpush.bf16.msra.mxu0 %v1848
        %2088 = vmatpush.bf16.msra.mxu0 %v1844
        %2089 = vmatmul.bf16.gmra.mxu0 %v1287
        %v2090 = vpop.f32.mrf.mxu0
        %v2091 = vadd.f32 %v2078, %v2090
        %v2092 = vpop.f32.mrf.mxu0
        %2093 = vdwg.mxu0
        %2094 = vmatpush.bf16.msra.mxu0 %v1904
        %2095 = vmatpush.bf16.msra.mxu0 %v1900
        %2096 = vmatpush.bf16.msra.mxu0 %v1896
        %2097 = vmatpush.bf16.msra.mxu0 %v1892
        %2098 = vmatpush.bf16.msra.mxu0 %v1888
        %2099 = vmatpush.bf16.msra.mxu0 %v1884
        %2100 = vmatpush.bf16.msra.mxu0 %v1880
        %2101 = vmatpush.bf16.msra.mxu0 %v1876
        %2102 = vmatmul.bf16.gmra.mxu0 %v1288
        %v2103 = vpop.f32.mrf.mxu0
        %v2104 = vadd.f32 %v2091, %v2103
        %v2105 = vpop.f32.mrf.mxu0
        %2106 = vdwg.mxu0
        %2107 = vmatpush.bf16.msra.mxu0 %v1936
        %2108 = vmatpush.bf16.msra.mxu0 %v1932
        %2109 = vmatpush.bf16.msra.mxu0 %v1928
        %2110 = vmatpush.bf16.msra.mxu0 %v1924
        %2111 = vmatpush.bf16.msra.mxu0 %v1920
        %2112 = vmatpush.bf16.msra.mxu0 %v1916
        %2113 = vmatpush.bf16.msra.mxu0 %v1912
        %2114 = vmatpush.bf16.msra.mxu0 %v1908
        %2115 = vmatmul.bf16.gmra.mxu0 %v1289
        %v2116 = vpop.f32.mrf.mxu0
        %v2117 = vadd.f32 %v2104, %v2116
        %v2118 = vpop.f32.mrf.mxu0
        %2119 = vdwg.mxu0
        %2120 = vmatpush.bf16.msra.mxu0 %v1841
        %2121 = vmatpush.bf16.msra.mxu0 %v1837
        %2122 = vmatpush.bf16.msra.mxu0 %v1833
        %2123 = vmatpush.bf16.msra.mxu0 %v1829
        %2124 = vmatpush.bf16.msra.mxu0 %v1825
        %2125 = vmatpush.bf16.msra.mxu0 %v1821
        %2126 = vmatpush.bf16.msra.mxu0 %v1817
        %2127 = vmatpush.bf16.msra.mxu0 %v1813
        %2128 = vmatmul.bf16.gmra.mxu0 %v1286
        %v2129 = vpop.f32.mrf.mxu0
        %v2130 = vadd.f32 %v1421, %v2129
        %v2131 = vpop.f32.mrf.mxu0
        %2132 = vdwg.mxu0
        %2133 = vmatpush.bf16.msra.mxu0 %v1873
        %2134 = vmatpush.bf16.msra.mxu0 %v1869
        %2135 = vmatpush.bf16.msra.mxu0 %v1865
        %2136 = vmatpush.bf16.msra.mxu0 %v1861
        %2137 = vmatpush.bf16.msra.mxu0 %v1857
        %2138 = vmatpush.bf16.msra.mxu0 %v1853
        %2139 = vmatpush.bf16.msra.mxu0 %v1849
        %2140 = vmatpush.bf16.msra.mxu0 %v1845
        %2141 = vmatmul.bf16.gmra.mxu0 %v1287
        %v2142 = vpop.f32.mrf.mxu0
        %v2143 = vadd.f32 %v2130, %v2142
        %v2144 = vpop.f32.mrf.mxu0
        %2145 = vdwg.mxu0
        %2146 = vmatpush.bf16.msra.mxu0 %v1905
        %2147 = vmatpush.bf16.msra.mxu0 %v1901
        %2148 = vmatpush.bf16.msra.mxu0 %v1897
        %2149 = vmatpush.bf16.msra.mxu0 %v1893
        %2150 = vmatpush.bf16.msra.mxu0 %v1889
        %2151 = vmatpush.bf16.msra.mxu0 %v1885
        %2152 = vmatpush.bf16.msra.mxu0 %v1881
        %2153 = vmatpush.bf16.msra.mxu0 %v1877
        %2154 = vmatmul.bf16.gmra.mxu0 %v1288
        %v2155 = vpop.f32.mrf.mxu0
        %v2156 = vadd.f32 %v2143, %v2155
        %v2157 = vpop.f32.mrf.mxu0
        %2158 = vdwg.mxu0
        %2159 = vmatpush.bf16.msra.mxu0 %v1937
        %2160 = vmatpush.bf16.msra.mxu0 %v1933
        %2161 = vmatpush.bf16.msra.mxu0 %v1929
        %2162 = vmatpush.bf16.msra.mxu0 %v1925
        %2163 = vmatpush.bf16.msra.mxu0 %v1921
        %2164 = vmatpush.bf16.msra.mxu0 %v1917
        %2165 = vmatpush.bf16.msra.mxu0 %v1913
        %2166 = vmatpush.bf16.msra.mxu0 %v1909
        %2167 = vmatmul.bf16.gmra.mxu0 %v1289
        %v2168 = vpop.f32.mrf.mxu0
        %v2169 = vadd.f32 %v2156, %v2168
        %v2170 = vpop.f32.mrf.mxu0
        %2171 = vdwg.mxu0
        %2172 = vmatpush.bf16.msra.mxu0 %v1842
        %2173 = vmatpush.bf16.msra.mxu0 %v1838
        %2174 = vmatpush.bf16.msra.mxu0 %v1834
        %2175 = vmatpush.bf16.msra.mxu0 %v1830
        %2176 = vmatpush.bf16.msra.mxu0 %v1826
        %2177 = vmatpush.bf16.msra.mxu0 %v1822
        %2178 = vmatpush.bf16.msra.mxu0 %v1818
        %2179 = vmatpush.bf16.msra.mxu0 %v1814
        %2180 = vmatmul.bf16.gmra.mxu0 %v1286
        %v2181 = vpop.f32.mrf.mxu0
        %v2182 = vadd.f32 %v1422, %v2181
        %v2183 = vpop.f32.mrf.mxu0
        %2184 = vdwg.mxu0
        %2185 = vmatpush.bf16.msra.mxu0 %v1874
        %2186 = vmatpush.bf16.msra.mxu0 %v1870
        %2187 = vmatpush.bf16.msra.mxu0 %v1866
        %2188 = vmatpush.bf16.msra.mxu0 %v1862
        %2189 = vmatpush.bf16.msra.mxu0 %v1858
        %2190 = vmatpush.bf16.msra.mxu0 %v1854
        %2191 = vmatpush.bf16.msra.mxu0 %v1850
        %2192 = vmatpush.bf16.msra.mxu0 %v1846
        %2193 = vmatmul.bf16.gmra.mxu0 %v1287
        %v2194 = vpop.f32.mrf.mxu0
        %v2195 = vadd.f32 %v2182, %v2194
        %v2196 = vpop.f32.mrf.mxu0
        %2197 = vdwg.mxu0
        %2198 = vmatpush.bf16.msra.mxu0 %v1906
        %2199 = vmatpush.bf16.msra.mxu0 %v1902
        %2200 = vmatpush.bf16.msra.mxu0 %v1898
        %2201 = vmatpush.bf16.msra.mxu0 %v1894
        %2202 = vmatpush.bf16.msra.mxu0 %v1890
        %2203 = vmatpush.bf16.msra.mxu0 %v1886
        %2204 = vmatpush.bf16.msra.mxu0 %v1882
        %2205 = vmatpush.bf16.msra.mxu0 %v1878
        %2206 = vmatmul.bf16.gmra.mxu0 %v1288
        %v2207 = vpop.f32.mrf.mxu0
        %v2208 = vadd.f32 %v2195, %v2207
        %v2209 = vpop.f32.mrf.mxu0
        %2210 = vdwg.mxu0
        %2211 = vmatpush.bf16.msra.mxu0 %v1938
        %2212 = vmatpush.bf16.msra.mxu0 %v1934
        %2213 = vmatpush.bf16.msra.mxu0 %v1930
        %2214 = vmatpush.bf16.msra.mxu0 %v1926
        %2215 = vmatpush.bf16.msra.mxu0 %v1922
        %2216 = vmatpush.bf16.msra.mxu0 %v1918
        %2217 = vmatpush.bf16.msra.mxu0 %v1914
        %2218 = vmatpush.bf16.msra.mxu0 %v1910
        %2219 = vmatmul.bf16.gmra.mxu0 %v1289
        %v2220 = vpop.f32.mrf.mxu0
        %v2221 = vadd.f32 %v2208, %v2220
        %v2222 = vpop.f32.mrf.mxu0
        %2223 = vdwg.mxu0
        %2224 = vmatpush.bf16.msra.mxu0 %v1843
        %2225 = vmatpush.bf16.msra.mxu0 %v1839
        %2226 = vmatpush.bf16.msra.mxu0 %v1835
        %2227 = vmatpush.bf16.msra.mxu0 %v1831
        %2228 = vmatpush.bf16.msra.mxu0 %v1827
        %2229 = vmatpush.bf16.msra.mxu0 %v1823
        %2230 = vmatpush.bf16.msra.mxu0 %v1819
        %2231 = vmatpush.bf16.msra.mxu0 %v1815
        %2232 = vmatmul.bf16.gmra.mxu0 %v1286
        %v2233 = vpop.f32.mrf.mxu0
        %v2234 = vadd.f32 %v1423, %v2233
        %v2235 = vpop.f32.mrf.mxu0
        %2236 = vdwg.mxu0
        %2237 = vmatpush.bf16.msra.mxu0 %v1875
        %2238 = vmatpush.bf16.msra.mxu0 %v1871
        %2239 = vmatpush.bf16.msra.mxu0 %v1867
        %2240 = vmatpush.bf16.msra.mxu0 %v1863
        %2241 = vmatpush.bf16.msra.mxu0 %v1859
        %2242 = vmatpush.bf16.msra.mxu0 %v1855
        %2243 = vmatpush.bf16.msra.mxu0 %v1851
        %2244 = vmatpush.bf16.msra.mxu0 %v1847
        %2245 = vmatmul.bf16.gmra.mxu0 %v1287
        %v2246 = vpop.f32.mrf.mxu0
        %v2247 = vadd.f32 %v2234, %v2246
        %v2248 = vpop.f32.mrf.mxu0
        %2249 = vdwg.mxu0
        %2250 = vmatpush.bf16.msra.mxu0 %v1907
        %2251 = vmatpush.bf16.msra.mxu0 %v1903
        %2252 = vmatpush.bf16.msra.mxu0 %v1899
        %2253 = vmatpush.bf16.msra.mxu0 %v1895
        %2254 = vmatpush.bf16.msra.mxu0 %v1891
        %2255 = vmatpush.bf16.msra.mxu0 %v1887
        %2256 = vmatpush.bf16.msra.mxu0 %v1883
        %2257 = vmatpush.bf16.msra.mxu0 %v1879
        %2258 = vmatmul.bf16.gmra.mxu0 %v1288
        %v2259 = vpop.f32.mrf.mxu0
        %v2260 = vadd.f32 %v2247, %v2259
        %v2261 = vpop.f32.mrf.mxu0
        %2262 = vdwg.mxu0
        %2263 = vmatpush.bf16.msra.mxu0 %v1939
        %2264 = vmatpush.bf16.msra.mxu0 %v1935
        %2265 = vmatpush.bf16.msra.mxu0 %v1931
        %2266 = vmatpush.bf16.msra.mxu0 %v1927
        %2267 = vmatpush.bf16.msra.mxu0 %v1923
        %2268 = vmatpush.bf16.msra.mxu0 %v1919
        %2269 = vmatpush.bf16.msra.mxu0 %v1915
        %2270 = vmatpush.bf16.msra.mxu0 %v1911
        %2271 = vmatmul.bf16.gmra.mxu0 %v1289
        %v2272 = vpop.f32.mrf.mxu0
        %v2273 = vadd.f32 %v2260, %v2272
        %v2274 = vpop.f32.mrf.mxu0
        %2275 = vdwg.mxu0
        %v2276 = vld [vmem:[%s19] sm:$0xf]
        %v2277 = vld [vmem:[%s21] sm:$0xf]
        %v2278 = vsel %vm1166, %v2117, 0.0
        %v2279 = vsel %vm1166, %v2169, 0.0
        %v2280 = vadd.f32 %v2278, %v2279
        %v2281 = vsel %vm1166, %v2221, 0.0
        %v2282 = vadd.f32 %v2280, %v2281
        %v2283 = vsel %vm1166, %v2273, 0.0
        %v2284 = vadd.f32 %v2282, %v2283
        %2285 = vadd.xlane.f32.xlu0 %v2284
        %v2286 = vpop.xlane.xlu0 %2285
        %v2287 = vmul.f32 %v2286, %v1201
        %v2288 = vsub.f32 %v2117, %v2287
        %v2289 = vsub.f32 %v2169, %v2287
        %v2290 = vsub.f32 %v2221, %v2287
        %v2291 = vsub.f32 %v2273, %v2287
        %v2292 = vmul.f32 %v2288, %v2288
        %v2293 = vmul.f32 %v2289, %v2289
        %v2294 = vmul.f32 %v2290, %v2290
        %v2295 = vmul.f32 %v2291, %v2291
        %v2296 = vsel %vm1166, %v2292, 0.0
        %v2297 = vsel %vm1166, %v2293, 0.0
        %v2298 = vadd.f32 %v2296, %v2297
        %v2299 = vsel %vm1166, %v2294, 0.0
        %v2300 = vadd.f32 %v2298, %v2299
        %v2301 = vsel %vm1166, %v2295, 0.0
        %v2302 = vadd.f32 %v2300, %v2301
        %2303 = vadd.xlane.f32.xlu0 %v2302
        %v2304 = vpop.xlane.xlu0 %2303
        %v2305 = vmul.f32 %v2304, %v1201
        %v2306 = vadd.f32 %v2305, 1e-05
        %v2307 = vrsqrt.pop %v2306
        %v2308 = vmul.f32 %v2307, %v2306
        %v2309 = vmul.f32 %v2308, %v2307
        %v2310 = vmul.f32 0.5, %v2309
        %v2311 = vsub.f32 1.5, %v2310
        %v2312 = vmul.f32 %v2307, %v2311
        %vm2313 = vweird.f32 %v2306
        %vm2314 = vweird.f32 %v2307
        %vm2315 = vmor %vm2313, %vm2314
        %v2316 = vsel %vm2315, %v2307, %v2312
        %v2317 = vmul.f32 %v2288, %v2316
        %v2318 = vmul.f32 %v2289, %v2316
        %v2319 = vmul.f32 %v2290, %v2316
        %v2320 = vmul.f32 %v2291, %v2316
        %v2322 = vperm.slane %v2276, 0
        %v2323 = vperm.slane %v2276, 1
        %v2324 = vperm.slane %v2276, 2
        %v2325 = vperm.slane %v2276, 3
        %v2330 = vmul.f32 %v2317, %v2322
        %v2331 = vmul.f32 %v2318, %v2323
        %v2332 = vmul.f32 %v2319, %v2324
        %v2333 = vmul.f32 %v2320, %v2325
        %v2335 = vperm.slane %v2277, 0
        %v2336 = vperm.slane %v2277, 1
        %v2337 = vperm.slane %v2277, 2
        %v2338 = vperm.slane %v2277, 3
        %v2343 = vadd.f32 %v2330, %v2335
        %v2344 = vadd.f32 %v2331, %v2336
        %v2345 = vadd.f32 %v2332, %v2337
        %v2346 = vadd.f32 %v2333, %v2338
        %v2347 = vmax.f32 %v2343, 0.0
        %v2348 = vmax.f32 %v2344, 0.0
        %v2349 = vmax.f32 %v2345, 0.0
        %v2350 = vmax.f32 %v2346, 0.0
        %v2351 = vpack.c.bf16 %v2347, %v2347
        %v2352 = vpack.c.bf16 %v2348, %v2348
        %v2353 = vpack.c.bf16 %v2349, %v2349
        %v2354 = vpack.c.bf16 %v2350, %v2350
        %v2355 = vld [vmem:[#allocation9] sm:$0xff]
        %v2356 = vld [vmem:[#allocation9 + $0x8] sm:$0xff]
        %v2357 = vld [vmem:[#allocation9 + $0x10] sm:$0xff]
        %v2358 = vld [vmem:[#allocation9 + $0x18] sm:$0xff]
        %v2359 = vld [vmem:[#allocation9 + $0x20] sm:$0xff]
        %v2360 = vld [vmem:[#allocation9 + $0x28] sm:$0xff]
        %v2361 = vld [vmem:[#allocation9 + $0x30] sm:$0xff]
        %v2362 = vld [vmem:[#allocation9 + $0x38] sm:$0xff]
        %v2363 = vld [vmem:[#allocation9 + $0x40] sm:$0xff]
        %v2364 = vld [vmem:[#allocation9 + $0x48] sm:$0xff]
        %v2365 = vld [vmem:[#allocation9 + $0x50] sm:$0xff]
        %v2366 = vld [vmem:[#allocation9 + $0x58] sm:$0xff]
        %v2367 = vld [vmem:[#allocation9 + $0x60] sm:$0xff]
        %v2368 = vld [vmem:[#allocation9 + $0x68] sm:$0xff]
        %v2369 = vld [vmem:[#allocation9 + $0x70] sm:$0xff]
        %v2370 = vld [vmem:[#allocation9 + $0x78] sm:$0xff]
        %v2371 = vld [vmem:[#allocation9 + $0x80] sm:$0xff]
        %v2372 = vld [vmem:[#allocation9 + $0x88] sm:$0xff]
        %v2373 = vld [vmem:[#allocation9 + $0x90] sm:$0xff]
        %v2374 = vld [vmem:[#allocation9 + $0x98] sm:$0xff]
        %v2375 = vld [vmem:[#allocation9 + $0xa0] sm:$0xff]
        %v2376 = vld [vmem:[#allocation9 + $0xa8] sm:$0xff]
        %v2377 = vld [vmem:[#allocation9 + $0xb0] sm:$0xff]
        %v2378 = vld [vmem:[#allocation9 + $0xb8] sm:$0xff]
        %v2379 = vld [vmem:[#allocation9 + $0xc0] sm:$0xff]
        %v2380 = vld [vmem:[#allocation9 + $0xc8] sm:$0xff]
        %v2381 = vld [vmem:[#allocation9 + $0xd0] sm:$0xff]
        %v2382 = vld [vmem:[#allocation9 + $0xd8] sm:$0xff]
        %v2383 = vld [vmem:[#allocation9 + $0xe0] sm:$0xff]
        %v2384 = vld [vmem:[#allocation9 + $0xe8] sm:$0xff]
        %v2385 = vld [vmem:[#allocation9 + $0xf0] sm:$0xff]
        %v2386 = vld [vmem:[#allocation9 + $0xf8] sm:$0xff]
        %v2387 = vld [vmem:[#allocation9 + $0x100] sm:$0xff]
        %v2388 = vld [vmem:[#allocation9 + $0x108] sm:$0xff]
        %v2389 = vld [vmem:[#allocation9 + $0x110] sm:$0xff]
        %v2390 = vld [vmem:[#allocation9 + $0x118] sm:$0xff]
        %v2391 = vld [vmem:[#allocation9 + $0x120] sm:$0xff]
        %v2392 = vld [vmem:[#allocation9 + $0x128] sm:$0xff]
        %v2393 = vld [vmem:[#allocation9 + $0x130] sm:$0xff]
        %v2394 = vld [vmem:[#allocation9 + $0x138] sm:$0xff]
        %v2395 = vld [vmem:[#allocation9 + $0x140] sm:$0xff]
        %v2396 = vld [vmem:[#allocation9 + $0x148] sm:$0xff]
        %v2397 = vld [vmem:[#allocation9 + $0x150] sm:$0xff]
        %v2398 = vld [vmem:[#allocation9 + $0x158] sm:$0xff]
        %v2399 = vld [vmem:[#allocation9 + $0x160] sm:$0xff]
        %v2400 = vld [vmem:[#allocation9 + $0x168] sm:$0xff]
        %v2401 = vld [vmem:[#allocation9 + $0x170] sm:$0xff]
        %v2402 = vld [vmem:[#allocation9 + $0x178] sm:$0xff]
        %v2403 = vld [vmem:[#allocation9 + $0x180] sm:$0xff]
        %v2404 = vld [vmem:[#allocation9 + $0x188] sm:$0xff]
        %v2405 = vld [vmem:[#allocation9 + $0x190] sm:$0xff]
        %v2406 = vld [vmem:[#allocation9 + $0x198] sm:$0xff]
        %v2407 = vld [vmem:[#allocation9 + $0x1a0] sm:$0xff]
        %v2408 = vld [vmem:[#allocation9 + $0x1a8] sm:$0xff]
        %v2409 = vld [vmem:[#allocation9 + $0x1b0] sm:$0xff]
        %v2410 = vld [vmem:[#allocation9 + $0x1b8] sm:$0xff]
        %v2411 = vld [vmem:[#allocation9 + $0x1c0] sm:$0xff]
        %v2412 = vld [vmem:[#allocation9 + $0x1c8] sm:$0xff]
        %v2413 = vld [vmem:[#allocation9 + $0x1d0] sm:$0xff]
        %v2414 = vld [vmem:[#allocation9 + $0x1d8] sm:$0xff]
        %v2415 = vld [vmem:[#allocation9 + $0x1e0] sm:$0xff]
        %v2416 = vld [vmem:[#allocation9 + $0x1e8] sm:$0xff]
        %v2417 = vld [vmem:[#allocation9 + $0x1f0] sm:$0xff]
        %v2418 = vld [vmem:[#allocation9 + $0x1f8] sm:$0xff]
        %v2419 = vld [vmem:[%s25] sm:$0x3]
        %v2421 = vperm.slane %v2419, 0
        %v2422 = vperm.slane %v2419, 1
        %v2489 = vunpack.c.l.b16 %v2355
        %v2490 = vunpack.c.h.b16 %v2355
        %v2491 = vunpack.c.l.b16 %v2356
        %v2492 = vunpack.c.h.b16 %v2356
        %v2493 = vunpack.c.l.b16 %v2357
        %v2494 = vunpack.c.h.b16 %v2357
        %v2495 = vunpack.c.l.b16 %v2358
        %v2496 = vunpack.c.h.b16 %v2358
        %v2497 = vunpack.c.l.b16 %v2359
        %v2498 = vunpack.c.h.b16 %v2359
        %v2499 = vunpack.c.l.b16 %v2360
        %v2500 = vunpack.c.h.b16 %v2360
        %v2501 = vunpack.c.l.b16 %v2361
        %v2502 = vunpack.c.h.b16 %v2361
        %v2503 = vunpack.c.l.b16 %v2362
        %v2504 = vunpack.c.h.b16 %v2362
        %v2505 = vunpack.c.l.b16 %v2363
        %v2506 = vunpack.c.h.b16 %v2363
        %v2507 = vunpack.c.l.b16 %v2364
        %v2508 = vunpack.c.h.b16 %v2364
        %v2509 = vunpack.c.l.b16 %v2365
        %v2510 = vunpack.c.h.b16 %v2365
        %v2511 = vunpack.c.l.b16 %v2366
        %v2512 = vunpack.c.h.b16 %v2366
        %v2513 = vunpack.c.l.b16 %v2367
        %v2514 = vunpack.c.h.b16 %v2367
        %v2515 = vunpack.c.l.b16 %v2368
        %v2516 = vunpack.c.h.b16 %v2368
        %v2517 = vunpack.c.l.b16 %v2369
        %v2518 = vunpack.c.h.b16 %v2369
        %v2519 = vunpack.c.l.b16 %v2370
        %v2520 = vunpack.c.h.b16 %v2370
        %v2521 = vunpack.c.l.b16 %v2371
        %v2522 = vunpack.c.h.b16 %v2371
        %v2523 = vunpack.c.l.b16 %v2372
        %v2524 = vunpack.c.h.b16 %v2372
        %v2525 = vunpack.c.l.b16 %v2373
        %v2526 = vunpack.c.h.b16 %v2373
        %v2527 = vunpack.c.l.b16 %v2374
        %v2528 = vunpack.c.h.b16 %v2374
        %v2529 = vunpack.c.l.b16 %v2375
        %v2530 = vunpack.c.h.b16 %v2375
        %v2531 = vunpack.c.l.b16 %v2376
        %v2532 = vunpack.c.h.b16 %v2376
        %v2533 = vunpack.c.l.b16 %v2377
        %v2534 = vunpack.c.h.b16 %v2377
        %v2535 = vunpack.c.l.b16 %v2378
        %v2536 = vunpack.c.h.b16 %v2378
        %v2537 = vunpack.c.l.b16 %v2379
        %v2538 = vunpack.c.h.b16 %v2379
        %v2539 = vunpack.c.l.b16 %v2380
        %v2540 = vunpack.c.h.b16 %v2380
        %v2541 = vunpack.c.l.b16 %v2381
        %v2542 = vunpack.c.h.b16 %v2381
        %v2543 = vunpack.c.l.b16 %v2382
        %v2544 = vunpack.c.h.b16 %v2382
        %v2545 = vunpack.c.l.b16 %v2383
        %v2546 = vunpack.c.h.b16 %v2383
        %v2547 = vunpack.c.l.b16 %v2384
        %v2548 = vunpack.c.h.b16 %v2384
        %v2549 = vunpack.c.l.b16 %v2385
        %v2550 = vunpack.c.h.b16 %v2385
        %v2551 = vunpack.c.l.b16 %v2386
        %v2552 = vunpack.c.h.b16 %v2386
        %v2553 = vunpack.c.l.b16 %v2387
        %v2554 = vunpack.c.h.b16 %v2387
        %v2555 = vunpack.c.l.b16 %v2388
        %v2556 = vunpack.c.h.b16 %v2388
        %v2557 = vunpack.c.l.b16 %v2389
        %v2558 = vunpack.c.h.b16 %v2389
        %v2559 = vunpack.c.l.b16 %v2390
        %v2560 = vunpack.c.h.b16 %v2390
        %v2561 = vunpack.c.l.b16 %v2391
        %v2562 = vunpack.c.h.b16 %v2391
        %v2563 = vunpack.c.l.b16 %v2392
        %v2564 = vunpack.c.h.b16 %v2392
        %v2565 = vunpack.c.l.b16 %v2393
        %v2566 = vunpack.c.h.b16 %v2393
        %v2567 = vunpack.c.l.b16 %v2394
        %v2568 = vunpack.c.h.b16 %v2394
        %v2569 = vunpack.c.l.b16 %v2395
        %v2570 = vunpack.c.h.b16 %v2395
        %v2571 = vunpack.c.l.b16 %v2396
        %v2572 = vunpack.c.h.b16 %v2396
        %v2573 = vunpack.c.l.b16 %v2397
        %v2574 = vunpack.c.h.b16 %v2397
        %v2575 = vunpack.c.l.b16 %v2398
        %v2576 = vunpack.c.h.b16 %v2398
        %v2577 = vunpack.c.l.b16 %v2399
        %v2578 = vunpack.c.h.b16 %v2399
        %v2579 = vunpack.c.l.b16 %v2400
        %v2580 = vunpack.c.h.b16 %v2400
        %v2581 = vunpack.c.l.b16 %v2401
        %v2582 = vunpack.c.h.b16 %v2401
        %v2583 = vunpack.c.l.b16 %v2402
        %v2584 = vunpack.c.h.b16 %v2402
        %v2585 = vunpack.c.l.b16 %v2403
        %v2586 = vunpack.c.h.b16 %v2403
        %v2587 = vunpack.c.l.b16 %v2404
        %v2588 = vunpack.c.h.b16 %v2404
        %v2589 = vunpack.c.l.b16 %v2405
        %v2590 = vunpack.c.h.b16 %v2405
        %v2591 = vunpack.c.l.b16 %v2406
        %v2592 = vunpack.c.h.b16 %v2406
        %v2593 = vunpack.c.l.b16 %v2407
        %v2594 = vunpack.c.h.b16 %v2407
        %v2595 = vunpack.c.l.b16 %v2408
        %v2596 = vunpack.c.h.b16 %v2408
        %v2597 = vunpack.c.l.b16 %v2409
        %v2598 = vunpack.c.h.b16 %v2409
        %v2599 = vunpack.c.l.b16 %v2410
        %v2600 = vunpack.c.h.b16 %v2410
        %v2601 = vunpack.c.l.b16 %v2411
        %v2602 = vunpack.c.h.b16 %v2411
        %v2603 = vunpack.c.l.b16 %v2412
        %v2604 = vunpack.c.h.b16 %v2412
        %v2605 = vunpack.c.l.b16 %v2413
        %v2606 = vunpack.c.h.b16 %v2413
        %v2607 = vunpack.c.l.b16 %v2414
        %v2608 = vunpack.c.h.b16 %v2414
        %v2609 = vunpack.c.l.b16 %v2415
        %v2610 = vunpack.c.h.b16 %v2415
        %v2611 = vunpack.c.l.b16 %v2416
        %v2612 = vunpack.c.h.b16 %v2416
        %v2613 = vunpack.c.l.b16 %v2417
        %v2614 = vunpack.c.h.b16 %v2417
        %v2615 = vunpack.c.l.b16 %v2418
        %v2616 = vunpack.c.h.b16 %v2418
        %v2617 = vpack.c.b16 %v2491, %v2489
        %v2618 = vpack.c.b16 %v2492, %v2490
        %v2619 = vpack.c.b16 %v2495, %v2493
        %v2620 = vpack.c.b16 %v2496, %v2494
        %v2621 = vpack.c.b16 %v2499, %v2497
        %v2622 = vpack.c.b16 %v2500, %v2498
        %v2623 = vpack.c.b16 %v2503, %v2501
        %v2624 = vpack.c.b16 %v2504, %v2502
        %v2625 = vpack.c.b16 %v2507, %v2505
        %v2626 = vpack.c.b16 %v2508, %v2506
        %v2627 = vpack.c.b16 %v2511, %v2509
        %v2628 = vpack.c.b16 %v2512, %v2510
        %v2629 = vpack.c.b16 %v2515, %v2513
        %v2630 = vpack.c.b16 %v2516, %v2514
        %v2631 = vpack.c.b16 %v2519, %v2517
        %v2632 = vpack.c.b16 %v2520, %v2518
        %v2633 = vpack.c.b16 %v2523, %v2521
        %v2634 = vpack.c.b16 %v2524, %v2522
        %v2635 = vpack.c.b16 %v2527, %v2525
        %v2636 = vpack.c.b16 %v2528, %v2526
        %v2637 = vpack.c.b16 %v2531, %v2529
        %v2638 = vpack.c.b16 %v2532, %v2530
        %v2639 = vpack.c.b16 %v2535, %v2533
        %v2640 = vpack.c.b16 %v2536, %v2534
        %v2641 = vpack.c.b16 %v2539, %v2537
        %v2642 = vpack.c.b16 %v2540, %v2538
        %v2643 = vpack.c.b16 %v2543, %v2541
        %v2644 = vpack.c.b16 %v2544, %v2542
        %v2645 = vpack.c.b16 %v2547, %v2545
        %v2646 = vpack.c.b16 %v2548, %v2546
        %v2647 = vpack.c.b16 %v2551, %v2549
        %v2648 = vpack.c.b16 %v2552, %v2550
        %v2649 = vpack.c.b16 %v2555, %v2553
        %v2650 = vpack.c.b16 %v2556, %v2554
        %v2651 = vpack.c.b16 %v2559, %v2557
        %v2652 = vpack.c.b16 %v2560, %v2558
        %v2653 = vpack.c.b16 %v2563, %v2561
        %v2654 = vpack.c.b16 %v2564, %v2562
        %v2655 = vpack.c.b16 %v2567, %v2565
        %v2656 = vpack.c.b16 %v2568, %v2566
        %v2657 = vpack.c.b16 %v2571, %v2569
        %v2658 = vpack.c.b16 %v2572, %v2570
        %v2659 = vpack.c.b16 %v2575, %v2573
        %v2660 = vpack.c.b16 %v2576, %v2574
        %v2661 = vpack.c.b16 %v2579, %v2577
        %v2662 = vpack.c.b16 %v2580, %v2578
        %v2663 = vpack.c.b16 %v2583, %v2581
        %v2664 = vpack.c.b16 %v2584, %v2582
        %v2665 = vpack.c.b16 %v2587, %v2585
        %v2666 = vpack.c.b16 %v2588, %v2586
        %v2667 = vpack.c.b16 %v2591, %v2589
        %v2668 = vpack.c.b16 %v2592, %v2590
        %v2669 = vpack.c.b16 %v2595, %v2593
        %v2670 = vpack.c.b16 %v2596, %v2594
        %v2671 = vpack.c.b16 %v2599, %v2597
        %v2672 = vpack.c.b16 %v2600, %v2598
        %v2673 = vpack.c.b16 %v2603, %v2601
        %v2674 = vpack.c.b16 %v2604, %v2602
        %v2675 = vpack.c.b16 %v2607, %v2605
        %v2676 = vpack.c.b16 %v2608, %v2606
        %v2677 = vpack.c.b16 %v2611, %v2609
        %v2678 = vpack.c.b16 %v2612, %v2610
        %v2679 = vpack.c.b16 %v2615, %v2613
        %v2680 = vpack.c.b16 %v2616, %v2614
        %2745 = vmatpush.bf16.msra.mxu0 %v2631
        %2746 = vmatpush.bf16.msra.mxu0 %v2629
        %2747 = vmatpush.bf16.msra.mxu0 %v2627
        %2748 = vmatpush.bf16.msra.mxu0 %v2625
        %2749 = vmatpush.bf16.msra.mxu0 %v2623
        %2750 = vmatpush.bf16.msra.mxu0 %v2621
        %2751 = vmatpush.bf16.msra.mxu0 %v2619
        %2752 = vmatpush.bf16.msra.mxu0 %v2617
        %2753 = vmatmul.bf16.gmra.mxu0 %v2351
        %v2754 = vpop.f32.mrf.mxu0
        %v2755 = vadd.f32 %v2421, %v2754
        %v2756 = vpop.f32.mrf.mxu0
        %2757 = vdwg.mxu0
        %2758 = vmatpush.bf16.msra.mxu0 %v2647
        %2759 = vmatpush.bf16.msra.mxu0 %v2645
        %2760 = vmatpush.bf16.msra.mxu0 %v2643
        %2761 = vmatpush.bf16.msra.mxu0 %v2641
        %2762 = vmatpush.bf16.msra.mxu0 %v2639
        %2763 = vmatpush.bf16.msra.mxu0 %v2637
        %2764 = vmatpush.bf16.msra.mxu0 %v2635
        %2765 = vmatpush.bf16.msra.mxu0 %v2633
        %2766 = vmatmul.bf16.gmra.mxu0 %v2352
        %v2767 = vpop.f32.mrf.mxu0
        %v2768 = vadd.f32 %v2755, %v2767
        %v2769 = vpop.f32.mrf.mxu0
        %2770 = vdwg.mxu0
        %2771 = vmatpush.bf16.msra.mxu0 %v2663
        %2772 = vmatpush.bf16.msra.mxu0 %v2661
        %2773 = vmatpush.bf16.msra.mxu0 %v2659
        %2774 = vmatpush.bf16.msra.mxu0 %v2657
        %2775 = vmatpush.bf16.msra.mxu0 %v2655
        %2776 = vmatpush.bf16.msra.mxu0 %v2653
        %2777 = vmatpush.bf16.msra.mxu0 %v2651
        %2778 = vmatpush.bf16.msra.mxu0 %v2649
        %2779 = vmatmul.bf16.gmra.mxu0 %v2353
        %v2780 = vpop.f32.mrf.mxu0
        %v2781 = vadd.f32 %v2768, %v2780
        %v2782 = vpop.f32.mrf.mxu0
        %2783 = vdwg.mxu0
        %2784 = vmatpush.bf16.msra.mxu0 %v2679
        %2785 = vmatpush.bf16.msra.mxu0 %v2677
        %2786 = vmatpush.bf16.msra.mxu0 %v2675
        %2787 = vmatpush.bf16.msra.mxu0 %v2673
        %2788 = vmatpush.bf16.msra.mxu0 %v2671
        %2789 = vmatpush.bf16.msra.mxu0 %v2669
        %2790 = vmatpush.bf16.msra.mxu0 %v2667
        %2791 = vmatpush.bf16.msra.mxu0 %v2665
        %2792 = vmatmul.bf16.gmra.mxu0 %v2354
        %v2793 = vpop.f32.mrf.mxu0
        %v2794 = vadd.f32 %v2781, %v2793
        %v2795 = vpop.f32.mrf.mxu0
        %2796 = vdwg.mxu0
        %2797 = vmatpush.bf16.msra.mxu0 %v2632
        %2798 = vmatpush.bf16.msra.mxu0 %v2630
        %2799 = vmatpush.bf16.msra.mxu0 %v2628
        %2800 = vmatpush.bf16.msra.mxu0 %v2626
        %2801 = vmatpush.bf16.msra.mxu0 %v2624
        %2802 = vmatpush.bf16.msra.mxu0 %v2622
        %2803 = vmatpush.bf16.msra.mxu0 %v2620
        %2804 = vmatpush.bf16.msra.mxu0 %v2618
        %2805 = vmatmul.bf16.gmra.mxu0 %v2351
        %v2806 = vpop.f32.mrf.mxu0
        %v2807 = vadd.f32 %v2422, %v2806
        %v2808 = vpop.f32.mrf.mxu0
        %2809 = vdwg.mxu0
        %2810 = vmatpush.bf16.msra.mxu0 %v2648
        %2811 = vmatpush.bf16.msra.mxu0 %v2646
        %2812 = vmatpush.bf16.msra.mxu0 %v2644
        %2813 = vmatpush.bf16.msra.mxu0 %v2642
        %2814 = vmatpush.bf16.msra.mxu0 %v2640
        %2815 = vmatpush.bf16.msra.mxu0 %v2638
        %2816 = vmatpush.bf16.msra.mxu0 %v2636
        %2817 = vmatpush.bf16.msra.mxu0 %v2634
        %2818 = vmatmul.bf16.gmra.mxu0 %v2352
        %v2819 = vpop.f32.mrf.mxu0
        %v2820 = vadd.f32 %v2807, %v2819
        %v2821 = vpop.f32.mrf.mxu0
        %2822 = vdwg.mxu0
        %2823 = vmatpush.bf16.msra.mxu0 %v2664
        %2824 = vmatpush.bf16.msra.mxu0 %v2662
        %2825 = vmatpush.bf16.msra.mxu0 %v2660
        %2826 = vmatpush.bf16.msra.mxu0 %v2658
        %2827 = vmatpush.bf16.msra.mxu0 %v2656
        %2828 = vmatpush.bf16.msra.mxu0 %v2654
        %2829 = vmatpush.bf16.msra.mxu0 %v2652
        %2830 = vmatpush.bf16.msra.mxu0 %v2650
        %2831 = vmatmul.bf16.gmra.mxu0 %v2353
        %v2832 = vpop.f32.mrf.mxu0
        %v2833 = vadd.f32 %v2820, %v2832
        %v2834 = vpop.f32.mrf.mxu0
        %2835 = vdwg.mxu0
        %2836 = vmatpush.bf16.msra.mxu0 %v2680
        %2837 = vmatpush.bf16.msra.mxu0 %v2678
        %2838 = vmatpush.bf16.msra.mxu0 %v2676
        %2839 = vmatpush.bf16.msra.mxu0 %v2674
        %2840 = vmatpush.bf16.msra.mxu0 %v2672
        %2841 = vmatpush.bf16.msra.mxu0 %v2670
        %2842 = vmatpush.bf16.msra.mxu0 %v2668
        %2843 = vmatpush.bf16.msra.mxu0 %v2666
        %2844 = vmatmul.bf16.gmra.mxu0 %v2354
        %v2845 = vpop.f32.mrf.mxu0
        %v2846 = vadd.f32 %v2833, %v2845
        %v2847 = vpop.f32.mrf.mxu0
        %2848 = vdwg.mxu0
        %v2849 = vld [vmem:[%s27] sm:$0x3]
        %v2850 = vld [vmem:[%s29] sm:$0x3]
        %v2851 = vsel %vm1166, %v2794, 0.0
        %v2852 = vsel %vm1166, %v2846, 0.0
        %v2853 = vadd.f32 %v2851, %v2852
        %2854 = vadd.xlane.f32.xlu0 %v2853
        %v2855 = vpop.xlane.xlu0 %2854
        %v2856 = vrcp.pop 256.0
        %v2857 = vmul.f32 256.0, %v2856
        %v2858 = vsub.f32 1.0, %v2857
        %v2859 = vmul.f32 %v2856, %v2858
        %v2860 = vadd.f32 %v2856, %v2859
        %vm2861 = vweird.f32 %v2856
        %v2862 = vsel %vm2861, %v2856, %v2860
        %v2863 = vmul.f32 %v2855, %v2862
        %v2864 = vsub.f32 %v2794, %v2863
        %v2865 = vsub.f32 %v2846, %v2863
        %v2866 = vmul.f32 %v2864, %v2864
        %v2867 = vmul.f32 %v2865, %v2865
        %v2868 = vsel %vm1166, %v2866, 0.0
        %v2869 = vsel %vm1166, %v2867, 0.0
        %v2870 = vadd.f32 %v2868, %v2869
        %2871 = vadd.xlane.f32.xlu0 %v2870
        %v2872 = vpop.xlane.xlu0 %2871
        %v2873 = vmul.f32 %v2872, %v2862
        %v2874 = vadd.f32 %v2873, 1e-05
        %v2875 = vrsqrt.pop %v2874
        %v2876 = vmul.f32 %v2875, %v2874
        %v2877 = vmul.f32 %v2876, %v2875
        %v2878 = vmul.f32 0.5, %v2877
        %v2879 = vsub.f32 1.5, %v2878
        %v2880 = vmul.f32 %v2875, %v2879
        %vm2881 = vweird.f32 %v2874
        %vm2882 = vweird.f32 %v2875
        %vm2883 = vmor %vm2881, %vm2882
        %v2884 = vsel %vm2883, %v2875, %v2880
        %v2885 = vmul.f32 %v2864, %v2884
        %v2886 = vmul.f32 %v2865, %v2884
        %v2888 = vperm.slane %v2849, 0
        %v2889 = vperm.slane %v2849, 1
        %v2892 = vmul.f32 %v2885, %v2888
        %v2893 = vmul.f32 %v2886, %v2889
        %v2895 = vperm.slane %v2850, 0
        %v2896 = vperm.slane %v2850, 1
        %v2899 = vadd.f32 %v2892, %v2895
        %v2900 = vadd.f32 %v2893, %v2896
        %v2901 = vmax.f32 %v2899, 0.0
        %v2902 = vmax.f32 %v2900, 0.0
        %v2903 = vpack.c.bf16 %v2901, %v2901
        %v2904 = vpack.c.bf16 %v2902, %v2902
        %v2905 = vld [vmem:[#allocation11] sm:$0xff]
        %v2906 = vld [vmem:[#allocation11 + $0x8] sm:$0xff]
        %v2907 = vld [vmem:[#allocation11 + $0x10] sm:$0xff]
        %v2908 = vld [vmem:[#allocation11 + $0x18] sm:$0xff]
        %v2909 = vld [vmem:[#allocation11 + $0x20] sm:$0xff]
        %v2910 = vld [vmem:[#allocation11 + $0x28] sm:$0xff]
        %v2911 = vld [vmem:[#allocation11 + $0x30] sm:$0xff]
        %v2912 = vld [vmem:[#allocation11 + $0x38] sm:$0xff]
        %v2913 = vld [vmem:[#allocation11 + $0x40] sm:$0xff]
        %v2914 = vld [vmem:[#allocation11 + $0x48] sm:$0xff]
        %v2915 = vld [vmem:[#allocation11 + $0x50] sm:$0xff]
        %v2916 = vld [vmem:[#allocation11 + $0x58] sm:$0xff]
        %v2917 = vld [vmem:[#allocation11 + $0x60] sm:$0xff]
        %v2918 = vld [vmem:[#allocation11 + $0x68] sm:$0xff]
        %v2919 = vld [vmem:[#allocation11 + $0x70] sm:$0xff]
        %v2920 = vld [vmem:[#allocation11 + $0x78] sm:$0xff]
        %v2921 = vld [vmem:[#allocation11 + $0x80] sm:$0xff]
        %v2922 = vld [vmem:[#allocation11 + $0x88] sm:$0xff]
        %v2923 = vld [vmem:[#allocation11 + $0x90] sm:$0xff]
        %v2924 = vld [vmem:[#allocation11 + $0x98] sm:$0xff]
        %v2925 = vld [vmem:[#allocation11 + $0xa0] sm:$0xff]
        %v2926 = vld [vmem:[#allocation11 + $0xa8] sm:$0xff]
        %v2927 = vld [vmem:[#allocation11 + $0xb0] sm:$0xff]
        %v2928 = vld [vmem:[#allocation11 + $0xb8] sm:$0xff]
        %v2929 = vld [vmem:[#allocation11 + $0xc0] sm:$0xff]
        %v2930 = vld [vmem:[#allocation11 + $0xc8] sm:$0xff]
        %v2931 = vld [vmem:[#allocation11 + $0xd0] sm:$0xff]
        %v2932 = vld [vmem:[#allocation11 + $0xd8] sm:$0xff]
        %v2933 = vld [vmem:[#allocation11 + $0xe0] sm:$0xff]
        %v2934 = vld [vmem:[#allocation11 + $0xe8] sm:$0xff]
        %v2935 = vld [vmem:[#allocation11 + $0xf0] sm:$0xff]
        %v2936 = vld [vmem:[#allocation11 + $0xf8] sm:$0xff]
        %v2937 = vld [vmem:[%s33] sm:$0x3]
        %v2939 = vperm.slane %v2937, 0
        %v2940 = vperm.slane %v2937, 1
        %v2975 = vunpack.c.l.b16 %v2905
        %v2976 = vunpack.c.h.b16 %v2905
        %v2977 = vunpack.c.l.b16 %v2906
        %v2978 = vunpack.c.h.b16 %v2906
        %v2979 = vunpack.c.l.b16 %v2907
        %v2980 = vunpack.c.h.b16 %v2907
        %v2981 = vunpack.c.l.b16 %v2908
        %v2982 = vunpack.c.h.b16 %v2908
        %v2983 = vunpack.c.l.b16 %v2909
        %v2984 = vunpack.c.h.b16 %v2909
        %v2985 = vunpack.c.l.b16 %v2910
        %v2986 = vunpack.c.h.b16 %v2910
        %v2987 = vunpack.c.l.b16 %v2911
        %v2988 = vunpack.c.h.b16 %v2911
        %v2989 = vunpack.c.l.b16 %v2912
        %v2990 = vunpack.c.h.b16 %v2912
        %v2991 = vunpack.c.l.b16 %v2913
        %v2992 = vunpack.c.h.b16 %v2913
        %v2993 = vunpack.c.l.b16 %v2914
        %v2994 = vunpack.c.h.b16 %v2914
        %v2995 = vunpack.c.l.b16 %v2915
        %v2996 = vunpack.c.h.b16 %v2915
        %v2997 = vunpack.c.l.b16 %v2916
        %v2998 = vunpack.c.h.b16 %v2916
        %v2999 = vunpack.c.l.b16 %v2917
        %v3000 = vunpack.c.h.b16 %v2917
        %v3001 = vunpack.c.l.b16 %v2918
        %v3002 = vunpack.c.h.b16 %v2918
        %v3003 = vunpack.c.l.b16 %v2919
        %v3004 = vunpack.c.h.b16 %v2919
        %v3005 = vunpack.c.l.b16 %v2920
        %v3006 = vunpack.c.h.b16 %v2920
        %v3007 = vunpack.c.l.b16 %v2921
        %v3008 = vunpack.c.h.b16 %v2921
        %v3009 = vunpack.c.l.b16 %v2922
        %v3010 = vunpack.c.h.b16 %v2922
        %v3011 = vunpack.c.l.b16 %v2923
        %v3012 = vunpack.c.h.b16 %v2923
        %v3013 = vunpack.c.l.b16 %v2924
        %v3014 = vunpack.c.h.b16 %v2924
        %v3015 = vunpack.c.l.b16 %v2925
        %v3016 = vunpack.c.h.b16 %v2925
        %v3017 = vunpack.c.l.b16 %v2926
        %v3018 = vunpack.c.h.b16 %v2926
        %v3019 = vunpack.c.l.b16 %v2927
        %v3020 = vunpack.c.h.b16 %v2927
        %v3021 = vunpack.c.l.b16 %v2928
        %v3022 = vunpack.c.h.b16 %v2928
        %v3023 = vunpack.c.l.b16 %v2929
        %v3024 = vunpack.c.h.b16 %v2929
        %v3025 = vunpack.c.l.b16 %v2930
        %v3026 = vunpack.c.h.b16 %v2930
        %v3027 = vunpack.c.l.b16 %v2931
        %v3028 = vunpack.c.h.b16 %v2931
        %v3029 = vunpack.c.l.b16 %v2932
        %v3030 = vunpack.c.h.b16 %v2932
        %v3031 = vunpack.c.l.b16 %v2933
        %v3032 = vunpack.c.h.b16 %v2933
        %v3033 = vunpack.c.l.b16 %v2934
        %v3034 = vunpack.c.h.b16 %v2934
        %v3035 = vunpack.c.l.b16 %v2935
        %v3036 = vunpack.c.h.b16 %v2935
        %v3037 = vunpack.c.l.b16 %v2936
        %v3038 = vunpack.c.h.b16 %v2936
        %v3039 = vpack.c.b16 %v2977, %v2975
        %v3040 = vpack.c.b16 %v2978, %v2976
        %v3041 = vpack.c.b16 %v2981, %v2979
        %v3042 = vpack.c.b16 %v2982, %v2980
        %v3043 = vpack.c.b16 %v2985, %v2983
        %v3044 = vpack.c.b16 %v2986, %v2984
        %v3045 = vpack.c.b16 %v2989, %v2987
        %v3046 = vpack.c.b16 %v2990, %v2988
        %v3047 = vpack.c.b16 %v2993, %v2991
        %v3048 = vpack.c.b16 %v2994, %v2992
        %v3049 = vpack.c.b16 %v2997, %v2995
        %v3050 = vpack.c.b16 %v2998, %v2996
        %v3051 = vpack.c.b16 %v3001, %v2999
        %v3052 = vpack.c.b16 %v3002, %v3000
        %v3053 = vpack.c.b16 %v3005, %v3003
        %v3054 = vpack.c.b16 %v3006, %v3004
        %v3055 = vpack.c.b16 %v3009, %v3007
        %v3056 = vpack.c.b16 %v3010, %v3008
        %v3057 = vpack.c.b16 %v3013, %v3011
        %v3058 = vpack.c.b16 %v3014, %v3012
        %v3059 = vpack.c.b16 %v3017, %v3015
        %v3060 = vpack.c.b16 %v3018, %v3016
        %v3061 = vpack.c.b16 %v3021, %v3019
        %v3062 = vpack.c.b16 %v3022, %v3020
        %v3063 = vpack.c.b16 %v3025, %v3023
        %v3064 = vpack.c.b16 %v3026, %v3024
        %v3065 = vpack.c.b16 %v3029, %v3027
        %v3066 = vpack.c.b16 %v3030, %v3028
        %v3067 = vpack.c.b16 %v3033, %v3031
        %v3068 = vpack.c.b16 %v3034, %v3032
        %v3069 = vpack.c.b16 %v3037, %v3035
        %v3070 = vpack.c.b16 %v3038, %v3036
        %3103 = vmatpush.bf16.msra.mxu0 %v3053
        %3104 = vmatpush.bf16.msra.mxu0 %v3051
        %3105 = vmatpush.bf16.msra.mxu0 %v3049
        %3106 = vmatpush.bf16.msra.mxu0 %v3047
        %3107 = vmatpush.bf16.msra.mxu0 %v3045
        %3108 = vmatpush.bf16.msra.mxu0 %v3043
        %3109 = vmatpush.bf16.msra.mxu0 %v3041
        %3110 = vmatpush.bf16.msra.mxu0 %v3039
        %3111 = vmatmul.bf16.gmra.mxu0 %v2903
        %v3112 = vpop.f32.mrf.mxu0
        %v3113 = vadd.f32 %v2939, %v3112
        %v3114 = vpop.f32.mrf.mxu0
        %3115 = vdwg.mxu0
        %3116 = vmatpush.bf16.msra.mxu0 %v3069
        %3117 = vmatpush.bf16.msra.mxu0 %v3067
        %3118 = vmatpush.bf16.msra.mxu0 %v3065
        %3119 = vmatpush.bf16.msra.mxu0 %v3063
        %3120 = vmatpush.bf16.msra.mxu0 %v3061
        %3121 = vmatpush.bf16.msra.mxu0 %v3059
        %3122 = vmatpush.bf16.msra.mxu0 %v3057
        %3123 = vmatpush.bf16.msra.mxu0 %v3055
        %3124 = vmatmul.bf16.gmra.mxu0 %v2904
        %v3125 = vpop.f32.mrf.mxu0
        %v3126 = vadd.f32 %v3113, %v3125
        %v3127 = vpop.f32.mrf.mxu0
        %3128 = vdwg.mxu0
        %3129 = vmatpush.bf16.msra.mxu0 %v3054
        %3130 = vmatpush.bf16.msra.mxu0 %v3052
        %3131 = vmatpush.bf16.msra.mxu0 %v3050
        %3132 = vmatpush.bf16.msra.mxu0 %v3048
        %3133 = vmatpush.bf16.msra.mxu0 %v3046
        %3134 = vmatpush.bf16.msra.mxu0 %v3044
        %3135 = vmatpush.bf16.msra.mxu0 %v3042
        %3136 = vmatpush.bf16.msra.mxu0 %v3040
        %3137 = vmatmul.bf16.gmra.mxu0 %v2903
        %v3138 = vpop.f32.mrf.mxu0
        %v3139 = vadd.f32 %v2940, %v3138
        %v3140 = vpop.f32.mrf.mxu0
        %3141 = vdwg.mxu0
        %3142 = vmatpush.bf16.msra.mxu0 %v3070
        %3143 = vmatpush.bf16.msra.mxu0 %v3068
        %3144 = vmatpush.bf16.msra.mxu0 %v3066
        %3145 = vmatpush.bf16.msra.mxu0 %v3064
        %3146 = vmatpush.bf16.msra.mxu0 %v3062
        %3147 = vmatpush.bf16.msra.mxu0 %v3060
        %3148 = vmatpush.bf16.msra.mxu0 %v3058
        %3149 = vmatpush.bf16.msra.mxu0 %v3056
        %3150 = vmatmul.bf16.gmra.mxu0 %v2904
        %v3151 = vpop.f32.mrf.mxu0
        %v3152 = vadd.f32 %v3139, %v3151
        %v3153 = vpop.f32.mrf.mxu0
        %3154 = vdwg.mxu0
        %v3155 = vld [vmem:[%s35] sm:$0x3]
        %v3156 = vld [vmem:[%s37] sm:$0x3]
        %v3157 = vsel %vm1166, %v3126, 0.0
        %v3158 = vsel %vm1166, %v3152, 0.0
        %v3159 = vadd.f32 %v3157, %v3158
        %3160 = vadd.xlane.f32.xlu0 %v3159
        %v3161 = vpop.xlane.xlu0 %3160
        %v3162 = vmul.f32 %v3161, %v2862
        %v3163 = vsub.f32 %v3126, %v3162
        %v3164 = vsub.f32 %v3152, %v3162
        %v3165 = vmul.f32 %v3163, %v3163
        %v3166 = vmul.f32 %v3164, %v3164
        %v3167 = vsel %vm1166, %v3165, 0.0
        %v3168 = vsel %vm1166, %v3166, 0.0
        %v3169 = vadd.f32 %v3167, %v3168
        %3170 = vadd.xlane.f32.xlu0 %v3169
        %v3171 = vpop.xlane.xlu0 %3170
        %v3172 = vmul.f32 %v3171, %v2862
        %v3173 = vadd.f32 %v3172, 1e-05
        %v3174 = vrsqrt.pop %v3173
        %v3175 = vmul.f32 %v3174, %v3173
        %v3176 = vmul.f32 %v3175, %v3174
        %v3177 = vmul.f32 0.5, %v3176
        %v3178 = vsub.f32 1.5, %v3177
        %v3179 = vmul.f32 %v3174, %v3178
        %vm3180 = vweird.f32 %v3173
        %vm3181 = vweird.f32 %v3174
        %vm3182 = vmor %vm3180, %vm3181
        %v3183 = vsel %vm3182, %v3174, %v3179
        %v3184 = vmul.f32 %v3163, %v3183
        %v3185 = vmul.f32 %v3164, %v3183
        %v3187 = vperm.slane %v3155, 0
        %v3188 = vperm.slane %v3155, 1
        %v3191 = vmul.f32 %v3184, %v3187
        %v3192 = vmul.f32 %v3185, %v3188
        %v3194 = vperm.slane %v3156, 0
        %v3195 = vperm.slane %v3156, 1
        %v3198 = vadd.f32 %v3191, %v3194
        %v3199 = vadd.f32 %v3192, %v3195
        %v3200 = vmax.f32 %v3198, 0.0
        %v3201 = vmax.f32 %v3199, 0.0
        %v3202 = vld [vmem:[#allocation2] sm:$0xf]
        %v3205 = vrot.slane %v3201, 6
        %v3206 = vsel %vm1166, %v3200, %v3205
        %v3208 = vadd.f32 %v3202, %v3206
        %3209 = vst [vmem:[#allocation2] sm:$0xf] %v3208
        %p3210 = scmp.eq.s32.totalorder %s102, 5
        // Predicated region
        $region173: #{fashion_evaluator_forward.3} parent=143 // pred_check
          %p3211 = pneg %p3210
        $region174: #{fashion_evaluator_forward.3} parent=143 // pred_check_branch
          %3213 = sbr.rel (%p3211) target = $region176
        $region175: #{fashion_evaluator_forward.3} parent=143 // pred_region
          %v3214 = vld [vmem:[#allocation2] sm:$0xf]
          %v3215 = vmul.f32 %v3214, 0.16666667
          %v3216 = vld [vmem:[#allocation12] sm:$0xff]
          %v3217 = vld [vmem:[#allocation12 + $0x8] sm:$0xff]
          %v3218 = vld [vmem:[#allocation12 + $0x10] sm:$0xff]
          %v3219 = vld [vmem:[#allocation12 + $0x18] sm:$0xff]
          %v3220 = vld [vmem:[#allocation12 + $0x20] sm:$0xff]
          %v3221 = vld [vmem:[#allocation12 + $0x28] sm:$0xff]
          %v3222 = vld [vmem:[#allocation12 + $0x30] sm:$0xff]
          %v3223 = vld [vmem:[#allocation12 + $0x38] sm:$0xff]
          %v3224 = vld [vmem:[#allocation12 + $0x40] sm:$0xff]
          %v3225 = vld [vmem:[#allocation12 + $0x48] sm:$0xff]
          %v3226 = vld [vmem:[#allocation12 + $0x50] sm:$0xff]
          %v3227 = vld [vmem:[#allocation12 + $0x58] sm:$0xff]
          %v3228 = vld [vmem:[#allocation12 + $0x60] sm:$0xff]
          %v3229 = vld [vmem:[#allocation12 + $0x68] sm:$0xff]
          %v3230 = vld [vmem:[#allocation12 + $0x70] sm:$0xff]
          %v3231 = vld [vmem:[#allocation12 + $0x78] sm:$0xff]
          %v3232 = vld [vmem:[#allocation12 + $0x80] sm:$0xff]
          %v3233 = vld [vmem:[#allocation12 + $0x88] sm:$0xff]
          %v3234 = vld [vmem:[#allocation12 + $0x90] sm:$0xff]
          %v3235 = vld [vmem:[#allocation12 + $0x98] sm:$0xff]
          %v3236 = vld [vmem:[#allocation12 + $0xa0] sm:$0xff]
          %v3237 = vld [vmem:[#allocation12 + $0xa8] sm:$0xff]
          %v3238 = vld [vmem:[#allocation12 + $0xb0] sm:$0xff]
          %v3239 = vld [vmem:[#allocation12 + $0xb8] sm:$0xff]
          %v3240 = vld [vmem:[#allocation12 + $0xc0] sm:$0xff]
          %v3241 = vld [vmem:[#allocation12 + $0xc8] sm:$0xff]
          %v3242 = vld [vmem:[#allocation12 + $0xd0] sm:$0xff]
          %v3243 = vld [vmem:[#allocation12 + $0xd8] sm:$0xff]
          %v3244 = vld [vmem:[#allocation12 + $0xe0] sm:$0xff]
          %v3245 = vld [vmem:[#allocation12 + $0xe8] sm:$0xff]
          %v3246 = vld [vmem:[#allocation12 + $0xf0] sm:$0xff]
          %v3247 = vld [vmem:[#allocation12 + $0xf8] sm:$0xff]
          %v3248 = vld [vmem:[%s41] sm:$0x1]
          %v3250 = vperm.slane %v3248, 0
          %3253 = vst [vmem:[#allocation1] ss:$4 sm:$0xff] %v3215
          %v3254 = vld.sshfl [vmem:[#allocation1] sm:$0xff pattern:$0x73625140]
          %v3255 = vld.sshfl [vmem:[#allocation1 + $0x8] sm:$0xff pattern:$0x73625140]
          %3258 = vmatpush.msra.mxu0 %v3231
          %3259 = vmatpush.msra.mxu0 %v3230
          %3260 = vmatpush.msra.mxu0 %v3229
          %3261 = vmatpush.msra.mxu0 %v3228
          %3262 = vmatpush.msra.mxu0 %v3227
          %3263 = vmatpush.msra.mxu0 %v3226
          %3264 = vmatpush.msra.mxu0 %v3225
          %3265 = vmatpush.msra.mxu0 %v3224
          %3266 = vmatpush.msra.mxu0 %v3223
          %3267 = vmatpush.msra.mxu0 %v3222
          %3268 = vmatpush.msra.mxu0 %v3221
          %3269 = vmatpush.msra.mxu0 %v3220
          %3270 = vmatpush.msra.mxu0 %v3219
          %3271 = vmatpush.msra.mxu0 %v3218
          %3272 = vmatpush.msra.mxu0 %v3217
          %3273 = vmatpush.msra.mxu0 %v3216
          %3274 = vmatmul.f32.gmra.mxu0 %v3254
          %v3275 = vpop.f32.mrf.mxu0
          %v3276 = vadd.f32 %v3250, %v3275
          %3277 = vdwg.mxu0
          %3278 = vmatpush.msra.mxu0 %v3247
          %3279 = vmatpush.msra.mxu0 %v3246
          %3280 = vmatpush.msra.mxu0 %v3245
          %3281 = vmatpush.msra.mxu0 %v3244
          %3282 = vmatpush.msra.mxu0 %v3243
          %3283 = vmatpush.msra.mxu0 %v3242
          %3284 = vmatpush.msra.mxu0 %v3241
          %3285 = vmatpush.msra.mxu0 %v3240
          %3286 = vmatpush.msra.mxu0 %v3239
          %3287 = vmatpush.msra.mxu0 %v3238
          %3288 = vmatpush.msra.mxu0 %v3237
          %3289 = vmatpush.msra.mxu0 %v3236
          %3290 = vmatpush.msra.mxu0 %v3235
          %3291 = vmatpush.msra.mxu0 %v3234
          %3292 = vmatpush.msra.mxu0 %v3233
          %3293 = vmatpush.msra.mxu0 %v3232
          %3294 = vmatmul.f32.gmra.mxu0 %v3255
          %v3295 = vpop.f32.mrf.mxu0
          %v3296 = vadd.f32 %v3276, %v3295
          %3297 = vdwg.mxu0
          %v3298 = vld [vmem:[%s43] sm:$0x1]
          %v3299 = vld [vmem:[%s45] sm:$0x1]
          %v3300 = vsel %vm1166, %v3296, 0.0
          %3301 = vadd.xlane.f32.xlu0 %v3300
          %v3302 = vpop.xlane.xlu0 %3301
          %v3303 = vrcp.pop 128.0
          %v3304 = vmul.f32 128.0, %v3303
          %v3305 = vsub.f32 1.0, %v3304
          %v3306 = vmul.f32 %v3303, %v3305
          %v3307 = vadd.f32 %v3303, %v3306
          %vm3308 = vweird.f32 %v3303
          %v3309 = vsel %vm3308, %v3303, %v3307
          %v3310 = vmul.f32 %v3302, %v3309
          %v3311 = vsub.f32 %v3296, %v3310
          %v3312 = vmul.f32 %v3311, %v3311
          %v3313 = vsel %vm1166, %v3312, 0.0
          %3314 = vadd.xlane.f32.xlu0 %v3313
          %v3315 = vpop.xlane.xlu0 %3314
          %v3316 = vmul.f32 %v3315, %v3309
          %v3317 = vadd.f32 %v3316, 1e-05
          %v3318 = vrsqrt.pop %v3317
          %v3319 = vmul.f32 %v3318, %v3317
          %v3320 = vmul.f32 %v3319, %v3318
          %v3321 = vmul.f32 0.5, %v3320
          %v3322 = vsub.f32 1.5, %v3321
          %v3323 = vmul.f32 %v3318, %v3322
          %vm3324 = vweird.f32 %v3317
          %vm3325 = vweird.f32 %v3318
          %vm3326 = vmor %vm3324, %vm3325
          %v3327 = vsel %vm3326, %v3318, %v3323
          %v3328 = vmul.f32 %v3311, %v3327
          %v3330 = vperm.slane %v3298, 0
          %v3332 = vmul.f32 %v3328, %v3330
          %v3334 = vperm.slane %v3299, 0
          %v3336 = vadd.f32 %v3332, %v3334
          %v3337 = vmax.f32 %v3336, 0.0
          %v3338 = vld [vmem:[#allocation14] sm:$0xff]
          %v3339 = vld [vmem:[#allocation14 + $0x8] sm:$0xff]
          %v3340 = vld [vmem:[#allocation14 + $0x10] sm:$0xff]
          %v3341 = vld [vmem:[#allocation14 + $0x18] sm:$0xff]
          %v3342 = vld [vmem:[#allocation14 + $0x20] sm:$0xff]
          %v3343 = vld [vmem:[#allocation14 + $0x28] sm:$0xff]
          %v3344 = vld [vmem:[#allocation14 + $0x30] sm:$0xff]
          %v3345 = vld [vmem:[#allocation14 + $0x38] sm:$0xff]
          %v3346 = vld [vmem:[#allocation14 + $0x40] sm:$0xff]
          %v3347 = vld [vmem:[#allocation14 + $0x48] sm:$0xff]
          %v3348 = vld [vmem:[#allocation14 + $0x50] sm:$0xff]
          %v3349 = vld [vmem:[#allocation14 + $0x58] sm:$0xff]
          %v3350 = vld [vmem:[#allocation14 + $0x60] sm:$0xff]
          %v3351 = vld [vmem:[#allocation14 + $0x68] sm:$0xff]
          %v3352 = vld [vmem:[#allocation14 + $0x70] sm:$0xff]
          %v3353 = vld [vmem:[#allocation14 + $0x78] sm:$0xff]
          %v3354 = vld [vmem:[%s49] sm:$0x1]
          %v3356 = vperm.slane %v3354, 0
          %3358 = vmatpush.msra.mxu0 %v3353
          %3359 = vmatpush.msra.mxu0 %v3352
          %3360 = vmatpush.msra.mxu0 %v3351
          %3361 = vmatpush.msra.mxu0 %v3350
          %3362 = vmatpush.msra.mxu0 %v3349
          %3363 = vmatpush.msra.mxu0 %v3348
          %3364 = vmatpush.msra.mxu0 %v3347
          %3365 = vmatpush.msra.mxu0 %v3346
          %3366 = vmatpush.msra.mxu0 %v3345
          %3367 = vmatpush.msra.mxu0 %v3344
          %3368 = vmatpush.msra.mxu0 %v3343
          %3369 = vmatpush.msra.mxu0 %v3342
          %3370 = vmatpush.msra.mxu0 %v3341
          %3371 = vmatpush.msra.mxu0 %v3340
          %3372 = vmatpush.msra.mxu0 %v3339
          %3373 = vmatpush.msra.mxu0 %v3338
          %3374 = vmatmul.f32.gmra.mxu0 %v3337
          %v3375 = vpop.f32.mrf.mxu0
          %v3376 = vadd.f32 %v3356, %v3375
          %3377 = vdwg.mxu0
          %v3378 = vld [vmem:[%s51] sm:$0x1]
          %v3379 = vld [vmem:[%s53] sm:$0x1]
          %v3380 = vsel %vm1166, %v3376, 0.0
          %3381 = vadd.xlane.f32.xlu0 %v3380
          %v3382 = vpop.xlane.xlu0 %3381
          %v3383 = vmul.f32 %v3382, %v3309
          %v3384 = vsub.f32 %v3376, %v3383
          %v3385 = vmul.f32 %v3384, %v3384
          %v3386 = vsel %vm1166, %v3385, 0.0
          %3387 = vadd.xlane.f32.xlu0 %v3386
          %v3388 = vpop.xlane.xlu0 %3387
          %v3389 = vmul.f32 %v3388, %v3309
          %v3390 = vadd.f32 %v3389, 1e-05
          %v3391 = vrsqrt.pop %v3390
          %v3392 = vmul.f32 %v3391, %v3390
          %v3393 = vmul.f32 %v3392, %v3391
          %v3394 = vmul.f32 0.5, %v3393
          %v3395 = vsub.f32 1.5, %v3394
          %v3396 = vmul.f32 %v3391, %v3395
          %vm3397 = vweird.f32 %v3390
          %vm3398 = vweird.f32 %v3391
          %vm3399 = vmor %vm3397, %vm3398
          %v3400 = vsel %vm3399, %v3391, %v3396
          %v3401 = vmul.f32 %v3384, %v3400
          %v3403 = vperm.slane %v3378, 0
          %v3405 = vmul.f32 %v3401, %v3403
          %v3407 = vperm.slane %v3379, 0
          %v3409 = vadd.f32 %v3405, %v3407
          %v3410 = vmax.f32 %v3409, 0.0
          %v3411 = vld [vmem:[#allocation15] sm:$0xff]
          %v3412 = vld [vmem:[#allocation15 + $0x8] sm:$0xff]
          %v3413 = vld [vmem:[#allocation15 + $0x10] sm:$0xff]
          %v3414 = vld [vmem:[#allocation15 + $0x18] sm:$0xff]
          %v3415 = vld [vmem:[#allocation15 + $0x20] sm:$0xff]
          %v3416 = vld [vmem:[#allocation15 + $0x28] sm:$0xff]
          %v3417 = vld [vmem:[#allocation15 + $0x30] sm:$0xff]
          %v3418 = vld [vmem:[#allocation15 + $0x38] sm:$0xff]
          %v3419 = vld [vmem:[#allocation15 + $0x40] sm:$0xff]
          %v3420 = vld [vmem:[#allocation15 + $0x48] sm:$0xff]
          %v3421 = vld [vmem:[#allocation15 + $0x50] sm:$0xff]
          %v3422 = vld [vmem:[#allocation15 + $0x58] sm:$0xff]
          %v3423 = vld [vmem:[#allocation15 + $0x60] sm:$0xff]
          %v3424 = vld [vmem:[#allocation15 + $0x68] sm:$0xff]
          %v3425 = vld [vmem:[#allocation15 + $0x70] sm:$0xff]
          %v3426 = vld [vmem:[#allocation15 + $0x78] sm:$0xff]
          %v3427 = vld [vmem:[%s57] sm:$0x1]
          %v3429 = vperm.slane %v3427, 0
          %3431 = vmatpush.msra.mxu0 %v3426
          %3432 = vmatpush.msra.mxu0 %v3425
          %3433 = vmatpush.msra.mxu0 %v3424
          %3434 = vmatpush.msra.mxu0 %v3423
          %3435 = vmatpush.msra.mxu0 %v3422
          %3436 = vmatpush.msra.mxu0 %v3421
          %3437 = vmatpush.msra.mxu0 %v3420
          %3438 = vmatpush.msra.mxu0 %v3419
          %3439 = vmatpush.msra.mxu0 %v3418
          %3440 = vmatpush.msra.mxu0 %v3417
          %3441 = vmatpush.msra.mxu0 %v3416
          %3442 = vmatpush.msra.mxu0 %v3415
          %3443 = vmatpush.msra.mxu0 %v3414
          %3444 = vmatpush.msra.mxu0 %v3413
          %3445 = vmatpush.msra.mxu0 %v3412
          %3446 = vmatpush.msra.mxu0 %v3411
          %3447 = vmatmul.f32.gmra.mxu0 %v3410
          %v3448 = vpop.f32.mrf.mxu0
          %v3449 = vadd.f32 %v3429, %v3448
          %3450 = vdwg.mxu0
          %v3451 = vld [vmem:[%s59] sm:$0x1]
          %v3452 = vld [vmem:[%s61] sm:$0x1]
          %vm3453 = vcmask 254976
          %v3454 = vsel %vm3453, %v3449, 0.0
          %3455 = vadd.xlane.f32.xlu0 %v3454
          %v3456 = vpop.xlane.xlu0 %3455
          %v3457 = vrcp.pop 32.0
          %v3458 = vmul.f32 32.0, %v3457
          %v3459 = vsub.f32 1.0, %v3458
          %v3460 = vmul.f32 %v3457, %v3459
          %v3461 = vadd.f32 %v3457, %v3460
          %vm3462 = vweird.f32 %v3457
          %v3463 = vsel %vm3462, %v3457, %v3461
          %v3464 = vmul.f32 %v3456, %v3463
          %v3465 = vsub.f32 %v3449, %v3464
          %v3466 = vmul.f32 %v3465, %v3465
          %v3467 = vsel %vm3453, %v3466, 0.0
          %3468 = vadd.xlane.f32.xlu0 %v3467
          %v3469 = vpop.xlane.xlu0 %3468
          %v3470 = vmul.f32 %v3469, %v3463
          %v3471 = vadd.f32 %v3470, 1e-05
          %v3472 = vrsqrt.pop %v3471
          %v3473 = vmul.f32 %v3472, %v3471
          %v3474 = vmul.f32 %v3473, %v3472
          %v3475 = vmul.f32 0.5, %v3474
          %v3476 = vsub.f32 1.5, %v3475
          %v3477 = vmul.f32 %v3472, %v3476
          %vm3478 = vweird.f32 %v3471
          %vm3479 = vweird.f32 %v3472
          %vm3480 = vmor %vm3478, %vm3479
          %v3481 = vsel %vm3480, %v3472, %v3477
          %v3482 = vmul.f32 %v3465, %v3481
          %v3484 = vperm.slane %v3451, 0
          %v3486 = vmul.f32 %v3482, %v3484
          %v3488 = vperm.slane %v3452, 0
          %v3490 = vadd.f32 %v3486, %v3488
          %v3491 = vmax.f32 %v3490, 0.0
          %v3492 = vld [vmem:[%s63] sm:$0x1]
          %v3494 = vperm.slane %v3492, 0
          %v3496 = vmul.f32 %v3491, %v3494
          %v3497 = vsel %vm3453, %v3496, 0.0
          %3498 = vadd.xlane.f32.xlu0 %v3497
          %v3499 = vpop.xlane.xlu0 %3498
          %v3500 = vld [vmem:[#allocation6] sm:$0x1]
          %v3502 = vperm.slane %v3500, 0
          %v3504 = vadd.f32 %v3499, %v3502
          %3506 = vset.pattern.permute.xlu0 0
          %3507 = vperm.xlu0 %3506, %v3504
          %v3508 = vpop.permute.xlu0 %3507
          %3510 = vst [vmem:[%s1146] sm:$0x3] %v3508
        $region176: #{fashion_evaluator_forward.3} parent=143 // pred_fallthru
          _
        %p3511 = scmp.lt.s32.totalorder %s101, 0
        %s3512 = scalar_select %p3511, %s101, 0
        %s3513 = smul.addr %s3512, 2
        %s3514 = scalar_lea.vmem %s67, %s3513
        // Predicated region
        $region177: #{fashion_evaluator_forward.3} parent=143 // pred_check
          %p3515 = pneg %p796
        $region178: #{fashion_evaluator_forward.3} parent=143 // pred_check_branch
          %3517 = sbr.rel (%p3515) target = $region180
        $region179: #{fashion_evaluator_forward.3} parent=143 // pred_region
          _
        $region180: #{fashion_evaluator_forward.3} parent=143 // pred_fallthru
          _
        // Predicated region
        $region181: #{fashion_evaluator_forward.3} parent=143 // pred_check
          %p3518 = pneg %p796
        $region182: #{fashion_evaluator_forward.3} parent=143 // pred_check_branch
          %3520 = sbr.rel (%p3518) target = $region184
        $region183: #{fashion_evaluator_forward.3} parent=143 // pred_region
          %p3521 = scmp.lt.s32.totalorder %s101, 0
          %s3522 = scalar_select %p3521, %s101, 0
          %s3523 = smul.addr %s3522, 2
          %s3524 = scalar_lea.vmem %s67, %s3523
        $region184: #{fashion_evaluator_forward.3} parent=143 // pred_fallthru
          _
      $region144: #{fashion_evaluator_forward.3} parent=5 // pred_fallthru
        _
      %p3525 = scmp.le.s32.totalorder 2, %s92
      // Predicated region
      $region185: #{fashion_evaluator_forward.3} parent=5 // pred_check
        %p3526 = pneg %p3525
      $region186: #{fashion_evaluator_forward.3} parent=5 // pred_check_branch
        %3528 = sbr.rel (%p3526) target = $region188
      $region187: #{fashion_evaluator_forward.3} parent=5 // pred_region
        %s3529 = ssub.s32 %s92, 2
      $region188: #{fashion_evaluator_forward.3} parent=5 // pred_fallthru
        _
    $region6: #{fashion_evaluator_forward.3} parent=1 // loop_footer
      %s96 = sadd.s32 1, %s92
    $region7: #{fashion_evaluator_forward.3} parent=1 // loop_footer_branch
      %91 = sbr.rel target = $region3
    $region8: #{fashion_evaluator_forward.3} parent=1 // loop_exit
      _
    %3530 = vsyncpa [#allocation8], 1
    %s3531 = scalar_lea.sflag [#allocation8], 1
    %3532 = vsyncpa %s3531, 1
    %3533 = vsyncpa [#allocation10], 1
    %3534 = vsyncpa [#allocation13], 1
    %3535 = vsyncpa [#allocation16], 1

</llo_original>
